<compile_context>
chip_gen: v5e
topology: v5e:2x2
jax: 0.10.0
libtpu: 0.0.40
codegen_flags: <defaults>
</compile_context>

<pallas_src>
import functools

import jax
import jax.numpy as jnp
import numpy as np
from jax import lax
from jax.experimental import pallas as pl
from jax.experimental.pallas import tpu as pltpu

RRELU_SLOPE = (1.0 / 8.0 + 1.0 / 3.0) / 2.0  # 11/48, eval-mode RReLU

# Static network geometry (CIFAR-like 3x32x32 input; matches the PyTorch module's shapes).
C_IN, H_IN, W_IN = 3, 32, 32
C1, K1, S1 = 32, 5, 2                 # conv1: 32 ch, 5x5, stride 2
C2, K2 = 64, 3                        # conv2: 64 ch, 3x3, stride 1
HC1 = (H_IN - K1) // S1 + 1           # 14 conv1 output rows/cols
HP1 = HC1 // 2                        # 7  after 2x2 pool
HC2 = HP1 - K2 + 1                    # 5  conv2 output rows/cols
HP2 = HC2 // 2                        # 2  after 2x2 pool (floor mode)
HIDDEN, N_CLASSES, N_PAD = 256, 10, 128

LW1 = W_IN * C_IN                     # 96  : conv1 input row width  (lane = w*C + c)
LP1 = HP1 * C1                        # 224 : pooled1 row width      (lane = wp*32 + oc)
LP2 = HP2 * C2                        # 128 : pooled2 row width      (lane = wp*64 + oc)


# ---------------------------------------------------------------------------
# The fused kernel: one grid step == one image, everything stays in VMEM.
# ---------------------------------------------------------------------------
def _cnn_kernel(xq_ref, w1_ref, b1_ref, w2_ref, b2_ref,
                fc1w_ref, fc1b_ref, fc2w_ref, fc2b_ref, o_ref, *, slope):
    # ---- stage 1: conv 5x5 / stride 2 + RReLU + maxpool 2x2 ------------------------------
    # xq_ref: (4, 8, 96) f32 row-phase layout, xq[q, t, :] = image row 4*t + q (as (W*C,)).
    # For pool row hp, pool corner a, kernel tap-row i the needed image rows 4*hp + 2a + i
    # are the contiguous slice xq[(2a+i)%4, (2a+i)//4 : +7, :].  Each tap-row contributes
    # one (7,96)@(96,224) GEMM against a banded weight (tap-col + conv stride + pool col
    # corner folded into the band).  Pool = incremental max over the 4 corners.
    m1 = None
    for a in range(2):
        acc = [jnp.zeros((HP1, LP1), jnp.float32), jnp.zeros((HP1, LP1), jnp.float32)]
        for i in range(K1):
            s = 2 * a + i
            lhs = xq_ref[s % 4, s // 4: s // 4 + HP1, :].astype(jnp.bfloat16)   # (7, 96)
            for b in range(2):
                acc[b] = acc[b] + jnp.dot(lhs, w1_ref[b, i],
                                          preferred_element_type=jnp.float32)   # (7, 224)
        cur = jnp.maximum(acc[0], acc[1])
        m1 = cur if m1 is None else jnp.maximum(m1, cur)
    z1 = m1 + b1_ref[...]                                    # bias tiled per (wp, oc) lane
    act1 = jnp.where(z1 >= 0.0, z1, z1 * slope)              # (7, 224) f32, pooled1 rows

    # ---- stage 2: conv 3x3 + RReLU + maxpool 2x2, one GEMM row per pool output row -------
    feat = []
    for hp in range(HP2):
        m2 = None
        for a in range(2):
            acc = [jnp.zeros((1, LP2), jnp.float32), jnp.zeros((1, LP2), jnp.float32)]
            for i in range(K2):
                r = 2 * hp + a + i
                lhs = act1[r: r + 1, :].astype(jnp.bfloat16)                     # (1, 224)
                for b in range(2):
                    acc[b] = acc[b] + jnp.dot(lhs, w2_ref[b, i],
                                              preferred_element_type=jnp.float32)  # (1,128)
            cur = jnp.maximum(acc[0], acc[1])
            m2 = cur if m2 is None else jnp.maximum(m2, cur)
        z2 = m2 + b2_ref[...]
        z2 = jnp.where(z2 >= 0.0, z2, z2 * slope)
        feat.append(z2.astype(jnp.bfloat16))                                     # (1, 128)

    # ---- classifier: fc1 (split over the 2 pooled feature rows) + ReLU + fc2 (padded) ----
    h = (jnp.dot(feat[0], fc1w_ref[0], preferred_element_type=jnp.float32)
         + jnp.dot(feat[1], fc1w_ref[1], preferred_element_type=jnp.float32)
         + fc1b_ref[...])
    h = jnp.maximum(h, 0.0)                                                       # (1, 256)
    logits = jnp.dot(h.astype(jnp.bfloat16), fc2w_ref[...],
                     preferred_element_type=jnp.float32) + fc2b_ref[...]          # (1, 128)
    # Lane-dense, unmasked (8,128) store; wrapper slices row 0 / first 10 lanes.
    o_ref[...] = jnp.broadcast_to(logits, (8, N_PAD))


# ---------------------------------------------------------------------------
# Wrapper: one pallas_call, grid over images ("parallel" for v7x dual-TC).
# ---------------------------------------------------------------------------
def cnn_forward(x_nchw, params):
    n = x_nchw.shape[0]
    # NCHW -> NHWC -> (N, H, W*C) -> 4-way row-phase (N, 4, H/4, W*C).
    # A pure byte permutation of the tiny input (the only XLA glue besides the final slice).
    xq = (x_nchw.astype(jnp.float32)
          .transpose(0, 2, 3, 1)
          .reshape(n, H_IN, LW1)
          .reshape(n, H_IN // 4, 4, LW1)
          .transpose(0, 2, 1, 3))                            # (N, 4, 8, 96)

    kern = functools.partial(_cnn_kernel, slope=RRELU_SLOPE)
    out = pl.pallas_call(
        kern,
        out_shape=jax.ShapeDtypeStruct((n, 8, N_PAD), jnp.float32),
        grid=(n,),
        in_specs=[
            pl.BlockSpec((None, 4, H_IN // 4, LW1), lambda i: (i, 0, 0, 0)),   # per-image x
            pl.BlockSpec((2, K1, LW1, LP1), lambda i: (0, 0, 0, 0)),           # conv1 banded
            pl.BlockSpec((1, LP1), lambda i: (0, 0)),                          # conv1 bias
            pl.BlockSpec((2, K2, LP1, LP2), lambda i: (0, 0, 0, 0)),           # conv2 banded
            pl.BlockSpec((1, LP2), lambda i: (0, 0)),                          # conv2 bias
            pl.BlockSpec((HP2, LP2, HIDDEN), lambda i: (0, 0, 0)),             # fc1 (by row)
            pl.BlockSpec((1, HIDDEN), lambda i: (0, 0)),                       # fc1 bias
            pl.BlockSpec((HIDDEN, N_PAD), lambda i: (0, 0)),                   # fc2 (padded)
            pl.BlockSpec((1, N_PAD), lambda i: (0, 0)),                        # fc2 bias
        ],
        out_specs=pl.BlockSpec((None, 8, N_PAD), lambda i: (i, 0, 0)),
        compiler_params=pltpu.CompilerParams(dimension_semantics=("parallel",)),
    )(xq, params["w1b"], params["b1t"], params["w2b"], params["b2t"],
      params["fc1w"], params["fc1b"], params["fc2w"], params["fc2b"])
    return out[:, 0, :N_CLASSES]


# ---------------------------------------------------------------------------
# Parameters: PyTorch layouts -> one-time banded / lane-dense re-layout.
# ---------------------------------------------------------------------------
def _banded_conv_weight(w_oihw, w_in, conv_stride, wp_out):
    """Block-banded weight matrix mapping an input row (lane = w*C + c) to a pooled conv
    output row (lane = wp*OC + oc), for each kernel tap-row i and pool-column corner b.
    Returns float32 of shape (2, KH, w_in*C, wp_out*OC)."""
    w_oihw = np.asarray(w_oihw, np.float32)
    oc, c, kh, kw = w_oihw.shape
    out = np.zeros((2, kh, w_in * c, wp_out * oc), np.float32)
    for b in range(2):
        for i in range(kh):
            for wp in range(wp_out):
                for j in range(kw):
                    w = 2 * conv_stride * wp + conv_stride * b + j
                    out[b, i, w * c:(w + 1) * c, wp * oc:(wp + 1) * oc] = w_oihw[:, :, i, j].T
    return out


def prepare_params(p):
    """One-time re-layout of PyTorch-layout params into the kernel's banded/bf16 form."""
    w1b = _banded_conv_weight(p["conv1_w"], W_IN, S1, HP1)            # (2, 5,  96, 224)
    w2b = _banded_conv_weight(p["conv2_w"], HP1, 1, HP2)              # (2, 3, 224, 128)

    # fc1: torch feature index is c*4 + h*2 + w  ->  split by h, rows ordered (w*64 + c).
    fc1 = np.asarray(p["fc1_w"], np.float32).reshape(HIDDEN, C2, HP2, HP2)
    fc1 = fc1.transpose(2, 3, 1, 0).reshape(HP2, HP2 * C2, HIDDEN)    # (h, w*64+c, o)

    # fc2: pre-transpose and zero-pad the 10 outputs to 128 lanes (unmasked final store).
    fc2 = np.zeros((HIDDEN, N_PAD), np.float32)
    fc2[:, :N_CLASSES] = np.asarray(p["fc2_w"], np.float32).T
    fc2b = np.zeros((N_PAD,), np.float32)
    fc2b[:N_CLASSES] = np.asarray(p["fc2_b"], np.float32)

    return {
        "w1b": jnp.asarray(w1b, jnp.bfloat16),
        "b1t": jnp.asarray(np.tile(np.asarray(p["conv1_b"], np.float32), HP1)[None, :]),
        "w2b": jnp.asarray(w2b, jnp.bfloat16),
        "b2t": jnp.asarray(np.tile(np.asarray(p["conv2_b"], np.float32), HP2)[None, :]),
        "fc1w": jnp.asarray(fc1, jnp.bfloat16),
        "fc1b": jnp.asarray(np.asarray(p["fc1_b"], np.float32)[None, :]),
        "fc2w": jnp.asarray(fc2, jnp.bfloat16),
        "fc2b": jnp.asarray(fc2b[None, :]),
    }


def init_params_torch_layout(key):
    """Random params in PyTorch layouts: conv (OC, C, kh, kw), linear (out, in)."""
    ks = jax.random.split(key, 8)
    feat = C2 * HP2 * HP2

    def w(k, shape, fan_in):
        return jax.random.normal(k, shape, jnp.float32) * (1.0 / float(np.sqrt(fan_in)))

    return {
        "conv1_w": w(ks[0], (C1, C_IN, K1, K1), C_IN * K1 * K1),
        "conv1_b": w(ks[1], (C1,), C_IN * K1 * K1),
        "conv2_w": w(ks[2], (C2, C1, K2, K2), C1 * K2 * K2),
        "conv2_b": w(ks[3], (C2,), C1 * K2 * K2),
        "fc1_w": w(ks[4], (HIDDEN, feat), feat),
        "fc1_b": w(ks[5], (HIDDEN,), feat),
        "fc2_w": w(ks[6], (N_CLASSES, HIDDEN), HIDDEN),
        "fc2_b": w(ks[7], (N_CLASSES,), HIDDEN),
    }


# ---------------------------------------------------------------------------
# Plain-XLA f32 reference (same eval-mode RReLU semantics) for a tolerance check.
# ---------------------------------------------------------------------------
def reference_forward(x_nchw, p):
    dn = ("NCHW", "OIHW", "NCHW")
    y = lax.conv_general_dilated(x_nchw, p["conv1_w"], (S1, S1), "VALID", dimension_numbers=dn)
    y = y + p["conv1_b"][None, :, None, None]
    y = jnp.where(y >= 0, y, RRELU_SLOPE * y)
    y = lax.reduce_window(y, -jnp.inf, lax.max, (1, 1, 2, 2), (1, 1, 2, 2), "VALID")
    y = lax.conv_general_dilated(y, p["conv2_w"], (1, 1), "VALID", dimension_numbers=dn)
    y = y + p["conv2_b"][None, :, None, None]
    y = jnp.where(y >= 0, y, RRELU_SLOPE * y)
    y = lax.reduce_window(y, -jnp.inf, lax.max, (1, 1, 2, 2), (1, 1, 2, 2), "VALID")
    f = y.reshape(y.shape[0], -1)
    h = jnp.maximum(f @ p["fc1_w"].T + p["fc1_b"], 0.0)
    return h @ p["fc2_w"].T + p["fc2_b"]


if __name__ == "__main__":
    key = jax.random.PRNGKey(0)
    k_x, k_p = jax.random.split(key)

    n = 2
    x = jax.random.normal(k_x, (n, C_IN, H_IN, W_IN), jnp.float32)   # NCHW like the module

    torch_params = init_params_torch_layout(k_p)
    params = prepare_params(torch_params)

    fwd = jax.jit(cnn_forward)
    logits = jax.block_until_ready(fwd(x, params))
    assert logits.shape == (n, N_CLASSES), logits.shape
    assert bool(jnp.all(jnp.isfinite(logits)))

    # Validate against the f32 XLA reference (kernel uses bf16 GEMM operands -> loose tol).
    ref = reference_forward(x, torch_params)
    err = float(jnp.max(jnp.abs(logits - ref)))
    assert err < 8e-2, f"max|pallas - ref| = {err}"

    print("KERNEL_OK")
</pallas_src>

<mosaic_0001>
module attributes {stable_mosaic.version = 11 : i64} {
  func.func @_cnn_kernel(%arg0: i32, %arg1: memref<1x4x8x96xf32, #tpu.memory_space<vmem>>, %arg2: memref<2x5x96x224xbf16, #tpu.memory_space<vmem>>, %arg3: memref<1x224xf32, #tpu.memory_space<vmem>>, %arg4: memref<2x3x224x128xbf16, #tpu.memory_space<vmem>>, %arg5: memref<1x128xf32, #tpu.memory_space<vmem>>, %arg6: memref<2x128x256xbf16, #tpu.memory_space<vmem>>, %arg7: memref<1x256xf32, #tpu.memory_space<vmem>>, %arg8: memref<256x128xbf16, #tpu.memory_space<vmem>>, %arg9: memref<1x128xf32, #tpu.memory_space<vmem>>, %arg10: memref<1x8x128xf32, #tpu.memory_space<vmem>>) attributes {dimension_semantics = [#tpu.dimension_semantics<parallel>], iteration_bounds = array<i64: 2>, scalar_prefetch = 0 : i64, scratch_operands = 0 : i64, tpu.core_type = #tpu.core_type<tc>, window_params = [{transform_indices = @transform_0, window_bounds = array<i64: 1, 4, 8, 96>}, {pipeline_mode = #tpu.pipeline_mode<synchronous>, transform_indices = @transform_1, window_bounds = array<i64: 2, 5, 96, 224>}, {pipeline_mode = #tpu.pipeline_mode<synchronous>, transform_indices = @transform_2, window_bounds = array<i64: 1, 224>}, {pipeline_mode = #tpu.pipeline_mode<synchronous>, transform_indices = @transform_3, window_bounds = array<i64: 2, 3, 224, 128>}, {pipeline_mode = #tpu.pipeline_mode<synchronous>, transform_indices = @transform_4, window_bounds = array<i64: 1, 128>}, {pipeline_mode = #tpu.pipeline_mode<synchronous>, transform_indices = @transform_5, window_bounds = array<i64: 2, 128, 256>}, {pipeline_mode = #tpu.pipeline_mode<synchronous>, transform_indices = @transform_6, window_bounds = array<i64: 1, 256>}, {pipeline_mode = #tpu.pipeline_mode<synchronous>, transform_indices = @transform_7, window_bounds = array<i64: 256, 128>}, {pipeline_mode = #tpu.pipeline_mode<synchronous>, transform_indices = @transform_8, window_bounds = array<i64: 1, 128>}, {transform_indices = @transform_9, window_bounds = array<i64: 1, 8, 128>}]} {
    %cst = arith.constant 0.000000e+00 : f32
    %0 = vector.broadcast %cst : f32 to vector<7x224xf32>
    %cst_0 = arith.constant 0.000000e+00 : f32
    %1 = vector.broadcast %cst_0 : f32 to vector<7x224xf32>
    %c0 = arith.constant 0 : index
    %c0_1 = arith.constant 0 : index
    %c0_2 = arith.constant 0 : index
    %c0_3 = arith.constant 0 : index
    %2 = vector.load %arg1[%c0, %c0_1, %c0_2, %c0_3] : memref<1x4x8x96xf32, #tpu.memory_space<vmem>>, vector<1x1x7x96xf32>
    %3 = vector.shape_cast %2 : vector<1x1x7x96xf32> to vector<7x96xf32>
    %4 = arith.truncf %3 : vector<7x96xf32> to vector<7x96xbf16>
    %c0_4 = arith.constant 0 : index
    %c0_5 = arith.constant 0 : index
    %c0_6 = arith.constant 0 : index
    %c0_7 = arith.constant 0 : index
    %5 = vector.load %arg2[%c0_4, %c0_5, %c0_6, %c0_7] : memref<2x5x96x224xbf16, #tpu.memory_space<vmem>>, vector<1x1x96x224xbf16>
    %6 = vector.shape_cast %5 : vector<1x1x96x224xbf16> to vector<96x224xbf16>
    %cst_8 = arith.constant dense<0.000000e+00> : vector<7x224xf32>
    %7 = tpu.matmul %4, %6, %cst_8 {dimension_numbers = #tpu.dot_dimension_numbers<[1], [0], [0], [1], [0, 0, 1, 1], [], []>} : vector<7x96xbf16>, vector<96x224xbf16>, vector<7x224xf32> -> vector<7x224xf32>
    %8 = arith.addf %0, %7 : vector<7x224xf32>
    %c1 = arith.constant 1 : index
    %c0_9 = arith.constant 0 : index
    %c0_10 = arith.constant 0 : index
    %c0_11 = arith.constant 0 : index
    %9 = vector.load %arg2[%c1, %c0_9, %c0_10, %c0_11] : memref<2x5x96x224xbf16, #tpu.memory_space<vmem>>, vector<1x1x96x224xbf16>
    %10 = vector.shape_cast %9 : vector<1x1x96x224xbf16> to vector<96x224xbf16>
    %cst_12 = arith.constant dense<0.000000e+00> : vector<7x224xf32>
    %11 = tpu.matmul %4, %10, %cst_12 {dimension_numbers = #tpu.dot_dimension_numbers<[1], [0], [0], [1], [0, 0, 1, 1], [], []>} : vector<7x96xbf16>, vector<96x224xbf16>, vector<7x224xf32> -> vector<7x224xf32>
    %12 = arith.addf %1, %11 : vector<7x224xf32>
    %c0_13 = arith.constant 0 : index
    %c1_14 = arith.constant 1 : index
    %c0_15 = arith.constant 0 : index
    %c0_16 = arith.constant 0 : index
    %13 = vector.load %arg1[%c0_13, %c1_14, %c0_15, %c0_16] : memref<1x4x8x96xf32, #tpu.memory_space<vmem>>, vector<1x1x7x96xf32>
    %14 = vector.shape_cast %13 : vector<1x1x7x96xf32> to vector<7x96xf32>
    %15 = arith.truncf %14 : vector<7x96xf32> to vector<7x96xbf16>
    %c0_17 = arith.constant 0 : index
    %c1_18 = arith.constant 1 : index
    %c0_19 = arith.constant 0 : index
    %c0_20 = arith.constant 0 : index
    %16 = vector.load %arg2[%c0_17, %c1_18, %c0_19, %c0_20] : memref<2x5x96x224xbf16, #tpu.memory_space<vmem>>, vector<1x1x96x224xbf16>
    %17 = vector.shape_cast %16 : vector<1x1x96x224xbf16> to vector<96x224xbf16>
    %cst_21 = arith.constant dense<0.000000e+00> : vector<7x224xf32>
    %18 = tpu.matmul %15, %17, %cst_21 {dimension_numbers = #tpu.dot_dimension_numbers<[1], [0], [0], [1], [0, 0, 1, 1], [], []>} : vector<7x96xbf16>, vector<96x224xbf16>, vector<7x224xf32> -> vector<7x224xf32>
    %19 = arith.addf %8, %18 : vector<7x224xf32>
    %c1_22 = arith.constant 1 : index
    %c1_23 = arith.constant 1 : index
    %c0_24 = arith.constant 0 : index
    %c0_25 = arith.constant 0 : index
    %20 = vector.load %arg2[%c1_22, %c1_23, %c0_24, %c0_25] : memref<2x5x96x224xbf16, #tpu.memory_space<vmem>>, vector<1x1x96x224xbf16>
    %21 = vector.shape_cast %20 : vector<1x1x96x224xbf16> to vector<96x224xbf16>
    %cst_26 = arith.constant dense<0.000000e+00> : vector<7x224xf32>
    %22 = tpu.matmul %15, %21, %cst_26 {dimension_numbers = #tpu.dot_dimension_numbers<[1], [0], [0], [1], [0, 0, 1, 1], [], []>} : vector<7x96xbf16>, vector<96x224xbf16>, vector<7x224xf32> -> vector<7x224xf32>
    %23 = arith.addf %12, %22 : vector<7x224xf32>
    %c0_27 = arith.constant 0 : index
    %c2 = arith.constant 2 : index
    %c0_28 = arith.constant 0 : index
    %c0_29 = arith.constant 0 : index
    %24 = vector.load %arg1[%c0_27, %c2, %c0_28, %c0_29] : memref<1x4x8x96xf32, #tpu.memory_space<vmem>>, vector<1x1x7x96xf32>
    %25 = vector.shape_cast %24 : vector<1x1x7x96xf32> to vector<7x96xf32>
    %26 = arith.truncf %25 : vector<7x96xf32> to vector<7x96xbf16>
    %c0_30 = arith.constant 0 : index
    %c2_31 = arith.constant 2 : index
    %c0_32 = arith.constant 0 : index
    %c0_33 = arith.constant 0 : index
    %27 = vector.load %arg2[%c0_30, %c2_31, %c0_32, %c0_33] : memref<2x5x96x224xbf16, #tpu.memory_space<vmem>>, vector<1x1x96x224xbf16>
    %28 = vector.shape_cast %27 : vector<1x1x96x224xbf16> to vector<96x224xbf16>
    %cst_34 = arith.constant dense<0.000000e+00> : vector<7x224xf32>
    %29 = tpu.matmul %26, %28, %cst_34 {dimension_numbers = #tpu.dot_dimension_numbers<[1], [0], [0], [1], [0, 0, 1, 1], [], []>} : vector<7x96xbf16>, vector<96x224xbf16>, vector<7x224xf32> -> vector<7x224xf32>
    %30 = arith.addf %19, %29 : vector<7x224xf32>
    %c1_35 = arith.constant 1 : index
    %c2_36 = arith.constant 2 : index
    %c0_37 = arith.constant 0 : index
    %c0_38 = arith.constant 0 : index
    %31 = vector.load %arg2[%c1_35, %c2_36, %c0_37, %c0_38] : memref<2x5x96x224xbf16, #tpu.memory_space<vmem>>, vector<1x1x96x224xbf16>
    %32 = vector.shape_cast %31 : vector<1x1x96x224xbf16> to vector<96x224xbf16>
    %cst_39 = arith.constant dense<0.000000e+00> : vector<7x224xf32>
    %33 = tpu.matmul %26, %32, %cst_39 {dimension_numbers = #tpu.dot_dimension_numbers<[1], [0], [0], [1], [0, 0, 1, 1], [], []>} : vector<7x96xbf16>, vector<96x224xbf16>, vector<7x224xf32> -> vector<7x224xf32>
    %34 = arith.addf %23, %33 : vector<7x224xf32>
    %c0_40 = arith.constant 0 : index
    %c3 = arith.constant 3 : index
    %c0_41 = arith.constant 0 : index
    %c0_42 = arith.constant 0 : index
    %35 = vector.load %arg1[%c0_40, %c3, %c0_41, %c0_42] : memref<1x4x8x96xf32, #tpu.memory_space<vmem>>, vector<1x1x7x96xf32>
    %36 = vector.shape_cast %35 : vector<1x1x7x96xf32> to vector<7x96xf32>
    %37 = arith.truncf %36 : vector<7x96xf32> to vector<7x96xbf16>
    %c0_43 = arith.constant 0 : index
    %c3_44 = arith.constant 3 : index
    %c0_45 = arith.constant 0 : index
    %c0_46 = arith.constant 0 : index
    %38 = vector.load %arg2[%c0_43, %c3_44, %c0_45, %c0_46] : memref<2x5x96x224xbf16, #tpu.memory_space<vmem>>, vector<1x1x96x224xbf16>
    %39 = vector.shape_cast %38 : vector<1x1x96x224xbf16> to vector<96x224xbf16>
    %cst_47 = arith.constant dense<0.000000e+00> : vector<7x224xf32>
    %40 = tpu.matmul %37, %39, %cst_47 {dimension_numbers = #tpu.dot_dimension_numbers<[1], [0], [0], [1], [0, 0, 1, 1], [], []>} : vector<7x96xbf16>, vector<96x224xbf16>, vector<7x224xf32> -> vector<7x224xf32>
    %41 = arith.addf %30, %40 : vector<7x224xf32>
    %c1_48 = arith.constant 1 : index
    %c3_49 = arith.constant 3 : index
    %c0_50 = arith.constant 0 : index
    %c0_51 = arith.constant 0 : index
    %42 = vector.load %arg2[%c1_48, %c3_49, %c0_50, %c0_51] : memref<2x5x96x224xbf16, #tpu.memory_space<vmem>>, vector<1x1x96x224xbf16>
    %43 = vector.shape_cast %42 : vector<1x1x96x224xbf16> to vector<96x224xbf16>
    %cst_52 = arith.constant dense<0.000000e+00> : vector<7x224xf32>
    %44 = tpu.matmul %37, %43, %cst_52 {dimension_numbers = #tpu.dot_dimension_numbers<[1], [0], [0], [1], [0, 0, 1, 1], [], []>} : vector<7x96xbf16>, vector<96x224xbf16>, vector<7x224xf32> -> vector<7x224xf32>
    %45 = arith.addf %34, %44 : vector<7x224xf32>
    %c0_53 = arith.constant 0 : index
    %c0_54 = arith.constant 0 : index
    %c1_55 = arith.constant 1 : index
    %c0_56 = arith.constant 0 : index
    %46 = vector.load %arg1[%c0_53, %c0_54, %c1_55, %c0_56] : memref<1x4x8x96xf32, #tpu.memory_space<vmem>>, vector<1x1x7x96xf32>
    %47 = vector.shape_cast %46 : vector<1x1x7x96xf32> to vector<7x96xf32>
    %48 = arith.truncf %47 : vector<7x96xf32> to vector<7x96xbf16>
    %c0_57 = arith.constant 0 : index
    %c4 = arith.constant 4 : index
    %c0_58 = arith.constant 0 : index
    %c0_59 = arith.constant 0 : index
    %49 = vector.load %arg2[%c0_57, %c4, %c0_58, %c0_59] : memref<2x5x96x224xbf16, #tpu.memory_space<vmem>>, vector<1x1x96x224xbf16>
    %50 = vector.shape_cast %49 : vector<1x1x96x224xbf16> to vector<96x224xbf16>
    %cst_60 = arith.constant dense<0.000000e+00> : vector<7x224xf32>
    %51 = tpu.matmul %48, %50, %cst_60 {dimension_numbers = #tpu.dot_dimension_numbers<[1], [0], [0], [1], [0, 0, 1, 1], [], []>} : vector<7x96xbf16>, vector<96x224xbf16>, vector<7x224xf32> -> vector<7x224xf32>
    %52 = arith.addf %41, %51 : vector<7x224xf32>
    %c1_61 = arith.constant 1 : index
    %c4_62 = arith.constant 4 : index
    %c0_63 = arith.constant 0 : index
    %c0_64 = arith.constant 0 : index
    %53 = vector.load %arg2[%c1_61, %c4_62, %c0_63, %c0_64] : memref<2x5x96x224xbf16, #tpu.memory_space<vmem>>, vector<1x1x96x224xbf16>
    %54 = vector.shape_cast %53 : vector<1x1x96x224xbf16> to vector<96x224xbf16>
    %cst_65 = arith.constant dense<0.000000e+00> : vector<7x224xf32>
    %55 = tpu.matmul %48, %54, %cst_65 {dimension_numbers = #tpu.dot_dimension_numbers<[1], [0], [0], [1], [0, 0, 1, 1], [], []>} : vector<7x96xbf16>, vector<96x224xbf16>, vector<7x224xf32> -> vector<7x224xf32>
    %56 = arith.addf %45, %55 : vector<7x224xf32>
    %57 = arith.maximumf %52, %56 : vector<7x224xf32>
    %cst_66 = arith.constant 0.000000e+00 : f32
    %58 = vector.broadcast %cst_66 : f32 to vector<7x224xf32>
    %cst_67 = arith.constant 0.000000e+00 : f32
    %59 = vector.broadcast %cst_67 : f32 to vector<7x224xf32>
    %c0_68 = arith.constant 0 : index
    %c2_69 = arith.constant 2 : index
    %c0_70 = arith.constant 0 : index
    %c0_71 = arith.constant 0 : index
    %60 = vector.load %arg1[%c0_68, %c2_69, %c0_70, %c0_71] : memref<1x4x8x96xf32, #tpu.memory_space<vmem>>, vector<1x1x7x96xf32>
    %61 = vector.shape_cast %60 : vector<1x1x7x96xf32> to vector<7x96xf32>
    %62 = arith.truncf %61 : vector<7x96xf32> to vector<7x96xbf16>
    %c0_72 = arith.constant 0 : index
    %c0_73 = arith.constant 0 : index
    %c0_74 = arith.constant 0 : index
    %c0_75 = arith.constant 0 : index
    %63 = vector.load %arg2[%c0_72, %c0_73, %c0_74, %c0_75] : memref<2x5x96x224xbf16, #tpu.memory_space<vmem>>, vector<1x1x96x224xbf16>
    %64 = vector.shape_cast %63 : vector<1x1x96x224xbf16> to vector<96x224xbf16>
    %cst_76 = arith.constant dense<0.000000e+00> : vector<7x224xf32>
    %65 = tpu.matmul %62, %64, %cst_76 {dimension_numbers = #tpu.dot_dimension_numbers<[1], [0], [0], [1], [0, 0, 1, 1], [], []>} : vector<7x96xbf16>, vector<96x224xbf16>, vector<7x224xf32> -> vector<7x224xf32>
    %66 = arith.addf %58, %65 : vector<7x224xf32>
    %c1_77 = arith.constant 1 : index
    %c0_78 = arith.constant 0 : index
    %c0_79 = arith.constant 0 : index
    %c0_80 = arith.constant 0 : index
    %67 = vector.load %arg2[%c1_77, %c0_78, %c0_79, %c0_80] : memref<2x5x96x224xbf16, #tpu.memory_space<vmem>>, vector<1x1x96x224xbf16>
    %68 = vector.shape_cast %67 : vector<1x1x96x224xbf16> to vector<96x224xbf16>
    %cst_81 = arith.constant dense<0.000000e+00> : vector<7x224xf32>
    %69 = tpu.matmul %62, %68, %cst_81 {dimension_numbers = #tpu.dot_dimension_numbers<[1], [0], [0], [1], [0, 0, 1, 1], [], []>} : vector<7x96xbf16>, vector<96x224xbf16>, vector<7x224xf32> -> vector<7x224xf32>
    %70 = arith.addf %59, %69 : vector<7x224xf32>
    %c0_82 = arith.constant 0 : index
    %c3_83 = arith.constant 3 : index
    %c0_84 = arith.constant 0 : index
    %c0_85 = arith.constant 0 : index
    %71 = vector.load %arg1[%c0_82, %c3_83, %c0_84, %c0_85] : memref<1x4x8x96xf32, #tpu.memory_space<vmem>>, vector<1x1x7x96xf32>
    %72 = vector.shape_cast %71 : vector<1x1x7x96xf32> to vector<7x96xf32>
    %73 = arith.truncf %72 : vector<7x96xf32> to vector<7x96xbf16>
    %c0_86 = arith.constant 0 : index
    %c1_87 = arith.constant 1 : index
    %c0_88 = arith.constant 0 : index
    %c0_89 = arith.constant 0 : index
    %74 = vector.load %arg2[%c0_86, %c1_87, %c0_88, %c0_89] : memref<2x5x96x224xbf16, #tpu.memory_space<vmem>>, vector<1x1x96x224xbf16>
    %75 = vector.shape_cast %74 : vector<1x1x96x224xbf16> to vector<96x224xbf16>
    %cst_90 = arith.constant dense<0.000000e+00> : vector<7x224xf32>
    %76 = tpu.matmul %73, %75, %cst_90 {dimension_numbers = #tpu.dot_dimension_numbers<[1], [0], [0], [1], [0, 0, 1, 1], [], []>} : vector<7x96xbf16>, vector<96x224xbf16>, vector<7x224xf32> -> vector<7x224xf32>
    %77 = arith.addf %66, %76 : vector<7x224xf32>
    %c1_91 = arith.constant 1 : index
    %c1_92 = arith.constant 1 : index
    %c0_93 = arith.constant 0 : index
    %c0_94 = arith.constant 0 : index
    %78 = vector.load %arg2[%c1_91, %c1_92, %c0_93, %c0_94] : memref<2x5x96x224xbf16, #tpu.memory_space<vmem>>, vector<1x1x96x224xbf16>
    %79 = vector.shape_cast %78 : vector<1x1x96x224xbf16> to vector<96x224xbf16>
    %cst_95 = arith.constant dense<0.000000e+00> : vector<7x224xf32>
    %80 = tpu.matmul %73, %79, %cst_95 {dimension_numbers = #tpu.dot_dimension_numbers<[1], [0], [0], [1], [0, 0, 1, 1], [], []>} : vector<7x96xbf16>, vector<96x224xbf16>, vector<7x224xf32> -> vector<7x224xf32>
    %81 = arith.addf %70, %80 : vector<7x224xf32>
    %c0_96 = arith.constant 0 : index
    %c0_97 = arith.constant 0 : index
    %c1_98 = arith.constant 1 : index
    %c0_99 = arith.constant 0 : index
    %82 = vector.load %arg1[%c0_96, %c0_97, %c1_98, %c0_99] : memref<1x4x8x96xf32, #tpu.memory_space<vmem>>, vector<1x1x7x96xf32>
    %83 = vector.shape_cast %82 : vector<1x1x7x96xf32> to vector<7x96xf32>
    %84 = arith.truncf %83 : vector<7x96xf32> to vector<7x96xbf16>
    %c0_100 = arith.constant 0 : index
    %c2_101 = arith.constant 2 : index
    %c0_102 = arith.constant 0 : index
    %c0_103 = arith.constant 0 : index
    %85 = vector.load %arg2[%c0_100, %c2_101, %c0_102, %c0_103] : memref<2x5x96x224xbf16, #tpu.memory_space<vmem>>, vector<1x1x96x224xbf16>
    %86 = vector.shape_cast %85 : vector<1x1x96x224xbf16> to vector<96x224xbf16>
    %cst_104 = arith.constant dense<0.000000e+00> : vector<7x224xf32>
    %87 = tpu.matmul %84, %86, %cst_104 {dimension_numbers = #tpu.dot_dimension_numbers<[1], [0], [0], [1], [0, 0, 1, 1], [], []>} : vector<7x96xbf16>, vector<96x224xbf16>, vector<7x224xf32> -> vector<7x224xf32>
    %88 = arith.addf %77, %87 : vector<7x224xf32>
    %c1_105 = arith.constant 1 : index
    %c2_106 = arith.constant 2 : index
    %c0_107 = arith.constant 0 : index
    %c0_108 = arith.constant 0 : index
    %89 = vector.load %arg2[%c1_105, %c2_106, %c0_107, %c0_108] : memref<2x5x96x224xbf16, #tpu.memory_space<vmem>>, vector<1x1x96x224xbf16>
    %90 = vector.shape_cast %89 : vector<1x1x96x224xbf16> to vector<96x224xbf16>
    %cst_109 = arith.constant dense<0.000000e+00> : vector<7x224xf32>
    %91 = tpu.matmul %84, %90, %cst_109 {dimension_numbers = #tpu.dot_dimension_numbers<[1], [0], [0], [1], [0, 0, 1, 1], [], []>} : vector<7x96xbf16>, vector<96x224xbf16>, vector<7x224xf32> -> vector<7x224xf32>
    %92 = arith.addf %81, %91 : vector<7x224xf32>
    %c0_110 = arith.constant 0 : index
    %c1_111 = arith.constant 1 : index
    %c1_112 = arith.constant 1 : index
    %c0_113 = arith.constant 0 : index
    %93 = vector.load %arg1[%c0_110, %c1_111, %c1_112, %c0_113] : memref<1x4x8x96xf32, #tpu.memory_space<vmem>>, vector<1x1x7x96xf32>
    %94 = vector.shape_cast %93 : vector<1x1x7x96xf32> to vector<7x96xf32>
    %95 = arith.truncf %94 : vector<7x96xf32> to vector<7x96xbf16>
    %c0_114 = arith.constant 0 : index
    %c3_115 = arith.constant 3 : index
    %c0_116 = arith.constant 0 : index
    %c0_117 = arith.constant 0 : index
    %96 = vector.load %arg2[%c0_114, %c3_115, %c0_116, %c0_117] : memref<2x5x96x224xbf16, #tpu.memory_space<vmem>>, vector<1x1x96x224xbf16>
    %97 = vector.shape_cast %96 : vector<1x1x96x224xbf16> to vector<96x224xbf16>
    %cst_118 = arith.constant dense<0.000000e+00> : vector<7x224xf32>
    %98 = tpu.matmul %95, %97, %cst_118 {dimension_numbers = #tpu.dot_dimension_numbers<[1], [0], [0], [1], [0, 0, 1, 1], [], []>} : vector<7x96xbf16>, vector<96x224xbf16>, vector<7x224xf32> -> vector<7x224xf32>
    %99 = arith.addf %88, %98 : vector<7x224xf32>
    %c1_119 = arith.constant 1 : index
    %c3_120 = arith.constant 3 : index
    %c0_121 = arith.constant 0 : index
    %c0_122 = arith.constant 0 : index
    %100 = vector.load %arg2[%c1_119, %c3_120, %c0_121, %c0_122] : memref<2x5x96x224xbf16, #tpu.memory_space<vmem>>, vector<1x1x96x224xbf16>
    %101 = vector.shape_cast %100 : vector<1x1x96x224xbf16> to vector<96x224xbf16>
    %cst_123 = arith.constant dense<0.000000e+00> : vector<7x224xf32>
    %102 = tpu.matmul %95, %101, %cst_123 {dimension_numbers = #tpu.dot_dimension_numbers<[1], [0], [0], [1], [0, 0, 1, 1], [], []>} : vector<7x96xbf16>, vector<96x224xbf16>, vector<7x224xf32> -> vector<7x224xf32>
    %103 = arith.addf %92, %102 : vector<7x224xf32>
    %c0_124 = arith.constant 0 : index
    %c2_125 = arith.constant 2 : index
    %c1_126 = arith.constant 1 : index
    %c0_127 = arith.constant 0 : index
    %104 = vector.load %arg1[%c0_124, %c2_125, %c1_126, %c0_127] : memref<1x4x8x96xf32, #tpu.memory_space<vmem>>, vector<1x1x7x96xf32>
    %105 = vector.shape_cast %104 : vector<1x1x7x96xf32> to vector<7x96xf32>
    %106 = arith.truncf %105 : vector<7x96xf32> to vector<7x96xbf16>
    %c0_128 = arith.constant 0 : index
    %c4_129 = arith.constant 4 : index
    %c0_130 = arith.constant 0 : index
    %c0_131 = arith.constant 0 : index
    %107 = vector.load %arg2[%c0_128, %c4_129, %c0_130, %c0_131] : memref<2x5x96x224xbf16, #tpu.memory_space<vmem>>, vector<1x1x96x224xbf16>
    %108 = vector.shape_cast %107 : vector<1x1x96x224xbf16> to vector<96x224xbf16>
    %cst_132 = arith.constant dense<0.000000e+00> : vector<7x224xf32>
    %109 = tpu.matmul %106, %108, %cst_132 {dimension_numbers = #tpu.dot_dimension_numbers<[1], [0], [0], [1], [0, 0, 1, 1], [], []>} : vector<7x96xbf16>, vector<96x224xbf16>, vector<7x224xf32> -> vector<7x224xf32>
    %110 = arith.addf %99, %109 : vector<7x224xf32>
    %c1_133 = arith.constant 1 : index
    %c4_134 = arith.constant 4 : index
    %c0_135 = arith.constant 0 : index
    %c0_136 = arith.constant 0 : index
    %111 = vector.load %arg2[%c1_133, %c4_134, %c0_135, %c0_136] : memref<2x5x96x224xbf16, #tpu.memory_space<vmem>>, vector<1x1x96x224xbf16>
    %112 = vector.shape_cast %111 : vector<1x1x96x224xbf16> to vector<96x224xbf16>
    %cst_137 = arith.constant dense<0.000000e+00> : vector<7x224xf32>
    %113 = tpu.matmul %106, %112, %cst_137 {dimension_numbers = #tpu.dot_dimension_numbers<[1], [0], [0], [1], [0, 0, 1, 1], [], []>} : vector<7x96xbf16>, vector<96x224xbf16>, vector<7x224xf32> -> vector<7x224xf32>
    %114 = arith.addf %103, %113 : vector<7x224xf32>
    %115 = arith.maximumf %110, %114 : vector<7x224xf32>
    %116 = arith.maximumf %57, %115 : vector<7x224xf32>
    %c0_138 = arith.constant 0 : index
    %c0_139 = arith.constant 0 : index
    %117 = vector.load %arg3[%c0_138, %c0_139] : memref<1x224xf32, #tpu.memory_space<vmem>>, vector<1x224xf32>
    %118 = vector.broadcast %117 : vector<1x224xf32> to vector<7x224xf32>
    %119 = arith.addf %116, %118 : vector<7x224xf32>
    %cst_140 = arith.constant 0.000000e+00 : f32
    %120 = vector.broadcast %cst_140 : f32 to vector<7x224xf32>
    %121 = arith.cmpf oge, %119, %120 : vector<7x224xf32>
    %cst_141 = arith.constant 0.229166672 : f32
    %122 = vector.broadcast %cst_141 : f32 to vector<7x224xf32>
    %123 = arith.mulf %119, %122 : vector<7x224xf32>
    %124 = arith.select %121, %119, %123 : vector<7x224xi1>, vector<7x224xf32>
    %cst_142 = arith.constant 0.000000e+00 : f32
    %125 = vector.broadcast %cst_142 : f32 to vector<1x128xf32>
    %cst_143 = arith.constant 0.000000e+00 : f32
    %126 = vector.broadcast %cst_143 : f32 to vector<1x128xf32>
    %127 = vector.extract_strided_slice %124 {offsets = [0, 0], sizes = [1, 224], strides = [1, 1]} : vector<7x224xf32> to vector<1x224xf32>
    %128 = arith.truncf %127 : vector<1x224xf32> to vector<1x224xbf16>
    %c0_144 = arith.constant 0 : index
    %c0_145 = arith.constant 0 : index
    %c0_146 = arith.constant 0 : index
    %c0_147 = arith.constant 0 : index
    %129 = vector.load %arg4[%c0_144, %c0_145, %c0_146, %c0_147] : memref<2x3x224x128xbf16, #tpu.memory_space<vmem>>, vector<1x1x224x128xbf16>
    %130 = vector.shape_cast %129 : vector<1x1x224x128xbf16> to vector<224x128xbf16>
    %cst_148 = arith.constant dense<0.000000e+00> : vector<1x128xf32>
    %131 = tpu.matmul %128, %130, %cst_148 {dimension_numbers = #tpu.dot_dimension_numbers<[1], [0], [0], [1], [0, 0, 1, 1], [], []>} : vector<1x224xbf16>, vector<224x128xbf16>, vector<1x128xf32> -> vector<1x128xf32>
    %132 = arith.addf %125, %131 : vector<1x128xf32>
    %c1_149 = arith.constant 1 : index
    %c0_150 = arith.constant 0 : index
    %c0_151 = arith.constant 0 : index
    %c0_152 = arith.constant 0 : index
    %133 = vector.load %arg4[%c1_149, %c0_150, %c0_151, %c0_152] : memref<2x3x224x128xbf16, #tpu.memory_space<vmem>>, vector<1x1x224x128xbf16>
    %134 = vector.shape_cast %133 : vector<1x1x224x128xbf16> to vector<224x128xbf16>
    %cst_153 = arith.constant dense<0.000000e+00> : vector<1x128xf32>
    %135 = tpu.matmul %128, %134, %cst_153 {dimension_numbers = #tpu.dot_dimension_numbers<[1], [0], [0], [1], [0, 0, 1, 1], [], []>} : vector<1x224xbf16>, vector<224x128xbf16>, vector<1x128xf32> -> vector<1x128xf32>
    %136 = arith.addf %126, %135 : vector<1x128xf32>
    %137 = vector.extract_strided_slice %124 {offsets = [1, 0], sizes = [1, 224], strides = [1, 1]} : vector<7x224xf32> to vector<1x224xf32>
    %138 = arith.truncf %137 : vector<1x224xf32> to vector<1x224xbf16>
    %c0_154 = arith.constant 0 : index
    %c1_155 = arith.constant 1 : index
    %c0_156 = arith.constant 0 : index
    %c0_157 = arith.constant 0 : index
    %139 = vector.load %arg4[%c0_154, %c1_155, %c0_156, %c0_157] : memref<2x3x224x128xbf16, #tpu.memory_space<vmem>>, vector<1x1x224x128xbf16>
    %140 = vector.shape_cast %139 : vector<1x1x224x128xbf16> to vector<224x128xbf16>
    %cst_158 = arith.constant dense<0.000000e+00> : vector<1x128xf32>
    %141 = tpu.matmul %138, %140, %cst_158 {dimension_numbers = #tpu.dot_dimension_numbers<[1], [0], [0], [1], [0, 0, 1, 1], [], []>} : vector<1x224xbf16>, vector<224x128xbf16>, vector<1x128xf32> -> vector<1x128xf32>
    %142 = arith.addf %132, %141 : vector<1x128xf32>
    %c1_159 = arith.constant 1 : index
    %c1_160 = arith.constant 1 : index
    %c0_161 = arith.constant 0 : index
    %c0_162 = arith.constant 0 : index
    %143 = vector.load %arg4[%c1_159, %c1_160, %c0_161, %c0_162] : memref<2x3x224x128xbf16, #tpu.memory_space<vmem>>, vector<1x1x224x128xbf16>
    %144 = vector.shape_cast %143 : vector<1x1x224x128xbf16> to vector<224x128xbf16>
    %cst_163 = arith.constant dense<0.000000e+00> : vector<1x128xf32>
    %145 = tpu.matmul %138, %144, %cst_163 {dimension_numbers = #tpu.dot_dimension_numbers<[1], [0], [0], [1], [0, 0, 1, 1], [], []>} : vector<1x224xbf16>, vector<224x128xbf16>, vector<1x128xf32> -> vector<1x128xf32>
    %146 = arith.addf %136, %145 : vector<1x128xf32>
    %147 = vector.extract_strided_slice %124 {offsets = [2, 0], sizes = [1, 224], strides = [1, 1]} : vector<7x224xf32> to vector<1x224xf32>
    %148 = arith.truncf %147 : vector<1x224xf32> to vector<1x224xbf16>
    %c0_164 = arith.constant 0 : index
    %c2_165 = arith.constant 2 : index
    %c0_166 = arith.constant 0 : index
    %c0_167 = arith.constant 0 : index
    %149 = vector.load %arg4[%c0_164, %c2_165, %c0_166, %c0_167] : memref<2x3x224x128xbf16, #tpu.memory_space<vmem>>, vector<1x1x224x128xbf16>
    %150 = vector.shape_cast %149 : vector<1x1x224x128xbf16> to vector<224x128xbf16>
    %cst_168 = arith.constant dense<0.000000e+00> : vector<1x128xf32>
    %151 = tpu.matmul %148, %150, %cst_168 {dimension_numbers = #tpu.dot_dimension_numbers<[1], [0], [0], [1], [0, 0, 1, 1], [], []>} : vector<1x224xbf16>, vector<224x128xbf16>, vector<1x128xf32> -> vector<1x128xf32>
    %152 = arith.addf %142, %151 : vector<1x128xf32>
    %c1_169 = arith.constant 1 : index
    %c2_170 = arith.constant 2 : index
    %c0_171 = arith.constant 0 : index
    %c0_172 = arith.constant 0 : index
    %153 = vector.load %arg4[%c1_169, %c2_170, %c0_171, %c0_172] : memref<2x3x224x128xbf16, #tpu.memory_space<vmem>>, vector<1x1x224x128xbf16>
    %154 = vector.shape_cast %153 : vector<1x1x224x128xbf16> to vector<224x128xbf16>
    %cst_173 = arith.constant dense<0.000000e+00> : vector<1x128xf32>
    %155 = tpu.matmul %148, %154, %cst_173 {dimension_numbers = #tpu.dot_dimension_numbers<[1], [0], [0], [1], [0, 0, 1, 1], [], []>} : vector<1x224xbf16>, vector<224x128xbf16>, vector<1x128xf32> -> vector<1x128xf32>
    %156 = arith.addf %146, %155 : vector<1x128xf32>
    %157 = arith.maximumf %152, %156 : vector<1x128xf32>
    %cst_174 = arith.constant 0.000000e+00 : f32
    %158 = vector.broadcast %cst_174 : f32 to vector<1x128xf32>
    %cst_175 = arith.constant 0.000000e+00 : f32
    %159 = vector.broadcast %cst_175 : f32 to vector<1x128xf32>
    %160 = vector.extract_strided_slice %124 {offsets = [1, 0], sizes = [1, 224], strides = [1, 1]} : vector<7x224xf32> to vector<1x224xf32>
    %161 = arith.truncf %160 : vector<1x224xf32> to vector<1x224xbf16>
    %c0_176 = arith.constant 0 : index
    %c0_177 = arith.constant 0 : index
    %c0_178 = arith.constant 0 : index
    %c0_179 = arith.constant 0 : index
    %162 = vector.load %arg4[%c0_176, %c0_177, %c0_178, %c0_179] : memref<2x3x224x128xbf16, #tpu.memory_space<vmem>>, vector<1x1x224x128xbf16>
    %163 = vector.shape_cast %162 : vector<1x1x224x128xbf16> to vector<224x128xbf16>
    %cst_180 = arith.constant dense<0.000000e+00> : vector<1x128xf32>
    %164 = tpu.matmul %161, %163, %cst_180 {dimension_numbers = #tpu.dot_dimension_numbers<[1], [0], [0], [1], [0, 0, 1, 1], [], []>} : vector<1x224xbf16>, vector<224x128xbf16>, vector<1x128xf32> -> vector<1x128xf32>
    %165 = arith.addf %158, %164 : vector<1x128xf32>
    %c1_181 = arith.constant 1 : index
    %c0_182 = arith.constant 0 : index
    %c0_183 = arith.constant 0 : index
    %c0_184 = arith.constant 0 : index
    %166 = vector.load %arg4[%c1_181, %c0_182, %c0_183, %c0_184] : memref<2x3x224x128xbf16, #tpu.memory_space<vmem>>, vector<1x1x224x128xbf16>
    %167 = vector.shape_cast %166 : vector<1x1x224x128xbf16> to vector<224x128xbf16>
    %cst_185 = arith.constant dense<0.000000e+00> : vector<1x128xf32>
    %168 = tpu.matmul %161, %167, %cst_185 {dimension_numbers = #tpu.dot_dimension_numbers<[1], [0], [0], [1], [0, 0, 1, 1], [], []>} : vector<1x224xbf16>, vector<224x128xbf16>, vector<1x128xf32> -> vector<1x128xf32>
    %169 = arith.addf %159, %168 : vector<1x128xf32>
    %170 = vector.extract_strided_slice %124 {offsets = [2, 0], sizes = [1, 224], strides = [1, 1]} : vector<7x224xf32> to vector<1x224xf32>
    %171 = arith.truncf %170 : vector<1x224xf32> to vector<1x224xbf16>
    %c0_186 = arith.constant 0 : index
    %c1_187 = arith.constant 1 : index
    %c0_188 = arith.constant 0 : index
    %c0_189 = arith.constant 0 : index
    %172 = vector.load %arg4[%c0_186, %c1_187, %c0_188, %c0_189] : memref<2x3x224x128xbf16, #tpu.memory_space<vmem>>, vector<1x1x224x128xbf16>
    %173 = vector.shape_cast %172 : vector<1x1x224x128xbf16> to vector<224x128xbf16>
    %cst_190 = arith.constant dense<0.000000e+00> : vector<1x128xf32>
    %174 = tpu.matmul %171, %173, %cst_190 {dimension_numbers = #tpu.dot_dimension_numbers<[1], [0], [0], [1], [0, 0, 1, 1], [], []>} : vector<1x224xbf16>, vector<224x128xbf16>, vector<1x128xf32> -> vector<1x128xf32>
    %175 = arith.addf %165, %174 : vector<1x128xf32>
    %c1_191 = arith.constant 1 : index
    %c1_192 = arith.constant 1 : index
    %c0_193 = arith.constant 0 : index
    %c0_194 = arith.constant 0 : index
    %176 = vector.load %arg4[%c1_191, %c1_192, %c0_193, %c0_194] : memref<2x3x224x128xbf16, #tpu.memory_space<vmem>>, vector<1x1x224x128xbf16>
    %177 = vector.shape_cast %176 : vector<1x1x224x128xbf16> to vector<224x128xbf16>
    %cst_195 = arith.constant dense<0.000000e+00> : vector<1x128xf32>
    %178 = tpu.matmul %171, %177, %cst_195 {dimension_numbers = #tpu.dot_dimension_numbers<[1], [0], [0], [1], [0, 0, 1, 1], [], []>} : vector<1x224xbf16>, vector<224x128xbf16>, vector<1x128xf32> -> vector<1x128xf32>
    %179 = arith.addf %169, %178 : vector<1x128xf32>
    %180 = vector.extract_strided_slice %124 {offsets = [3, 0], sizes = [1, 224], strides = [1, 1]} : vector<7x224xf32> to vector<1x224xf32>
    %181 = arith.truncf %180 : vector<1x224xf32> to vector<1x224xbf16>
    %c0_196 = arith.constant 0 : index
    %c2_197 = arith.constant 2 : index
    %c0_198 = arith.constant 0 : index
    %c0_199 = arith.constant 0 : index
    %182 = vector.load %arg4[%c0_196, %c2_197, %c0_198, %c0_199] : memref<2x3x224x128xbf16, #tpu.memory_space<vmem>>, vector<1x1x224x128xbf16>
    %183 = vector.shape_cast %182 : vector<1x1x224x128xbf16> to vector<224x128xbf16>
    %cst_200 = arith.constant dense<0.000000e+00> : vector<1x128xf32>
    %184 = tpu.matmul %181, %183, %cst_200 {dimension_numbers = #tpu.dot_dimension_numbers<[1], [0], [0], [1], [0, 0, 1, 1], [], []>} : vector<1x224xbf16>, vector<224x128xbf16>, vector<1x128xf32> -> vector<1x128xf32>
    %185 = arith.addf %175, %184 : vector<1x128xf32>
    %c1_201 = arith.constant 1 : index
    %c2_202 = arith.constant 2 : index
    %c0_203 = arith.constant 0 : index
    %c0_204 = arith.constant 0 : index
    %186 = vector.load %arg4[%c1_201, %c2_202, %c0_203, %c0_204] : memref<2x3x224x128xbf16, #tpu.memory_space<vmem>>, vector<1x1x224x128xbf16>
    %187 = vector.shape_cast %186 : vector<1x1x224x128xbf16> to vector<224x128xbf16>
    %cst_205 = arith.constant dense<0.000000e+00> : vector<1x128xf32>
    %188 = tpu.matmul %181, %187, %cst_205 {dimension_numbers = #tpu.dot_dimension_numbers<[1], [0], [0], [1], [0, 0, 1, 1], [], []>} : vector<1x224xbf16>, vector<224x128xbf16>, vector<1x128xf32> -> vector<1x128xf32>
    %189 = arith.addf %179, %188 : vector<1x128xf32>
    %190 = arith.maximumf %185, %189 : vector<1x128xf32>
    %191 = arith.maximumf %157, %190 : vector<1x128xf32>
    %c0_206 = arith.constant 0 : index
    %c0_207 = arith.constant 0 : index
    %192 = vector.load %arg5[%c0_206, %c0_207] : memref<1x128xf32, #tpu.memory_space<vmem>>, vector<1x128xf32>
    %193 = arith.addf %191, %192 : vector<1x128xf32>
    %cst_208 = arith.constant 0.000000e+00 : f32
    %194 = vector.broadcast %cst_208 : f32 to vector<1x128xf32>
    %195 = arith.cmpf oge, %193, %194 : vector<1x128xf32>
    %cst_209 = arith.constant 0.229166672 : f32
    %196 = vector.broadcast %cst_209 : f32 to vector<1x128xf32>
    %197 = arith.mulf %193, %196 : vector<1x128xf32>
    %198 = arith.select %195, %193, %197 : vector<1x128xi1>, vector<1x128xf32>
    %199 = arith.truncf %198 : vector<1x128xf32> to vector<1x128xbf16>
    %cst_210 = arith.constant 0.000000e+00 : f32
    %200 = vector.broadcast %cst_210 : f32 to vector<1x128xf32>
    %cst_211 = arith.constant 0.000000e+00 : f32
    %201 = vector.broadcast %cst_211 : f32 to vector<1x128xf32>
    %202 = vector.extract_strided_slice %124 {offsets = [2, 0], sizes = [1, 224], strides = [1, 1]} : vector<7x224xf32> to vector<1x224xf32>
    %203 = arith.truncf %202 : vector<1x224xf32> to vector<1x224xbf16>
    %c0_212 = arith.constant 0 : index
    %c0_213 = arith.constant 0 : index
    %c0_214 = arith.constant 0 : index
    %c0_215 = arith.constant 0 : index
    %204 = vector.load %arg4[%c0_212, %c0_213, %c0_214, %c0_215] : memref<2x3x224x128xbf16, #tpu.memory_space<vmem>>, vector<1x1x224x128xbf16>
    %205 = vector.shape_cast %204 : vector<1x1x224x128xbf16> to vector<224x128xbf16>
    %cst_216 = arith.constant dense<0.000000e+00> : vector<1x128xf32>
    %206 = tpu.matmul %203, %205, %cst_216 {dimension_numbers = #tpu.dot_dimension_numbers<[1], [0], [0], [1], [0, 0, 1, 1], [], []>} : vector<1x224xbf16>, vector<224x128xbf16>, vector<1x128xf32> -> vector<1x128xf32>
    %207 = arith.addf %200, %206 : vector<1x128xf32>
    %c1_217 = arith.constant 1 : index
    %c0_218 = arith.constant 0 : index
    %c0_219 = arith.constant 0 : index
    %c0_220 = arith.constant 0 : index
    %208 = vector.load %arg4[%c1_217, %c0_218, %c0_219, %c0_220] : memref<2x3x224x128xbf16, #tpu.memory_space<vmem>>, vector<1x1x224x128xbf16>
    %209 = vector.shape_cast %208 : vector<1x1x224x128xbf16> to vector<224x128xbf16>
    %cst_221 = arith.constant dense<0.000000e+00> : vector<1x128xf32>
    %210 = tpu.matmul %203, %209, %cst_221 {dimension_numbers = #tpu.dot_dimension_numbers<[1], [0], [0], [1], [0, 0, 1, 1], [], []>} : vector<1x224xbf16>, vector<224x128xbf16>, vector<1x128xf32> -> vector<1x128xf32>
    %211 = arith.addf %201, %210 : vector<1x128xf32>
    %212 = vector.extract_strided_slice %124 {offsets = [3, 0], sizes = [1, 224], strides = [1, 1]} : vector<7x224xf32> to vector<1x224xf32>
    %213 = arith.truncf %212 : vector<1x224xf32> to vector<1x224xbf16>
    %c0_222 = arith.constant 0 : index
    %c1_223 = arith.constant 1 : index
    %c0_224 = arith.constant 0 : index
    %c0_225 = arith.constant 0 : index
    %214 = vector.load %arg4[%c0_222, %c1_223, %c0_224, %c0_225] : memref<2x3x224x128xbf16, #tpu.memory_space<vmem>>, vector<1x1x224x128xbf16>
    %215 = vector.shape_cast %214 : vector<1x1x224x128xbf16> to vector<224x128xbf16>
    %cst_226 = arith.constant dense<0.000000e+00> : vector<1x128xf32>
    %216 = tpu.matmul %213, %215, %cst_226 {dimension_numbers = #tpu.dot_dimension_numbers<[1], [0], [0], [1], [0, 0, 1, 1], [], []>} : vector<1x224xbf16>, vector<224x128xbf16>, vector<1x128xf32> -> vector<1x128xf32>
    %217 = arith.addf %207, %216 : vector<1x128xf32>
    %c1_227 = arith.constant 1 : index
    %c1_228 = arith.constant 1 : index
    %c0_229 = arith.constant 0 : index
    %c0_230 = arith.constant 0 : index
    %218 = vector.load %arg4[%c1_227, %c1_228, %c0_229, %c0_230] : memref<2x3x224x128xbf16, #tpu.memory_space<vmem>>, vector<1x1x224x128xbf16>
    %219 = vector.shape_cast %218 : vector<1x1x224x128xbf16> to vector<224x128xbf16>
    %cst_231 = arith.constant dense<0.000000e+00> : vector<1x128xf32>
    %220 = tpu.matmul %213, %219, %cst_231 {dimension_numbers = #tpu.dot_dimension_numbers<[1], [0], [0], [1], [0, 0, 1, 1], [], []>} : vector<1x224xbf16>, vector<224x128xbf16>, vector<1x128xf32> -> vector<1x128xf32>
    %221 = arith.addf %211, %220 : vector<1x128xf32>
    %222 = vector.extract_strided_slice %124 {offsets = [4, 0], sizes = [1, 224], strides = [1, 1]} : vector<7x224xf32> to vector<1x224xf32>
    %223 = arith.truncf %222 : vector<1x224xf32> to vector<1x224xbf16>
    %c0_232 = arith.constant 0 : index
    %c2_233 = arith.constant 2 : index
    %c0_234 = arith.constant 0 : index
    %c0_235 = arith.constant 0 : index
    %224 = vector.load %arg4[%c0_232, %c2_233, %c0_234, %c0_235] : memref<2x3x224x128xbf16, #tpu.memory_space<vmem>>, vector<1x1x224x128xbf16>
    %225 = vector.shape_cast %224 : vector<1x1x224x128xbf16> to vector<224x128xbf16>
    %cst_236 = arith.constant dense<0.000000e+00> : vector<1x128xf32>
    %226 = tpu.matmul %223, %225, %cst_236 {dimension_numbers = #tpu.dot_dimension_numbers<[1], [0], [0], [1], [0, 0, 1, 1], [], []>} : vector<1x224xbf16>, vector<224x128xbf16>, vector<1x128xf32> -> vector<1x128xf32>
    %227 = arith.addf %217, %226 : vector<1x128xf32>
    %c1_237 = arith.constant 1 : index
    %c2_238 = arith.constant 2 : index
    %c0_239 = arith.constant 0 : index
    %c0_240 = arith.constant 0 : index
    %228 = vector.load %arg4[%c1_237, %c2_238, %c0_239, %c0_240] : memref<2x3x224x128xbf16, #tpu.memory_space<vmem>>, vector<1x1x224x128xbf16>
    %229 = vector.shape_cast %228 : vector<1x1x224x128xbf16> to vector<224x128xbf16>
    %cst_241 = arith.constant dense<0.000000e+00> : vector<1x128xf32>
    %230 = tpu.matmul %223, %229, %cst_241 {dimension_numbers = #tpu.dot_dimension_numbers<[1], [0], [0], [1], [0, 0, 1, 1], [], []>} : vector<1x224xbf16>, vector<224x128xbf16>, vector<1x128xf32> -> vector<1x128xf32>
    %231 = arith.addf %221, %230 : vector<1x128xf32>
    %232 = arith.maximumf %227, %231 : vector<1x128xf32>
    %cst_242 = arith.constant 0.000000e+00 : f32
    %233 = vector.broadcast %cst_242 : f32 to vector<1x128xf32>
    %cst_243 = arith.constant 0.000000e+00 : f32
    %234 = vector.broadcast %cst_243 : f32 to vector<1x128xf32>
    %235 = vector.extract_strided_slice %124 {offsets = [3, 0], sizes = [1, 224], strides = [1, 1]} : vector<7x224xf32> to vector<1x224xf32>
    %236 = arith.truncf %235 : vector<1x224xf32> to vector<1x224xbf16>
    %c0_244 = arith.constant 0 : index
    %c0_245 = arith.constant 0 : index
    %c0_246 = arith.constant 0 : index
    %c0_247 = arith.constant 0 : index
    %237 = vector.load %arg4[%c0_244, %c0_245, %c0_246, %c0_247] : memref<2x3x224x128xbf16, #tpu.memory_space<vmem>>, vector<1x1x224x128xbf16>
    %238 = vector.shape_cast %237 : vector<1x1x224x128xbf16> to vector<224x128xbf16>
    %cst_248 = arith.constant dense<0.000000e+00> : vector<1x128xf32>
    %239 = tpu.matmul %236, %238, %cst_248 {dimension_numbers = #tpu.dot_dimension_numbers<[1], [0], [0], [1], [0, 0, 1, 1], [], []>} : vector<1x224xbf16>, vector<224x128xbf16>, vector<1x128xf32> -> vector<1x128xf32>
    %240 = arith.addf %233, %239 : vector<1x128xf32>
    %c1_249 = arith.constant 1 : index
    %c0_250 = arith.constant 0 : index
    %c0_251 = arith.constant 0 : index
    %c0_252 = arith.constant 0 : index
    %241 = vector.load %arg4[%c1_249, %c0_250, %c0_251, %c0_252] : memref<2x3x224x128xbf16, #tpu.memory_space<vmem>>, vector<1x1x224x128xbf16>
    %242 = vector.shape_cast %241 : vector<1x1x224x128xbf16> to vector<224x128xbf16>
    %cst_253 = arith.constant dense<0.000000e+00> : vector<1x128xf32>
    %243 = tpu.matmul %236, %242, %cst_253 {dimension_numbers = #tpu.dot_dimension_numbers<[1], [0], [0], [1], [0, 0, 1, 1], [], []>} : vector<1x224xbf16>, vector<224x128xbf16>, vector<1x128xf32> -> vector<1x128xf32>
    %244 = arith.addf %234, %243 : vector<1x128xf32>
    %245 = vector.extract_strided_slice %124 {offsets = [4, 0], sizes = [1, 224], strides = [1, 1]} : vector<7x224xf32> to vector<1x224xf32>
    %246 = arith.truncf %245 : vector<1x224xf32> to vector<1x224xbf16>
    %c0_254 = arith.constant 0 : index
    %c1_255 = arith.constant 1 : index
    %c0_256 = arith.constant 0 : index
    %c0_257 = arith.constant 0 : index
    %247 = vector.load %arg4[%c0_254, %c1_255, %c0_256, %c0_257] : memref<2x3x224x128xbf16, #tpu.memory_space<vmem>>, vector<1x1x224x128xbf16>
    %248 = vector.shape_cast %247 : vector<1x1x224x128xbf16> to vector<224x128xbf16>
    %cst_258 = arith.constant dense<0.000000e+00> : vector<1x128xf32>
    %249 = tpu.matmul %246, %248, %cst_258 {dimension_numbers = #tpu.dot_dimension_numbers<[1], [0], [0], [1], [0, 0, 1, 1], [], []>} : vector<1x224xbf16>, vector<224x128xbf16>, vector<1x128xf32> -> vector<1x128xf32>
    %250 = arith.addf %240, %249 : vector<1x128xf32>
    %c1_259 = arith.constant 1 : index
    %c1_260 = arith.constant 1 : index
    %c0_261 = arith.constant 0 : index
    %c0_262 = arith.constant 0 : index
    %251 = vector.load %arg4[%c1_259, %c1_260, %c0_261, %c0_262] : memref<2x3x224x128xbf16, #tpu.memory_space<vmem>>, vector<1x1x224x128xbf16>
    %252 = vector.shape_cast %251 : vector<1x1x224x128xbf16> to vector<224x128xbf16>
    %cst_263 = arith.constant dense<0.000000e+00> : vector<1x128xf32>
    %253 = tpu.matmul %246, %252, %cst_263 {dimension_numbers = #tpu.dot_dimension_numbers<[1], [0], [0], [1], [0, 0, 1, 1], [], []>} : vector<1x224xbf16>, vector<224x128xbf16>, vector<1x128xf32> -> vector<1x128xf32>
    %254 = arith.addf %244, %253 : vector<1x128xf32>
    %255 = vector.extract_strided_slice %124 {offsets = [5, 0], sizes = [1, 224], strides = [1, 1]} : vector<7x224xf32> to vector<1x224xf32>
    %256 = arith.truncf %255 : vector<1x224xf32> to vector<1x224xbf16>
    %c0_264 = arith.constant 0 : index
    %c2_265 = arith.constant 2 : index
    %c0_266 = arith.constant 0 : index
    %c0_267 = arith.constant 0 : index
    %257 = vector.load %arg4[%c0_264, %c2_265, %c0_266, %c0_267] : memref<2x3x224x128xbf16, #tpu.memory_space<vmem>>, vector<1x1x224x128xbf16>
    %258 = vector.shape_cast %257 : vector<1x1x224x128xbf16> to vector<224x128xbf16>
    %cst_268 = arith.constant dense<0.000000e+00> : vector<1x128xf32>
    %259 = tpu.matmul %256, %258, %cst_268 {dimension_numbers = #tpu.dot_dimension_numbers<[1], [0], [0], [1], [0, 0, 1, 1], [], []>} : vector<1x224xbf16>, vector<224x128xbf16>, vector<1x128xf32> -> vector<1x128xf32>
    %260 = arith.addf %250, %259 : vector<1x128xf32>
    %c1_269 = arith.constant 1 : index
    %c2_270 = arith.constant 2 : index
    %c0_271 = arith.constant 0 : index
    %c0_272 = arith.constant 0 : index
    %261 = vector.load %arg4[%c1_269, %c2_270, %c0_271, %c0_272] : memref<2x3x224x128xbf16, #tpu.memory_space<vmem>>, vector<1x1x224x128xbf16>
    %262 = vector.shape_cast %261 : vector<1x1x224x128xbf16> to vector<224x128xbf16>
    %cst_273 = arith.constant dense<0.000000e+00> : vector<1x128xf32>
    %263 = tpu.matmul %256, %262, %cst_273 {dimension_numbers = #tpu.dot_dimension_numbers<[1], [0], [0], [1], [0, 0, 1, 1], [], []>} : vector<1x224xbf16>, vector<224x128xbf16>, vector<1x128xf32> -> vector<1x128xf32>
    %264 = arith.addf %254, %263 : vector<1x128xf32>
    %265 = arith.maximumf %260, %264 : vector<1x128xf32>
    %266 = arith.maximumf %232, %265 : vector<1x128xf32>
    %c0_274 = arith.constant 0 : index
    %c0_275 = arith.constant 0 : index
    %267 = vector.load %arg5[%c0_274, %c0_275] : memref<1x128xf32, #tpu.memory_space<vmem>>, vector<1x128xf32>
    %268 = arith.addf %266, %267 : vector<1x128xf32>
    %cst_276 = arith.constant 0.000000e+00 : f32
    %269 = vector.broadcast %cst_276 : f32 to vector<1x128xf32>
    %270 = arith.cmpf oge, %268, %269 : vector<1x128xf32>
    %cst_277 = arith.constant 0.229166672 : f32
    %271 = vector.broadcast %cst_277 : f32 to vector<1x128xf32>
    %272 = arith.mulf %268, %271 : vector<1x128xf32>
    %273 = arith.select %270, %268, %272 : vector<1x128xi1>, vector<1x128xf32>
    %274 = arith.truncf %273 : vector<1x128xf32> to vector<1x128xbf16>
    %c0_278 = arith.constant 0 : index
    %c0_279 = arith.constant 0 : index
    %c0_280 = arith.constant 0 : index
    %275 = vector.load %arg6[%c0_278, %c0_279, %c0_280] : memref<2x128x256xbf16, #tpu.memory_space<vmem>>, vector<1x128x256xbf16>
    %276 = vector.shape_cast %275 : vector<1x128x256xbf16> to vector<128x256xbf16>
    %cst_281 = arith.constant dense<0.000000e+00> : vector<1x256xf32>
    %277 = tpu.matmul %199, %276, %cst_281 {dimension_numbers = #tpu.dot_dimension_numbers<[1], [0], [0], [1], [0, 0, 1, 1], [], []>} : vector<1x128xbf16>, vector<128x256xbf16>, vector<1x256xf32> -> vector<1x256xf32>
    %c1_282 = arith.constant 1 : index
    %c0_283 = arith.constant 0 : index
    %c0_284 = arith.constant 0 : index
    %278 = vector.load %arg6[%c1_282, %c0_283, %c0_284] : memref<2x128x256xbf16, #tpu.memory_space<vmem>>, vector<1x128x256xbf16>
    %279 = vector.shape_cast %278 : vector<1x128x256xbf16> to vector<128x256xbf16>
    %cst_285 = arith.constant dense<0.000000e+00> : vector<1x256xf32>
    %280 = tpu.matmul %274, %279, %cst_285 {dimension_numbers = #tpu.dot_dimension_numbers<[1], [0], [0], [1], [0, 0, 1, 1], [], []>} : vector<1x128xbf16>, vector<128x256xbf16>, vector<1x256xf32> -> vector<1x256xf32>
    %281 = arith.addf %277, %280 : vector<1x256xf32>
    %c0_286 = arith.constant 0 : index
    %c0_287 = arith.constant 0 : index
    %282 = vector.load %arg7[%c0_286, %c0_287] : memref<1x256xf32, #tpu.memory_space<vmem>>, vector<1x256xf32>
    %283 = arith.addf %281, %282 : vector<1x256xf32>
    %cst_288 = arith.constant 0.000000e+00 : f32
    %284 = vector.broadcast %cst_288 : f32 to vector<1x256xf32>
    %285 = arith.maximumf %283, %284 : vector<1x256xf32>
    %286 = arith.truncf %285 : vector<1x256xf32> to vector<1x256xbf16>
    %c0_289 = arith.constant 0 : index
    %c0_290 = arith.constant 0 : index
    %287 = vector.load %arg8[%c0_289, %c0_290] : memref<256x128xbf16, #tpu.memory_space<vmem>>, vector<256x128xbf16>
    %cst_291 = arith.constant dense<0.000000e+00> : vector<1x128xf32>
    %288 = tpu.matmul %286, %287, %cst_291 {dimension_numbers = #tpu.dot_dimension_numbers<[1], [0], [0], [1], [0, 0, 1, 1], [], []>} : vector<1x256xbf16>, vector<256x128xbf16>, vector<1x128xf32> -> vector<1x128xf32>
    %c0_292 = arith.constant 0 : index
    %c0_293 = arith.constant 0 : index
    %289 = vector.load %arg9[%c0_292, %c0_293] : memref<1x128xf32, #tpu.memory_space<vmem>>, vector<1x128xf32>
    %290 = arith.addf %288, %289 : vector<1x128xf32>
    %291 = vector.shape_cast %290 : vector<1x128xf32> to vector<1x128xf32>
    %292 = vector.broadcast %291 : vector<1x128xf32> to vector<8x128xf32>
    %c0_294 = arith.constant 0 : index
    %c0_295 = arith.constant 0 : index
    %c0_296 = arith.constant 0 : index
    %293 = vector.load %arg10[%c0_294, %c0_295, %c0_296] : memref<1x8x128xf32, #tpu.memory_space<vmem>>, vector<1x8x128xf32>
    %294 = vector.shape_cast %293 : vector<1x8x128xf32> to vector<8x128xf32>
    %295 = vector.shape_cast %292 : vector<8x128xf32> to vector<1x8x128xf32>
    tpu.vector_store %arg10[%c0_294, %c0_295, %c0_296], %295 {strides = array<i32>} : memref<1x8x128xf32, #tpu.memory_space<vmem>>, vector<1x8x128xf32>,
    return
  }
  func.func @transform_0(%arg0: i32) -> (i32, i32, i32, i32) {
    %c0_i32 = arith.constant 0 : i32
    %c0_i32_0 = arith.constant 0 : i32
    %c0_i32_1 = arith.constant 0 : i32
    %c0_i32_2 = arith.constant 0 : i32
    return %arg0, %c0_i32, %c0_i32_0, %c0_i32_1 : i32, i32, i32, i32
  }
  func.func @transform_1(%arg0: i32) -> (i32, i32, i32, i32) {
    %c0_i32 = arith.constant 0 : i32
    %c0_i32_0 = arith.constant 0 : i32
    %c0_i32_1 = arith.constant 0 : i32
    %c0_i32_2 = arith.constant 0 : i32
    %c0_i32_3 = arith.constant 0 : i32
    return %c0_i32, %c0_i32_0, %c0_i32_1, %c0_i32_2 : i32, i32, i32, i32
  }
  func.func @transform_2(%arg0: i32) -> (i32, i32) {
    %c0_i32 = arith.constant 0 : i32
    %c0_i32_0 = arith.constant 0 : i32
    %c0_i32_1 = arith.constant 0 : i32
    return %c0_i32, %c0_i32_0 : i32, i32
  }
  func.func @transform_3(%arg0: i32) -> (i32, i32, i32, i32) {
    %c0_i32 = arith.constant 0 : i32
    %c0_i32_0 = arith.constant 0 : i32
    %c0_i32_1 = arith.constant 0 : i32
    %c0_i32_2 = arith.constant 0 : i32
    %c0_i32_3 = arith.constant 0 : i32
    return %c0_i32, %c0_i32_0, %c0_i32_1, %c0_i32_2 : i32, i32, i32, i32
  }
  func.func @transform_4(%arg0: i32) -> (i32, i32) {
    %c0_i32 = arith.constant 0 : i32
    %c0_i32_0 = arith.constant 0 : i32
    %c0_i32_1 = arith.constant 0 : i32
    return %c0_i32, %c0_i32_0 : i32, i32
  }
  func.func @transform_5(%arg0: i32) -> (i32, i32, i32) {
    %c0_i32 = arith.constant 0 : i32
    %c0_i32_0 = arith.constant 0 : i32
    %c0_i32_1 = arith.constant 0 : i32
    %c0_i32_2 = arith.constant 0 : i32
    return %c0_i32, %c0_i32_0, %c0_i32_1 : i32, i32, i32
  }
  func.func @transform_6(%arg0: i32) -> (i32, i32) {
    %c0_i32 = arith.constant 0 : i32
    %c0_i32_0 = arith.constant 0 : i32
    %c0_i32_1 = arith.constant 0 : i32
    return %c0_i32, %c0_i32_0 : i32, i32
  }
  func.func @transform_7(%arg0: i32) -> (i32, i32) {
    %c0_i32 = arith.constant 0 : i32
    %c0_i32_0 = arith.constant 0 : i32
    %c0_i32_1 = arith.constant 0 : i32
    return %c0_i32, %c0_i32_0 : i32, i32
  }
  func.func @transform_8(%arg0: i32) -> (i32, i32) {
    %c0_i32 = arith.constant 0 : i32
    %c0_i32_0 = arith.constant 0 : i32
    %c0_i32_1 = arith.constant 0 : i32
    return %c0_i32, %c0_i32_0 : i32, i32
  }
  func.func @transform_9(%arg0: i32) -> (i32, i32, i32) {
    %c0_i32 = arith.constant 0 : i32
    %c0_i32_0 = arith.constant 0 : i32
    %c0_i32_1 = arith.constant 0 : i32
    return %arg0, %c0_i32, %c0_i32_0 : i32, i32, i32
  }
}

</mosaic_0001>

<llo_original>
// kernel: cnn_forward.1
$region0: #{cnn_forward.1}
  #allocation0 [shape = 'u32[]', space=smem, size = 0x4, offset = 0x4, fixed_abs, tag = 'smem constant byte address 0x4 - core index']
  #allocation1 [shape = 'u32[72,128]{1,0:T(1,128)}', space=vmem, size = 0x9000, scoped, tag = 'internal scratch']
  %s0 = inlined_call_operand.vmem [shape: f32[2,4,8,96], index: 0, kind: input, shape index: {}]
  %s1 = inlined_call_operand.vmem [shape: bf16[2,5,96,224], index: 1, kind: input, shape index: {}]
  %s2 = inlined_call_operand.vmem [shape: f32[1,224], index: 2, kind: input, shape index: {}]
  %s3 = inlined_call_operand.vmem [shape: bf16[2,3,224,128], index: 3, kind: input, shape index: {}]
  %s4 = inlined_call_operand.vmem [shape: f32[1,128], index: 4, kind: input, shape index: {}]
  %s5 = inlined_call_operand.vmem [shape: bf16[2,128,256], index: 5, kind: input, shape index: {}]
  %s6 = inlined_call_operand.vmem [shape: f32[1,256], index: 6, kind: input, shape index: {}]
  %s7 = inlined_call_operand.vmem [shape: bf16[256,128], index: 7, kind: input, shape index: {}]
  %s8 = inlined_call_operand.vmem [shape: f32[1,128], index: 8, kind: input, shape index: {}]
  %s9 = inlined_call_operand.vmem [shape: f32[2,8,128], index: 9, kind: output, shape index: {}]
  %s10 = sld [smem:[#allocation0]]
  $region69: #{cnn_forward.1} parent=0
    _
  %s12 = ssub.s32 1, %s10
  %s13 = scalar_select 0, %s12, %s10
  loop: start=0, step=1, limit=4
  $region2: #{cnn_forward.1} parent=0 // loop_pre_header
    _
  $region3: #{cnn_forward.1} parent=0 // loop_header
    %s15 = sphi 0, %s19
    %p16 = scmp.ge.s32.totalorder %s15, 4
    %s25 = sphi 0, %s27
    %s28 = sphi 0, %s25
    %s29 = sphi 0, %s28
    %s45 = sphi 0, %s29
    %s49 = sphi 0, %s49
    %s51 = sphi 0, %s49
    %s52 = sphi 0, %s51
    %s66 = sphi 0, %s52
    %s70 = sphi 0, %s70
    %s72 = sphi 0, %s70
    %s73 = sphi 0, %s72
    %s87 = sphi 0, %s73
    %s91 = sphi 0, %s91
    %s93 = sphi 0, %s91
    %s94 = sphi 0, %s93
    %s108 = sphi 0, %s94
    %s112 = sphi 0, %s112
    %s114 = sphi 0, %s112
    %s115 = sphi 0, %s114
    %s129 = sphi 0, %s115
    %s133 = sphi 0, %s133
    %s135 = sphi 0, %s133
    %s136 = sphi 0, %s135
    %s150 = sphi 0, %s136
    %s154 = sphi 0, %s154
    %s156 = sphi 0, %s154
    %s157 = sphi 0, %s156
    %s171 = sphi 0, %s157
    %s175 = sphi 0, %s175
    %s177 = sphi 0, %s175
    %s178 = sphi 0, %s177
    %s192 = sphi 0, %s178
    %s196 = sphi 0, %s196
    %s198 = sphi 0, %s196
    %s199 = sphi 0, %s198
    %s213 = sphi 0, %s199
    %s219 = sphi 0, %s221
    %s222 = sphi 0, %s219
    %s223 = sphi 0, %s222
    %s239 = sphi 0, %s223
  $region4: #{cnn_forward.1} parent=0 // loop_header_branch
    %18 = sbr.rel (%p16) target = $region8
  $region5: #{cnn_forward.1} parent=0 // loop_body
    %s20 = ssub.s32 %s15, 1
    %s21 = ssub.s32 %s15, 2
    %s22 = sadd.s32 %s15, 1
    %s23 = ssub.s32 %s15, %s22
    %p24 = scmp.eq.s32.totalorder %s23, 0
    %s26 = sadd.s32 %s25, 1
    %s27 = scalar_select %p24, %s25, %s26
    %p30 = pneg %p24
    %p31 = scmp.eq.s32.totalorder %s15, 1
    %p32 = por %p30, %p31
    %p33 = scmp.ne.s32.totalorder %s25, %s28
    %p34 = scmp.eq.s32.totalorder %s15, 0
    %p35 = por %p33, %p34
    %p36 = scmp.ne.s32.totalorder %s25, %s28
    %p37 = scmp.eq.s32.totalorder %s20, 1
    %p38 = por %p36, %p37
    %p39 = scmp.ne.s32.totalorder %s28, %s29
    %p40 = scmp.eq.s32.totalorder %s20, 0
    %p41 = por %p39, %p40
    %p42 = scmp.ne.s32.totalorder %s28, %s29
    %p43 = scmp.eq.s32.totalorder %s21, 1
    %p44 = por %p42, %p43
    %p46 = scmp.ne.s32.totalorder %s29, %s45
    %p47 = scmp.eq.s32.totalorder %s21, 0
    %p48 = por %p46, %p47
    %s50 = sadd.s32 %s49, 1
    %p53 = scmp.eq.s32.totalorder %s15, 1
    %p54 = scmp.ne.s32.totalorder %s49, %s51
    %p55 = scmp.eq.s32.totalorder %s15, 0
    %p56 = por %p54, %p55
    %p57 = scmp.ne.s32.totalorder %s49, %s51
    %p58 = scmp.eq.s32.totalorder %s20, 1
    %p59 = por %p57, %p58
    %p60 = scmp.ne.s32.totalorder %s51, %s52
    %p61 = scmp.eq.s32.totalorder %s20, 0
    %p62 = por %p60, %p61
    %p63 = scmp.ne.s32.totalorder %s51, %s52
    %p64 = scmp.eq.s32.totalorder %s21, 1
    %p65 = por %p63, %p64
    %p67 = scmp.ne.s32.totalorder %s52, %s66
    %p68 = scmp.eq.s32.totalorder %s21, 0
    %p69 = por %p67, %p68
    %s71 = sadd.s32 %s70, 1
    %p74 = scmp.eq.s32.totalorder %s15, 1
    %p75 = scmp.ne.s32.totalorder %s70, %s72
    %p76 = scmp.eq.s32.totalorder %s15, 0
    %p77 = por %p75, %p76
    %p78 = scmp.ne.s32.totalorder %s70, %s72
    %p79 = scmp.eq.s32.totalorder %s20, 1
    %p80 = por %p78, %p79
    %p81 = scmp.ne.s32.totalorder %s72, %s73
    %p82 = scmp.eq.s32.totalorder %s20, 0
    %p83 = por %p81, %p82
    %p84 = scmp.ne.s32.totalorder %s72, %s73
    %p85 = scmp.eq.s32.totalorder %s21, 1
    %p86 = por %p84, %p85
    %p88 = scmp.ne.s32.totalorder %s73, %s87
    %p89 = scmp.eq.s32.totalorder %s21, 0
    %p90 = por %p88, %p89
    %s92 = sadd.s32 %s91, 1
    %p95 = scmp.eq.s32.totalorder %s15, 1
    %p96 = scmp.ne.s32.totalorder %s91, %s93
    %p97 = scmp.eq.s32.totalorder %s15, 0
    %p98 = por %p96, %p97
    %p99 = scmp.ne.s32.totalorder %s91, %s93
    %p100 = scmp.eq.s32.totalorder %s20, 1
    %p101 = por %p99, %p100
    %p102 = scmp.ne.s32.totalorder %s93, %s94
    %p103 = scmp.eq.s32.totalorder %s20, 0
    %p104 = por %p102, %p103
    %p105 = scmp.ne.s32.totalorder %s93, %s94
    %p106 = scmp.eq.s32.totalorder %s21, 1
    %p107 = por %p105, %p106
    %p109 = scmp.ne.s32.totalorder %s94, %s108
    %p110 = scmp.eq.s32.totalorder %s21, 0
    %p111 = por %p109, %p110
    %s113 = sadd.s32 %s112, 1
    %p116 = scmp.eq.s32.totalorder %s15, 1
    %p117 = scmp.ne.s32.totalorder %s112, %s114
    %p118 = scmp.eq.s32.totalorder %s15, 0
    %p119 = por %p117, %p118
    %p120 = scmp.ne.s32.totalorder %s112, %s114
    %p121 = scmp.eq.s32.totalorder %s20, 1
    %p122 = por %p120, %p121
    %p123 = scmp.ne.s32.totalorder %s114, %s115
    %p124 = scmp.eq.s32.totalorder %s20, 0
    %p125 = por %p123, %p124
    %p126 = scmp.ne.s32.totalorder %s114, %s115
    %p127 = scmp.eq.s32.totalorder %s21, 1
    %p128 = por %p126, %p127
    %p130 = scmp.ne.s32.totalorder %s115, %s129
    %p131 = scmp.eq.s32.totalorder %s21, 0
    %p132 = por %p130, %p131
    %s134 = sadd.s32 %s133, 1
    %p137 = scmp.eq.s32.totalorder %s15, 1
    %p138 = scmp.ne.s32.totalorder %s133, %s135
    %p139 = scmp.eq.s32.totalorder %s15, 0
    %p140 = por %p138, %p139
    %p141 = scmp.ne.s32.totalorder %s133, %s135
    %p142 = scmp.eq.s32.totalorder %s20, 1
    %p143 = por %p141, %p142
    %p144 = scmp.ne.s32.totalorder %s135, %s136
    %p145 = scmp.eq.s32.totalorder %s20, 0
    %p146 = por %p144, %p145
    %p147 = scmp.ne.s32.totalorder %s135, %s136
    %p148 = scmp.eq.s32.totalorder %s21, 1
    %p149 = por %p147, %p148
    %p151 = scmp.ne.s32.totalorder %s136, %s150
    %p152 = scmp.eq.s32.totalorder %s21, 0
    %p153 = por %p151, %p152
    %s155 = sadd.s32 %s154, 1
    %p158 = scmp.eq.s32.totalorder %s15, 1
    %p159 = scmp.ne.s32.totalorder %s154, %s156
    %p160 = scmp.eq.s32.totalorder %s15, 0
    %p161 = por %p159, %p160
    %p162 = scmp.ne.s32.totalorder %s154, %s156
    %p163 = scmp.eq.s32.totalorder %s20, 1
    %p164 = por %p162, %p163
    %p165 = scmp.ne.s32.totalorder %s156, %s157
    %p166 = scmp.eq.s32.totalorder %s20, 0
    %p167 = por %p165, %p166
    %p168 = scmp.ne.s32.totalorder %s156, %s157
    %p169 = scmp.eq.s32.totalorder %s21, 1
    %p170 = por %p168, %p169
    %p172 = scmp.ne.s32.totalorder %s157, %s171
    %p173 = scmp.eq.s32.totalorder %s21, 0
    %p174 = por %p172, %p173
    %s176 = sadd.s32 %s175, 1
    %p179 = scmp.eq.s32.totalorder %s15, 1
    %p180 = scmp.ne.s32.totalorder %s175, %s177
    %p181 = scmp.eq.s32.totalorder %s15, 0
    %p182 = por %p180, %p181
    %p183 = scmp.ne.s32.totalorder %s175, %s177
    %p184 = scmp.eq.s32.totalorder %s20, 1
    %p185 = por %p183, %p184
    %p186 = scmp.ne.s32.totalorder %s177, %s178
    %p187 = scmp.eq.s32.totalorder %s20, 0
    %p188 = por %p186, %p187
    %p189 = scmp.ne.s32.totalorder %s177, %s178
    %p190 = scmp.eq.s32.totalorder %s21, 1
    %p191 = por %p189, %p190
    %p193 = scmp.ne.s32.totalorder %s178, %s192
    %p194 = scmp.eq.s32.totalorder %s21, 0
    %p195 = por %p193, %p194
    %s197 = sadd.s32 %s196, 1
    %p200 = scmp.eq.s32.totalorder %s15, 1
    %p201 = scmp.ne.s32.totalorder %s196, %s198
    %p202 = scmp.eq.s32.totalorder %s15, 0
    %p203 = por %p201, %p202
    %p204 = scmp.ne.s32.totalorder %s196, %s198
    %p205 = scmp.eq.s32.totalorder %s20, 1
    %p206 = por %p204, %p205
    %p207 = scmp.ne.s32.totalorder %s198, %s199
    %p208 = scmp.eq.s32.totalorder %s20, 0
    %p209 = por %p207, %p208
    %p210 = scmp.ne.s32.totalorder %s198, %s199
    %p211 = scmp.eq.s32.totalorder %s21, 1
    %p212 = por %p210, %p211
    %p214 = scmp.ne.s32.totalorder %s199, %s213
    %p215 = scmp.eq.s32.totalorder %s21, 0
    %p216 = por %p214, %p215
    %s217 = ssub.s32 %s15, %s22
    %p218 = scmp.eq.s32.totalorder %s217, 0
    %s220 = sadd.s32 %s219, 1
    %s221 = scalar_select %p218, %s219, %s220
    %p224 = pneg %p218
    %p225 = scmp.eq.s32.totalorder %s15, 1
    %p226 = por %p224, %p225
    %p227 = scmp.ne.s32.totalorder %s219, %s222
    %p228 = scmp.eq.s32.totalorder %s15, 0
    %p229 = por %p227, %p228
    %p230 = scmp.ne.s32.totalorder %s219, %s222
    %p231 = scmp.eq.s32.totalorder %s20, 1
    %p232 = por %p230, %p231
    %p233 = scmp.ne.s32.totalorder %s222, %s223
    %p234 = scmp.eq.s32.totalorder %s20, 0
    %p235 = por %p233, %p234
    %p236 = scmp.ne.s32.totalorder %s222, %s223
    %p237 = scmp.eq.s32.totalorder %s21, 1
    %p238 = por %p236, %p237
    %p240 = scmp.ne.s32.totalorder %s223, %s239
    %p241 = scmp.eq.s32.totalorder %s21, 0
    %p242 = por %p240, %p241
    %p243 = scmp.le.s32.totalorder 1, %s15
    %p244 = scmp.lt.s32.totalorder %s15, 3
    %p245 = pnand %p243, %p244
    %p246 = pneg %p245
    // Predicated region
    $region9: #{cnn_forward.1} parent=5 // pred_check
      _
    $region10: #{cnn_forward.1} parent=5 // pred_check_branch
      %248 = sbr.rel (%p245) target = $region12
    $region11: #{cnn_forward.1} parent=5 // pred_region
      %s249 = ssub.s32 %s15, 1
      // Predicated region
      $region13: #{cnn_forward.1} parent=11 // pred_check
        %p250 = pneg %p62
      $region14: #{cnn_forward.1} parent=11 // pred_check_branch
        %252 = sbr.rel (%p250) target = $region16
      $region15: #{cnn_forward.1} parent=11 // pred_region
        _
      $region16: #{cnn_forward.1} parent=11 // pred_fallthru
        _
      // Predicated region
      $region17: #{cnn_forward.1} parent=11 // pred_check
        %p253 = pneg %p83
      $region18: #{cnn_forward.1} parent=11 // pred_check_branch
        %255 = sbr.rel (%p253) target = $region20
      $region19: #{cnn_forward.1} parent=11 // pred_region
        _
      $region20: #{cnn_forward.1} parent=11 // pred_fallthru
        _
      // Predicated region
      $region21: #{cnn_forward.1} parent=11 // pred_check
        %p256 = pneg %p104
      $region22: #{cnn_forward.1} parent=11 // pred_check_branch
        %258 = sbr.rel (%p256) target = $region24
      $region23: #{cnn_forward.1} parent=11 // pred_region
        _
      $region24: #{cnn_forward.1} parent=11 // pred_fallthru
        _
      // Predicated region
      $region25: #{cnn_forward.1} parent=11 // pred_check
        %p259 = pneg %p125
      $region26: #{cnn_forward.1} parent=11 // pred_check_branch
        %261 = sbr.rel (%p259) target = $region28
      $region27: #{cnn_forward.1} parent=11 // pred_region
        _
      $region28: #{cnn_forward.1} parent=11 // pred_fallthru
        _
      // Predicated region
      $region29: #{cnn_forward.1} parent=11 // pred_check
        %p262 = pneg %p146
      $region30: #{cnn_forward.1} parent=11 // pred_check_branch
        %264 = sbr.rel (%p262) target = $region32
      $region31: #{cnn_forward.1} parent=11 // pred_region
        _
      $region32: #{cnn_forward.1} parent=11 // pred_fallthru
        _
      // Predicated region
      $region33: #{cnn_forward.1} parent=11 // pred_check
        %p265 = pneg %p167
      $region34: #{cnn_forward.1} parent=11 // pred_check_branch
        %267 = sbr.rel (%p265) target = $region36
      $region35: #{cnn_forward.1} parent=11 // pred_region
        _
      $region36: #{cnn_forward.1} parent=11 // pred_fallthru
        _
      // Predicated region
      $region37: #{cnn_forward.1} parent=11 // pred_check
        %p268 = pneg %p188
      $region38: #{cnn_forward.1} parent=11 // pred_check_branch
        %270 = sbr.rel (%p268) target = $region40
      $region39: #{cnn_forward.1} parent=11 // pred_region
        _
      $region40: #{cnn_forward.1} parent=11 // pred_fallthru
        _
      // Predicated region
      $region41: #{cnn_forward.1} parent=11 // pred_check
        %p271 = pneg %p209
      $region42: #{cnn_forward.1} parent=11 // pred_check_branch
        %273 = sbr.rel (%p271) target = $region44
      $region43: #{cnn_forward.1} parent=11 // pred_region
        _
      $region44: #{cnn_forward.1} parent=11 // pred_fallthru
        _
    $region12: #{cnn_forward.1} parent=5 // pred_fallthru
      _
    %p274 = scmp.lt.s32.totalorder %s15, 2
    // Predicated region
    $region45: #{cnn_forward.1} parent=5 // pred_check
      %p275 = pneg %p274
    $region46: #{cnn_forward.1} parent=5 // pred_check_branch
      %277 = sbr.rel (%p275) target = $region48
    $region47: #{cnn_forward.1} parent=5 // pred_region
      // Predicated region
      $region49: #{cnn_forward.1} parent=47 // pred_check
        %p278 = pneg %p35
      $region50: #{cnn_forward.1} parent=47 // pred_check_branch
        %280 = sbr.rel (%p278) target = $region52
      $region51: #{cnn_forward.1} parent=47 // pred_region
        %p281 = scmp.lt.s32.totalorder %s15, 1
        %s282 = scalar_select %p281, %s15, 1
        %s283 = smul.addr %s282, 4
        %s284 = smul.addr %s283, 8
        %s285 = scalar_lea.vmem %s0, %s284
      $region52: #{cnn_forward.1} parent=47 // pred_fallthru
        _
    $region48: #{cnn_forward.1} parent=5 // pred_fallthru
      _
    %p286 = scmp.le.s32.totalorder 1, %s15
    %p287 = scmp.lt.s32.totalorder %s15, 3
    %p288 = pnand %p286, %p287
    %p289 = pneg %p288
    // Predicated region
    $region53: #{cnn_forward.1} parent=5 // pred_check
      _
    $region54: #{cnn_forward.1} parent=5 // pred_check_branch
      %291 = sbr.rel (%p288) target = $region56
    $region55: #{cnn_forward.1} parent=5 // pred_region
      %s292 = ssub.s32 %s15, 1
      %p293 = scmp.lt.s32.totalorder %s20, 1
      %s294 = scalar_select %p293, %s20, 1
      %s295 = smul.addr %s294, 4
      %s296 = smul.addr %s295, 8
      %s297 = scalar_lea.vmem %s0, %s296
      %p298 = pneg %p41
      %p299 = pneg %p38
      %p300 = pneg %p62
      %p301 = pneg %p59
      %p302 = pneg %p83
      %p303 = pneg %p80
      %p304 = pneg %p104
      %p305 = pneg %p101
      %p306 = pneg %p125
      %p307 = pneg %p122
      %p308 = pneg %p146
      %p309 = pneg %p143
      %p310 = pneg %p167
      %p311 = pneg %p164
      %p312 = pneg %p188
      %p313 = pneg %p185
      %p314 = pneg %p209
      %p315 = pneg %p206
      %p316 = pneg %p235
      %p317 = pneg %p232
      %p318 = scmp.lt.s32.totalorder %s20, 1
      %s319 = scalar_select %p318, %s20, 1
      %s320 = smul.addr %s319, 8
      %s321 = scalar_lea.vmem %s9, %s320
      %p322 = scmp.lt.s32.totalorder %s20, 1
      %s323 = scalar_select %p322, %s20, 1
      %s324 = smul.addr %s323, 4
      %s325 = smul.addr %s324, 8
      %s326 = scalar_lea.vmem %s0, %s325
      %p327 = scmp.lt.s32.totalorder %s20, 1
      %s328 = scalar_select %p327, %s20, 1
      %s329 = smul.addr %s328, 8
      %s330 = scalar_lea.vmem %s9, %s329
      %v332 = vld [vmem:[%s326] sm:$0x7f]
      %v333 = vpack.c.bf16 %v332, %v332
      %v334 = vld [vmem:[%s1] sm:$0xff]
      %v335 = vld [vmem:[%s1 + $0x8] sm:$0xff]
      %v336 = vld [vmem:[%s1 + $0x10] sm:$0xff]
      %v337 = vld [vmem:[%s1 + $0x18] sm:$0xff]
      %v338 = vld [vmem:[%s1 + $0x20] sm:$0xff]
      %v339 = vld [vmem:[%s1 + $0x28] sm:$0xff]
      %v340 = vld [vmem:[%s1 + $0x30] sm:$0xff]
      %v341 = vld [vmem:[%s1 + $0x38] sm:$0xff]
      %v342 = vld [vmem:[%s1 + $0x40] sm:$0xff]
      %v343 = vld [vmem:[%s1 + $0x48] sm:$0xff]
      %v344 = vld [vmem:[%s1 + $0x50] sm:$0xff]
      %v345 = vld [vmem:[%s1 + $0x58] sm:$0xff]
      %s346 = scalar_lea.vmem %s1, 480
      %v347 = vld [vmem:[%s346] sm:$0xff]
      %v348 = vld [vmem:[%s346 + $0x8] sm:$0xff]
      %v349 = vld [vmem:[%s346 + $0x10] sm:$0xff]
      %v350 = vld [vmem:[%s346 + $0x18] sm:$0xff]
      %v351 = vld [vmem:[%s346 + $0x20] sm:$0xff]
      %v352 = vld [vmem:[%s346 + $0x28] sm:$0xff]
      %v353 = vld [vmem:[%s346 + $0x30] sm:$0xff]
      %v354 = vld [vmem:[%s346 + $0x38] sm:$0xff]
      %v355 = vld [vmem:[%s346 + $0x40] sm:$0xff]
      %v356 = vld [vmem:[%s346 + $0x48] sm:$0xff]
      %v357 = vld [vmem:[%s346 + $0x50] sm:$0xff]
      %v358 = vld [vmem:[%s346 + $0x58] sm:$0xff]
      %s359 = scalar_lea.vmem %s326, 8
      %v360 = vld [vmem:[%s359] sm:$0x7f]
      %v361 = vpack.c.bf16 %v360, %v360
      %s362 = scalar_lea.vmem %s1, 96
      %v363 = vld [vmem:[%s362] sm:$0xff]
      %v364 = vld [vmem:[%s362 + $0x8] sm:$0xff]
      %v365 = vld [vmem:[%s362 + $0x10] sm:$0xff]
      %v366 = vld [vmem:[%s362 + $0x18] sm:$0xff]
      %v367 = vld [vmem:[%s362 + $0x20] sm:$0xff]
      %v368 = vld [vmem:[%s362 + $0x28] sm:$0xff]
      %v369 = vld [vmem:[%s362 + $0x30] sm:$0xff]
      %v370 = vld [vmem:[%s362 + $0x38] sm:$0xff]
      %v371 = vld [vmem:[%s362 + $0x40] sm:$0xff]
      %v372 = vld [vmem:[%s362 + $0x48] sm:$0xff]
      %v373 = vld [vmem:[%s362 + $0x50] sm:$0xff]
      %v374 = vld [vmem:[%s362 + $0x58] sm:$0xff]
      %v387 = vunpack.c.l.b16 %v363
      %v388 = vunpack.c.h.b16 %v363
      %v389 = vunpack.c.l.b16 %v364
      %v390 = vunpack.c.h.b16 %v364
      %v391 = vunpack.c.l.b16 %v365
      %v392 = vunpack.c.h.b16 %v365
      %v393 = vunpack.c.l.b16 %v366
      %v394 = vunpack.c.h.b16 %v366
      %v395 = vunpack.c.l.b16 %v367
      %v396 = vunpack.c.h.b16 %v367
      %v397 = vunpack.c.l.b16 %v368
      %v398 = vunpack.c.h.b16 %v368
      %v399 = vunpack.c.l.b16 %v369
      %v400 = vunpack.c.h.b16 %v369
      %v401 = vunpack.c.l.b16 %v370
      %v402 = vunpack.c.h.b16 %v370
      %v403 = vunpack.c.l.b16 %v371
      %v404 = vunpack.c.h.b16 %v371
      %v405 = vunpack.c.l.b16 %v372
      %v406 = vunpack.c.h.b16 %v372
      %v407 = vunpack.c.l.b16 %v373
      %v408 = vunpack.c.h.b16 %v373
      %v409 = vunpack.c.l.b16 %v374
      %v410 = vunpack.c.h.b16 %v374
      %v411 = vpack.c.b16 %v389, %v387
      %v412 = vpack.c.b16 %v390, %v388
      %v413 = vpack.c.b16 %v393, %v391
      %v414 = vpack.c.b16 %v394, %v392
      %v415 = vpack.c.b16 %v397, %v395
      %v416 = vpack.c.b16 %v398, %v396
      %v417 = vpack.c.b16 %v401, %v399
      %v418 = vpack.c.b16 %v402, %v400
      %v419 = vpack.c.b16 %v405, %v403
      %v420 = vpack.c.b16 %v406, %v404
      %v421 = vpack.c.b16 %v409, %v407
      %v422 = vpack.c.b16 %v410, %v408
      %vm435 = vcmask 785408
      %v437 = vsel %vm435, %v361, 0
      %439 = vmatpush.bf16.msra.mxu0 0
      %440 = vmatpush.bf16.msra.mxu0 0
      %441 = vmatpush.bf16.msra.mxu0 %v421
      %442 = vmatpush.bf16.msra.mxu0 %v419
      %443 = vmatpush.bf16.msra.mxu0 %v417
      %444 = vmatpush.bf16.msra.mxu0 %v415
      %445 = vmatpush.bf16.msra.mxu0 %v413
      %446 = vmatpush.bf16.msra.mxu0 %v411
      %447 = vmatmul.bf16.gmra.mxu0 %v437
      %v448 = vpop.f32.mrf.mxu0
      %v449 = vadd.f32 0.0, %v448
      %v450 = vpop.f32.mrf.mxu0
      %451 = vdwg.mxu0
      %452 = vmatpush.bf16.msra.mxu0 0
      %453 = vmatpush.bf16.msra.mxu0 0
      %454 = vmatpush.bf16.msra.mxu0 %v422
      %455 = vmatpush.bf16.msra.mxu0 %v420
      %456 = vmatpush.bf16.msra.mxu0 %v418
      %457 = vmatpush.bf16.msra.mxu0 %v416
      %458 = vmatpush.bf16.msra.mxu0 %v414
      %459 = vmatpush.bf16.msra.mxu0 %v412
      %460 = vmatmul.bf16.gmra.mxu0 %v437
      %v461 = vpop.f32.mrf.mxu0
      %v462 = vadd.f32 0.0, %v461
      %v463 = vpop.f32.mrf.mxu0
      %464 = vdwg.mxu0
      %v477 = vunpack.c.l.b16 %v334
      %v478 = vunpack.c.h.b16 %v334
      %v479 = vunpack.c.l.b16 %v335
      %v480 = vunpack.c.h.b16 %v335
      %v481 = vunpack.c.l.b16 %v336
      %v482 = vunpack.c.h.b16 %v336
      %v483 = vunpack.c.l.b16 %v337
      %v484 = vunpack.c.h.b16 %v337
      %v485 = vunpack.c.l.b16 %v338
      %v486 = vunpack.c.h.b16 %v338
      %v487 = vunpack.c.l.b16 %v339
      %v488 = vunpack.c.h.b16 %v339
      %v489 = vunpack.c.l.b16 %v340
      %v490 = vunpack.c.h.b16 %v340
      %v491 = vunpack.c.l.b16 %v341
      %v492 = vunpack.c.h.b16 %v341
      %v493 = vunpack.c.l.b16 %v342
      %v494 = vunpack.c.h.b16 %v342
      %v495 = vunpack.c.l.b16 %v343
      %v496 = vunpack.c.h.b16 %v343
      %v497 = vunpack.c.l.b16 %v344
      %v498 = vunpack.c.h.b16 %v344
      %v499 = vunpack.c.l.b16 %v345
      %v500 = vunpack.c.h.b16 %v345
      %v501 = vpack.c.b16 %v479, %v477
      %v502 = vpack.c.b16 %v480, %v478
      %v503 = vpack.c.b16 %v483, %v481
      %v504 = vpack.c.b16 %v484, %v482
      %v505 = vpack.c.b16 %v487, %v485
      %v506 = vpack.c.b16 %v488, %v486
      %v507 = vpack.c.b16 %v491, %v489
      %v508 = vpack.c.b16 %v492, %v490
      %v509 = vpack.c.b16 %v495, %v493
      %v510 = vpack.c.b16 %v496, %v494
      %v511 = vpack.c.b16 %v499, %v497
      %v512 = vpack.c.b16 %v500, %v498
      %v526 = vsel %vm435, %v333, 0
      %528 = vmatpush.bf16.msra.mxu0 0
      %529 = vmatpush.bf16.msra.mxu0 0
      %530 = vmatpush.bf16.msra.mxu0 %v511
      %531 = vmatpush.bf16.msra.mxu0 %v509
      %532 = vmatpush.bf16.msra.mxu0 %v507
      %533 = vmatpush.bf16.msra.mxu0 %v505
      %534 = vmatpush.bf16.msra.mxu0 %v503
      %535 = vmatpush.bf16.msra.mxu0 %v501
      %536 = vmatmul.bf16.gmra.mxu0 %v526
      %v537 = vpop.f32.mrf.mxu0
      %v538 = vadd.f32 %v449, %v537
      %v539 = vpop.f32.mrf.mxu0
      %540 = vdwg.mxu0
      %541 = vmatpush.bf16.msra.mxu0 0
      %542 = vmatpush.bf16.msra.mxu0 0
      %543 = vmatpush.bf16.msra.mxu0 %v512
      %544 = vmatpush.bf16.msra.mxu0 %v510
      %545 = vmatpush.bf16.msra.mxu0 %v508
      %546 = vmatpush.bf16.msra.mxu0 %v506
      %547 = vmatpush.bf16.msra.mxu0 %v504
      %548 = vmatpush.bf16.msra.mxu0 %v502
      %549 = vmatmul.bf16.gmra.mxu0 %v526
      %v550 = vpop.f32.mrf.mxu0
      %v551 = vadd.f32 %v462, %v550
      %v552 = vpop.f32.mrf.mxu0
      %553 = vdwg.mxu0
      %s554 = scalar_lea.vmem %s1, 576
      %v555 = vld [vmem:[%s554] sm:$0xff]
      %v556 = vld [vmem:[%s554 + $0x8] sm:$0xff]
      %v557 = vld [vmem:[%s554 + $0x10] sm:$0xff]
      %v558 = vld [vmem:[%s554 + $0x18] sm:$0xff]
      %v559 = vld [vmem:[%s554 + $0x20] sm:$0xff]
      %v560 = vld [vmem:[%s554 + $0x28] sm:$0xff]
      %v561 = vld [vmem:[%s554 + $0x30] sm:$0xff]
      %v562 = vld [vmem:[%s554 + $0x38] sm:$0xff]
      %v563 = vld [vmem:[%s554 + $0x40] sm:$0xff]
      %v564 = vld [vmem:[%s554 + $0x48] sm:$0xff]
      %v565 = vld [vmem:[%s554 + $0x50] sm:$0xff]
      %v566 = vld [vmem:[%s554 + $0x58] sm:$0xff]
      %v579 = vunpack.c.l.b16 %v555
      %v580 = vunpack.c.h.b16 %v555
      %v581 = vunpack.c.l.b16 %v556
      %v582 = vunpack.c.h.b16 %v556
      %v583 = vunpack.c.l.b16 %v557
      %v584 = vunpack.c.h.b16 %v557
      %v585 = vunpack.c.l.b16 %v558
      %v586 = vunpack.c.h.b16 %v558
      %v587 = vunpack.c.l.b16 %v559
      %v588 = vunpack.c.h.b16 %v559
      %v589 = vunpack.c.l.b16 %v560
      %v590 = vunpack.c.h.b16 %v560
      %v591 = vunpack.c.l.b16 %v561
      %v592 = vunpack.c.h.b16 %v561
      %v593 = vunpack.c.l.b16 %v562
      %v594 = vunpack.c.h.b16 %v562
      %v595 = vunpack.c.l.b16 %v563
      %v596 = vunpack.c.h.b16 %v563
      %v597 = vunpack.c.l.b16 %v564
      %v598 = vunpack.c.h.b16 %v564
      %v599 = vunpack.c.l.b16 %v565
      %v600 = vunpack.c.h.b16 %v565
      %v601 = vunpack.c.l.b16 %v566
      %v602 = vunpack.c.h.b16 %v566
      %v603 = vpack.c.b16 %v581, %v579
      %v604 = vpack.c.b16 %v582, %v580
      %v605 = vpack.c.b16 %v585, %v583
      %v606 = vpack.c.b16 %v586, %v584
      %v607 = vpack.c.b16 %v589, %v587
      %v608 = vpack.c.b16 %v590, %v588
      %v609 = vpack.c.b16 %v593, %v591
      %v610 = vpack.c.b16 %v594, %v592
      %v611 = vpack.c.b16 %v597, %v595
      %v612 = vpack.c.b16 %v598, %v596
      %v613 = vpack.c.b16 %v601, %v599
      %v614 = vpack.c.b16 %v602, %v600
      %627 = vmatpush.bf16.msra.mxu0 0
      %628 = vmatpush.bf16.msra.mxu0 0
      %629 = vmatpush.bf16.msra.mxu0 %v613
      %630 = vmatpush.bf16.msra.mxu0 %v611
      %631 = vmatpush.bf16.msra.mxu0 %v609
      %632 = vmatpush.bf16.msra.mxu0 %v607
      %633 = vmatpush.bf16.msra.mxu0 %v605
      %634 = vmatpush.bf16.msra.mxu0 %v603
      %635 = vmatmul.bf16.gmra.mxu0 %v437
      %v636 = vpop.f32.mrf.mxu0
      %v637 = vadd.f32 0.0, %v636
      %v638 = vpop.f32.mrf.mxu0
      %639 = vdwg.mxu0
      %640 = vmatpush.bf16.msra.mxu0 0
      %641 = vmatpush.bf16.msra.mxu0 0
      %642 = vmatpush.bf16.msra.mxu0 %v614
      %643 = vmatpush.bf16.msra.mxu0 %v612
      %644 = vmatpush.bf16.msra.mxu0 %v610
      %645 = vmatpush.bf16.msra.mxu0 %v608
      %646 = vmatpush.bf16.msra.mxu0 %v606
      %647 = vmatpush.bf16.msra.mxu0 %v604
      %648 = vmatmul.bf16.gmra.mxu0 %v437
      %v649 = vpop.f32.mrf.mxu0
      %v650 = vadd.f32 0.0, %v649
      %v651 = vpop.f32.mrf.mxu0
      %652 = vdwg.mxu0
      %v665 = vunpack.c.l.b16 %v347
      %v666 = vunpack.c.h.b16 %v347
      %v667 = vunpack.c.l.b16 %v348
      %v668 = vunpack.c.h.b16 %v348
      %v669 = vunpack.c.l.b16 %v349
      %v670 = vunpack.c.h.b16 %v349
      %v671 = vunpack.c.l.b16 %v350
      %v672 = vunpack.c.h.b16 %v350
      %v673 = vunpack.c.l.b16 %v351
      %v674 = vunpack.c.h.b16 %v351
      %v675 = vunpack.c.l.b16 %v352
      %v676 = vunpack.c.h.b16 %v352
      %v677 = vunpack.c.l.b16 %v353
      %v678 = vunpack.c.h.b16 %v353
      %v679 = vunpack.c.l.b16 %v354
      %v680 = vunpack.c.h.b16 %v354
      %v681 = vunpack.c.l.b16 %v355
      %v682 = vunpack.c.h.b16 %v355
      %v683 = vunpack.c.l.b16 %v356
      %v684 = vunpack.c.h.b16 %v356
      %v685 = vunpack.c.l.b16 %v357
      %v686 = vunpack.c.h.b16 %v357
      %v687 = vunpack.c.l.b16 %v358
      %v688 = vunpack.c.h.b16 %v358
      %v689 = vpack.c.b16 %v667, %v665
      %v690 = vpack.c.b16 %v668, %v666
      %v691 = vpack.c.b16 %v671, %v669
      %v692 = vpack.c.b16 %v672, %v670
      %v693 = vpack.c.b16 %v675, %v673
      %v694 = vpack.c.b16 %v676, %v674
      %v695 = vpack.c.b16 %v679, %v677
      %v696 = vpack.c.b16 %v680, %v678
      %v697 = vpack.c.b16 %v683, %v681
      %v698 = vpack.c.b16 %v684, %v682
      %v699 = vpack.c.b16 %v687, %v685
      %v700 = vpack.c.b16 %v688, %v686
      %713 = vmatpush.bf16.msra.mxu0 0
      %714 = vmatpush.bf16.msra.mxu0 0
      %715 = vmatpush.bf16.msra.mxu0 %v699
      %716 = vmatpush.bf16.msra.mxu0 %v697
      %717 = vmatpush.bf16.msra.mxu0 %v695
      %718 = vmatpush.bf16.msra.mxu0 %v693
      %719 = vmatpush.bf16.msra.mxu0 %v691
      %720 = vmatpush.bf16.msra.mxu0 %v689
      %721 = vmatmul.bf16.gmra.mxu0 %v526
      %v722 = vpop.f32.mrf.mxu0
      %v723 = vadd.f32 %v637, %v722
      %v724 = vpop.f32.mrf.mxu0
      %725 = vdwg.mxu0
      %726 = vmatpush.bf16.msra.mxu0 0
      %727 = vmatpush.bf16.msra.mxu0 0
      %728 = vmatpush.bf16.msra.mxu0 %v700
      %729 = vmatpush.bf16.msra.mxu0 %v698
      %730 = vmatpush.bf16.msra.mxu0 %v696
      %731 = vmatpush.bf16.msra.mxu0 %v694
      %732 = vmatpush.bf16.msra.mxu0 %v692
      %733 = vmatpush.bf16.msra.mxu0 %v690
      %734 = vmatmul.bf16.gmra.mxu0 %v526
      %v735 = vpop.f32.mrf.mxu0
      %v736 = vadd.f32 %v650, %v735
      %v737 = vpop.f32.mrf.mxu0
      %738 = vdwg.mxu0
      %s739 = scalar_lea.vmem %s326, 16
      %v740 = vld [vmem:[%s739] sm:$0x7f]
      %v741 = vpack.c.bf16 %v740, %v740
      %s742 = scalar_lea.vmem %s1, 192
      %v743 = vld [vmem:[%s742] sm:$0xff]
      %v744 = vld [vmem:[%s742 + $0x8] sm:$0xff]
      %v745 = vld [vmem:[%s742 + $0x10] sm:$0xff]
      %v746 = vld [vmem:[%s742 + $0x18] sm:$0xff]
      %v747 = vld [vmem:[%s742 + $0x20] sm:$0xff]
      %v748 = vld [vmem:[%s742 + $0x28] sm:$0xff]
      %v749 = vld [vmem:[%s742 + $0x30] sm:$0xff]
      %v750 = vld [vmem:[%s742 + $0x38] sm:$0xff]
      %v751 = vld [vmem:[%s742 + $0x40] sm:$0xff]
      %v752 = vld [vmem:[%s742 + $0x48] sm:$0xff]
      %v753 = vld [vmem:[%s742 + $0x50] sm:$0xff]
      %v754 = vld [vmem:[%s742 + $0x58] sm:$0xff]
      %v767 = vunpack.c.l.b16 %v743
      %v768 = vunpack.c.h.b16 %v743
      %v769 = vunpack.c.l.b16 %v744
      %v770 = vunpack.c.h.b16 %v744
      %v771 = vunpack.c.l.b16 %v745
      %v772 = vunpack.c.h.b16 %v745
      %v773 = vunpack.c.l.b16 %v746
      %v774 = vunpack.c.h.b16 %v746
      %v775 = vunpack.c.l.b16 %v747
      %v776 = vunpack.c.h.b16 %v747
      %v777 = vunpack.c.l.b16 %v748
      %v778 = vunpack.c.h.b16 %v748
      %v779 = vunpack.c.l.b16 %v749
      %v780 = vunpack.c.h.b16 %v749
      %v781 = vunpack.c.l.b16 %v750
      %v782 = vunpack.c.h.b16 %v750
      %v783 = vunpack.c.l.b16 %v751
      %v784 = vunpack.c.h.b16 %v751
      %v785 = vunpack.c.l.b16 %v752
      %v786 = vunpack.c.h.b16 %v752
      %v787 = vunpack.c.l.b16 %v753
      %v788 = vunpack.c.h.b16 %v753
      %v789 = vunpack.c.l.b16 %v754
      %v790 = vunpack.c.h.b16 %v754
      %v791 = vpack.c.b16 %v769, %v767
      %v792 = vpack.c.b16 %v770, %v768
      %v793 = vpack.c.b16 %v773, %v771
      %v794 = vpack.c.b16 %v774, %v772
      %v795 = vpack.c.b16 %v777, %v775
      %v796 = vpack.c.b16 %v778, %v776
      %v797 = vpack.c.b16 %v781, %v779
      %v798 = vpack.c.b16 %v782, %v780
      %v799 = vpack.c.b16 %v785, %v783
      %v800 = vpack.c.b16 %v786, %v784
      %v801 = vpack.c.b16 %v789, %v787
      %v802 = vpack.c.b16 %v790, %v788
      %v816 = vsel %vm435, %v741, 0
      %818 = vmatpush.bf16.msra.mxu0 0
      %819 = vmatpush.bf16.msra.mxu0 0
      %820 = vmatpush.bf16.msra.mxu0 %v801
      %821 = vmatpush.bf16.msra.mxu0 %v799
      %822 = vmatpush.bf16.msra.mxu0 %v797
      %823 = vmatpush.bf16.msra.mxu0 %v795
      %824 = vmatpush.bf16.msra.mxu0 %v793
      %825 = vmatpush.bf16.msra.mxu0 %v791
      %826 = vmatmul.bf16.gmra.mxu0 %v816
      %v827 = vpop.f32.mrf.mxu0
      %v828 = vadd.f32 0.0, %v827
      %v829 = vpop.f32.mrf.mxu0
      %830 = vdwg.mxu0
      %831 = vmatpush.bf16.msra.mxu0 0
      %832 = vmatpush.bf16.msra.mxu0 0
      %833 = vmatpush.bf16.msra.mxu0 %v802
      %834 = vmatpush.bf16.msra.mxu0 %v800
      %835 = vmatpush.bf16.msra.mxu0 %v798
      %836 = vmatpush.bf16.msra.mxu0 %v796
      %837 = vmatpush.bf16.msra.mxu0 %v794
      %838 = vmatpush.bf16.msra.mxu0 %v792
      %839 = vmatmul.bf16.gmra.mxu0 %v816
      %v840 = vpop.f32.mrf.mxu0
      %v841 = vadd.f32 0.0, %v840
      %v842 = vpop.f32.mrf.mxu0
      %843 = vdwg.mxu0
      %v844 = vadd.f32 %v538, %v828
      %v845 = vadd.f32 %v551, %v841
      %s846 = scalar_lea.vmem %s1, 672
      %v847 = vld [vmem:[%s846] sm:$0xff]
      %v848 = vld [vmem:[%s846 + $0x8] sm:$0xff]
      %v849 = vld [vmem:[%s846 + $0x10] sm:$0xff]
      %v850 = vld [vmem:[%s846 + $0x18] sm:$0xff]
      %v851 = vld [vmem:[%s846 + $0x20] sm:$0xff]
      %v852 = vld [vmem:[%s846 + $0x28] sm:$0xff]
      %v853 = vld [vmem:[%s846 + $0x30] sm:$0xff]
      %v854 = vld [vmem:[%s846 + $0x38] sm:$0xff]
      %v855 = vld [vmem:[%s846 + $0x40] sm:$0xff]
      %v856 = vld [vmem:[%s846 + $0x48] sm:$0xff]
      %v857 = vld [vmem:[%s846 + $0x50] sm:$0xff]
      %v858 = vld [vmem:[%s846 + $0x58] sm:$0xff]
      %v871 = vunpack.c.l.b16 %v847
      %v872 = vunpack.c.h.b16 %v847
      %v873 = vunpack.c.l.b16 %v848
      %v874 = vunpack.c.h.b16 %v848
      %v875 = vunpack.c.l.b16 %v849
      %v876 = vunpack.c.h.b16 %v849
      %v877 = vunpack.c.l.b16 %v850
      %v878 = vunpack.c.h.b16 %v850
      %v879 = vunpack.c.l.b16 %v851
      %v880 = vunpack.c.h.b16 %v851
      %v881 = vunpack.c.l.b16 %v852
      %v882 = vunpack.c.h.b16 %v852
      %v883 = vunpack.c.l.b16 %v853
      %v884 = vunpack.c.h.b16 %v853
      %v885 = vunpack.c.l.b16 %v854
      %v886 = vunpack.c.h.b16 %v854
      %v887 = vunpack.c.l.b16 %v855
      %v888 = vunpack.c.h.b16 %v855
      %v889 = vunpack.c.l.b16 %v856
      %v890 = vunpack.c.h.b16 %v856
      %v891 = vunpack.c.l.b16 %v857
      %v892 = vunpack.c.h.b16 %v857
      %v893 = vunpack.c.l.b16 %v858
      %v894 = vunpack.c.h.b16 %v858
      %v895 = vpack.c.b16 %v873, %v871
      %v896 = vpack.c.b16 %v874, %v872
      %v897 = vpack.c.b16 %v877, %v875
      %v898 = vpack.c.b16 %v878, %v876
      %v899 = vpack.c.b16 %v881, %v879
      %v900 = vpack.c.b16 %v882, %v880
      %v901 = vpack.c.b16 %v885, %v883
      %v902 = vpack.c.b16 %v886, %v884
      %v903 = vpack.c.b16 %v889, %v887
      %v904 = vpack.c.b16 %v890, %v888
      %v905 = vpack.c.b16 %v893, %v891
      %v906 = vpack.c.b16 %v894, %v892
      %919 = vmatpush.bf16.msra.mxu0 0
      %920 = vmatpush.bf16.msra.mxu0 0
      %921 = vmatpush.bf16.msra.mxu0 %v905
      %922 = vmatpush.bf16.msra.mxu0 %v903
      %923 = vmatpush.bf16.msra.mxu0 %v901
      %924 = vmatpush.bf16.msra.mxu0 %v899
      %925 = vmatpush.bf16.msra.mxu0 %v897
      %926 = vmatpush.bf16.msra.mxu0 %v895
      %927 = vmatmul.bf16.gmra.mxu0 %v816
      %v928 = vpop.f32.mrf.mxu0
      %v929 = vadd.f32 0.0, %v928
      %v930 = vpop.f32.mrf.mxu0
      %931 = vdwg.mxu0
      %932 = vmatpush.bf16.msra.mxu0 0
      %933 = vmatpush.bf16.msra.mxu0 0
      %934 = vmatpush.bf16.msra.mxu0 %v906
      %935 = vmatpush.bf16.msra.mxu0 %v904
      %936 = vmatpush.bf16.msra.mxu0 %v902
      %937 = vmatpush.bf16.msra.mxu0 %v900
      %938 = vmatpush.bf16.msra.mxu0 %v898
      %939 = vmatpush.bf16.msra.mxu0 %v896
      %940 = vmatmul.bf16.gmra.mxu0 %v816
      %v941 = vpop.f32.mrf.mxu0
      %v942 = vadd.f32 0.0, %v941
      %v943 = vpop.f32.mrf.mxu0
      %944 = vdwg.mxu0
      %v945 = vadd.f32 %v723, %v929
      %v946 = vadd.f32 %v736, %v942
      %s947 = scalar_lea.vmem %s326, 24
      %v948 = vld [vmem:[%s947] sm:$0x7f]
      %v949 = vpack.c.bf16 %v948, %v948
      %s950 = scalar_lea.vmem %s1, 288
      %v951 = vld [vmem:[%s950] sm:$0xff]
      %v952 = vld [vmem:[%s950 + $0x8] sm:$0xff]
      %v953 = vld [vmem:[%s950 + $0x10] sm:$0xff]
      %v954 = vld [vmem:[%s950 + $0x18] sm:$0xff]
      %v955 = vld [vmem:[%s950 + $0x20] sm:$0xff]
      %v956 = vld [vmem:[%s950 + $0x28] sm:$0xff]
      %v957 = vld [vmem:[%s950 + $0x30] sm:$0xff]
      %v958 = vld [vmem:[%s950 + $0x38] sm:$0xff]
      %v959 = vld [vmem:[%s950 + $0x40] sm:$0xff]
      %v960 = vld [vmem:[%s950 + $0x48] sm:$0xff]
      %v961 = vld [vmem:[%s950 + $0x50] sm:$0xff]
      %v962 = vld [vmem:[%s950 + $0x58] sm:$0xff]
      %v975 = vunpack.c.l.b16 %v951
      %v976 = vunpack.c.h.b16 %v951
      %v977 = vunpack.c.l.b16 %v952
      %v978 = vunpack.c.h.b16 %v952
      %v979 = vunpack.c.l.b16 %v953
      %v980 = vunpack.c.h.b16 %v953
      %v981 = vunpack.c.l.b16 %v954
      %v982 = vunpack.c.h.b16 %v954
      %v983 = vunpack.c.l.b16 %v955
      %v984 = vunpack.c.h.b16 %v955
      %v985 = vunpack.c.l.b16 %v956
      %v986 = vunpack.c.h.b16 %v956
      %v987 = vunpack.c.l.b16 %v957
      %v988 = vunpack.c.h.b16 %v957
      %v989 = vunpack.c.l.b16 %v958
      %v990 = vunpack.c.h.b16 %v958
      %v991 = vunpack.c.l.b16 %v959
      %v992 = vunpack.c.h.b16 %v959
      %v993 = vunpack.c.l.b16 %v960
      %v994 = vunpack.c.h.b16 %v960
      %v995 = vunpack.c.l.b16 %v961
      %v996 = vunpack.c.h.b16 %v961
      %v997 = vunpack.c.l.b16 %v962
      %v998 = vunpack.c.h.b16 %v962
      %v999 = vpack.c.b16 %v977, %v975
      %v1000 = vpack.c.b16 %v978, %v976
      %v1001 = vpack.c.b16 %v981, %v979
      %v1002 = vpack.c.b16 %v982, %v980
      %v1003 = vpack.c.b16 %v985, %v983
      %v1004 = vpack.c.b16 %v986, %v984
      %v1005 = vpack.c.b16 %v989, %v987
      %v1006 = vpack.c.b16 %v990, %v988
      %v1007 = vpack.c.b16 %v993, %v991
      %v1008 = vpack.c.b16 %v994, %v992
      %v1009 = vpack.c.b16 %v997, %v995
      %v1010 = vpack.c.b16 %v998, %v996
      %v1024 = vsel %vm435, %v949, 0
      %1026 = vmatpush.bf16.msra.mxu0 0
      %1027 = vmatpush.bf16.msra.mxu0 0
      %1028 = vmatpush.bf16.msra.mxu0 %v1009
      %1029 = vmatpush.bf16.msra.mxu0 %v1007
      %1030 = vmatpush.bf16.msra.mxu0 %v1005
      %1031 = vmatpush.bf16.msra.mxu0 %v1003
      %1032 = vmatpush.bf16.msra.mxu0 %v1001
      %1033 = vmatpush.bf16.msra.mxu0 %v999
      %1034 = vmatmul.bf16.gmra.mxu0 %v1024
      %v1035 = vpop.f32.mrf.mxu0
      %v1036 = vadd.f32 0.0, %v1035
      %v1037 = vpop.f32.mrf.mxu0
      %1038 = vdwg.mxu0
      %1039 = vmatpush.bf16.msra.mxu0 0
      %1040 = vmatpush.bf16.msra.mxu0 0
      %1041 = vmatpush.bf16.msra.mxu0 %v1010
      %1042 = vmatpush.bf16.msra.mxu0 %v1008
      %1043 = vmatpush.bf16.msra.mxu0 %v1006
      %1044 = vmatpush.bf16.msra.mxu0 %v1004
      %1045 = vmatpush.bf16.msra.mxu0 %v1002
      %1046 = vmatpush.bf16.msra.mxu0 %v1000
      %1047 = vmatmul.bf16.gmra.mxu0 %v1024
      %v1048 = vpop.f32.mrf.mxu0
      %v1049 = vadd.f32 0.0, %v1048
      %v1050 = vpop.f32.mrf.mxu0
      %1051 = vdwg.mxu0
      %v1052 = vadd.f32 %v844, %v1036
      %v1053 = vadd.f32 %v845, %v1049
      %s1054 = scalar_lea.vmem %s1, 768
      %v1055 = vld [vmem:[%s1054] sm:$0xff]
      %v1056 = vld [vmem:[%s1054 + $0x8] sm:$0xff]
      %v1057 = vld [vmem:[%s1054 + $0x10] sm:$0xff]
      %v1058 = vld [vmem:[%s1054 + $0x18] sm:$0xff]
      %v1059 = vld [vmem:[%s1054 + $0x20] sm:$0xff]
      %v1060 = vld [vmem:[%s1054 + $0x28] sm:$0xff]
      %v1061 = vld [vmem:[%s1054 + $0x30] sm:$0xff]
      %v1062 = vld [vmem:[%s1054 + $0x38] sm:$0xff]
      %v1063 = vld [vmem:[%s1054 + $0x40] sm:$0xff]
      %v1064 = vld [vmem:[%s1054 + $0x48] sm:$0xff]
      %v1065 = vld [vmem:[%s1054 + $0x50] sm:$0xff]
      %v1066 = vld [vmem:[%s1054 + $0x58] sm:$0xff]
      %v1079 = vunpack.c.l.b16 %v1055
      %v1080 = vunpack.c.h.b16 %v1055
      %v1081 = vunpack.c.l.b16 %v1056
      %v1082 = vunpack.c.h.b16 %v1056
      %v1083 = vunpack.c.l.b16 %v1057
      %v1084 = vunpack.c.h.b16 %v1057
      %v1085 = vunpack.c.l.b16 %v1058
      %v1086 = vunpack.c.h.b16 %v1058
      %v1087 = vunpack.c.l.b16 %v1059
      %v1088 = vunpack.c.h.b16 %v1059
      %v1089 = vunpack.c.l.b16 %v1060
      %v1090 = vunpack.c.h.b16 %v1060
      %v1091 = vunpack.c.l.b16 %v1061
      %v1092 = vunpack.c.h.b16 %v1061
      %v1093 = vunpack.c.l.b16 %v1062
      %v1094 = vunpack.c.h.b16 %v1062
      %v1095 = vunpack.c.l.b16 %v1063
      %v1096 = vunpack.c.h.b16 %v1063
      %v1097 = vunpack.c.l.b16 %v1064
      %v1098 = vunpack.c.h.b16 %v1064
      %v1099 = vunpack.c.l.b16 %v1065
      %v1100 = vunpack.c.h.b16 %v1065
      %v1101 = vunpack.c.l.b16 %v1066
      %v1102 = vunpack.c.h.b16 %v1066
      %v1103 = vpack.c.b16 %v1081, %v1079
      %v1104 = vpack.c.b16 %v1082, %v1080
      %v1105 = vpack.c.b16 %v1085, %v1083
      %v1106 = vpack.c.b16 %v1086, %v1084
      %v1107 = vpack.c.b16 %v1089, %v1087
      %v1108 = vpack.c.b16 %v1090, %v1088
      %v1109 = vpack.c.b16 %v1093, %v1091
      %v1110 = vpack.c.b16 %v1094, %v1092
      %v1111 = vpack.c.b16 %v1097, %v1095
      %v1112 = vpack.c.b16 %v1098, %v1096
      %v1113 = vpack.c.b16 %v1101, %v1099
      %v1114 = vpack.c.b16 %v1102, %v1100
      %1127 = vmatpush.bf16.msra.mxu0 0
      %1128 = vmatpush.bf16.msra.mxu0 0
      %1129 = vmatpush.bf16.msra.mxu0 %v1113
      %1130 = vmatpush.bf16.msra.mxu0 %v1111
      %1131 = vmatpush.bf16.msra.mxu0 %v1109
      %1132 = vmatpush.bf16.msra.mxu0 %v1107
      %1133 = vmatpush.bf16.msra.mxu0 %v1105
      %1134 = vmatpush.bf16.msra.mxu0 %v1103
      %1135 = vmatmul.bf16.gmra.mxu0 %v1024
      %v1136 = vpop.f32.mrf.mxu0
      %v1137 = vadd.f32 0.0, %v1136
      %v1138 = vpop.f32.mrf.mxu0
      %1139 = vdwg.mxu0
      %1140 = vmatpush.bf16.msra.mxu0 0
      %1141 = vmatpush.bf16.msra.mxu0 0
      %1142 = vmatpush.bf16.msra.mxu0 %v1114
      %1143 = vmatpush.bf16.msra.mxu0 %v1112
      %1144 = vmatpush.bf16.msra.mxu0 %v1110
      %1145 = vmatpush.bf16.msra.mxu0 %v1108
      %1146 = vmatpush.bf16.msra.mxu0 %v1106
      %1147 = vmatpush.bf16.msra.mxu0 %v1104
      %1148 = vmatmul.bf16.gmra.mxu0 %v1024
      %v1149 = vpop.f32.mrf.mxu0
      %v1150 = vadd.f32 0.0, %v1149
      %v1151 = vpop.f32.mrf.mxu0
      %1152 = vdwg.mxu0
      %v1153 = vadd.f32 %v945, %v1137
      %v1154 = vadd.f32 %v946, %v1150
      %v1155 = vld [vmem:[%s326 + $0x1] sm:$0x7f]
      %v1156 = vpack.c.bf16 %v1155, %v1155
      %s1157 = scalar_lea.vmem %s1, 384
      %v1158 = vld [vmem:[%s1157] sm:$0xff]
      %v1159 = vld [vmem:[%s1157 + $0x8] sm:$0xff]
      %v1160 = vld [vmem:[%s1157 + $0x10] sm:$0xff]
      %v1161 = vld [vmem:[%s1157 + $0x18] sm:$0xff]
      %v1162 = vld [vmem:[%s1157 + $0x20] sm:$0xff]
      %v1163 = vld [vmem:[%s1157 + $0x28] sm:$0xff]
      %v1164 = vld [vmem:[%s1157 + $0x30] sm:$0xff]
      %v1165 = vld [vmem:[%s1157 + $0x38] sm:$0xff]
      %v1166 = vld [vmem:[%s1157 + $0x40] sm:$0xff]
      %v1167 = vld [vmem:[%s1157 + $0x48] sm:$0xff]
      %v1168 = vld [vmem:[%s1157 + $0x50] sm:$0xff]
      %v1169 = vld [vmem:[%s1157 + $0x58] sm:$0xff]
      %v1182 = vunpack.c.l.b16 %v1158
      %v1183 = vunpack.c.h.b16 %v1158
      %v1184 = vunpack.c.l.b16 %v1159
      %v1185 = vunpack.c.h.b16 %v1159
      %v1186 = vunpack.c.l.b16 %v1160
      %v1187 = vunpack.c.h.b16 %v1160
      %v1188 = vunpack.c.l.b16 %v1161
      %v1189 = vunpack.c.h.b16 %v1161
      %v1190 = vunpack.c.l.b16 %v1162
      %v1191 = vunpack.c.h.b16 %v1162
      %v1192 = vunpack.c.l.b16 %v1163
      %v1193 = vunpack.c.h.b16 %v1163
      %v1194 = vunpack.c.l.b16 %v1164
      %v1195 = vunpack.c.h.b16 %v1164
      %v1196 = vunpack.c.l.b16 %v1165
      %v1197 = vunpack.c.h.b16 %v1165
      %v1198 = vunpack.c.l.b16 %v1166
      %v1199 = vunpack.c.h.b16 %v1166
      %v1200 = vunpack.c.l.b16 %v1167
      %v1201 = vunpack.c.h.b16 %v1167
      %v1202 = vunpack.c.l.b16 %v1168
      %v1203 = vunpack.c.h.b16 %v1168
      %v1204 = vunpack.c.l.b16 %v1169
      %v1205 = vunpack.c.h.b16 %v1169
      %v1206 = vpack.c.b16 %v1184, %v1182
      %v1207 = vpack.c.b16 %v1185, %v1183
      %v1208 = vpack.c.b16 %v1188, %v1186
      %v1209 = vpack.c.b16 %v1189, %v1187
      %v1210 = vpack.c.b16 %v1192, %v1190
      %v1211 = vpack.c.b16 %v1193, %v1191
      %v1212 = vpack.c.b16 %v1196, %v1194
      %v1213 = vpack.c.b16 %v1197, %v1195
      %v1214 = vpack.c.b16 %v1200, %v1198
      %v1215 = vpack.c.b16 %v1201, %v1199
      %v1216 = vpack.c.b16 %v1204, %v1202
      %v1217 = vpack.c.b16 %v1205, %v1203
      %v1231 = vsel %vm435, %v1156, 0
      %1233 = vmatpush.bf16.msra.mxu0 0
      %1234 = vmatpush.bf16.msra.mxu0 0
      %1235 = vmatpush.bf16.msra.mxu0 %v1216
      %1236 = vmatpush.bf16.msra.mxu0 %v1214
      %1237 = vmatpush.bf16.msra.mxu0 %v1212
      %1238 = vmatpush.bf16.msra.mxu0 %v1210
      %1239 = vmatpush.bf16.msra.mxu0 %v1208
      %1240 = vmatpush.bf16.msra.mxu0 %v1206
      %1241 = vmatmul.bf16.gmra.mxu0 %v1231
      %v1242 = vpop.f32.mrf.mxu0
      %v1243 = vadd.f32 0.0, %v1242
      %v1244 = vpop.f32.mrf.mxu0
      %1245 = vdwg.mxu0
      %1246 = vmatpush.bf16.msra.mxu0 0
      %1247 = vmatpush.bf16.msra.mxu0 0
      %1248 = vmatpush.bf16.msra.mxu0 %v1217
      %1249 = vmatpush.bf16.msra.mxu0 %v1215
      %1250 = vmatpush.bf16.msra.mxu0 %v1213
      %1251 = vmatpush.bf16.msra.mxu0 %v1211
      %1252 = vmatpush.bf16.msra.mxu0 %v1209
      %1253 = vmatpush.bf16.msra.mxu0 %v1207
      %1254 = vmatmul.bf16.gmra.mxu0 %v1231
      %v1255 = vpop.f32.mrf.mxu0
      %v1256 = vadd.f32 0.0, %v1255
      %v1257 = vpop.f32.mrf.mxu0
      %1258 = vdwg.mxu0
      %v1259 = vadd.f32 %v1052, %v1243
      %v1260 = vadd.f32 %v1053, %v1256
      %s1261 = scalar_lea.vmem %s1, 864
      %v1262 = vld [vmem:[%s1261] sm:$0xff]
      %v1263 = vld [vmem:[%s1261 + $0x8] sm:$0xff]
      %v1264 = vld [vmem:[%s1261 + $0x10] sm:$0xff]
      %v1265 = vld [vmem:[%s1261 + $0x18] sm:$0xff]
      %v1266 = vld [vmem:[%s1261 + $0x20] sm:$0xff]
      %v1267 = vld [vmem:[%s1261 + $0x28] sm:$0xff]
      %v1268 = vld [vmem:[%s1261 + $0x30] sm:$0xff]
      %v1269 = vld [vmem:[%s1261 + $0x38] sm:$0xff]
      %v1270 = vld [vmem:[%s1261 + $0x40] sm:$0xff]
      %v1271 = vld [vmem:[%s1261 + $0x48] sm:$0xff]
      %v1272 = vld [vmem:[%s1261 + $0x50] sm:$0xff]
      %v1273 = vld [vmem:[%s1261 + $0x58] sm:$0xff]
      %v1286 = vunpack.c.l.b16 %v1262
      %v1287 = vunpack.c.h.b16 %v1262
      %v1288 = vunpack.c.l.b16 %v1263
      %v1289 = vunpack.c.h.b16 %v1263
      %v1290 = vunpack.c.l.b16 %v1264
      %v1291 = vunpack.c.h.b16 %v1264
      %v1292 = vunpack.c.l.b16 %v1265
      %v1293 = vunpack.c.h.b16 %v1265
      %v1294 = vunpack.c.l.b16 %v1266
      %v1295 = vunpack.c.h.b16 %v1266
      %v1296 = vunpack.c.l.b16 %v1267
      %v1297 = vunpack.c.h.b16 %v1267
      %v1298 = vunpack.c.l.b16 %v1268
      %v1299 = vunpack.c.h.b16 %v1268
      %v1300 = vunpack.c.l.b16 %v1269
      %v1301 = vunpack.c.h.b16 %v1269
      %v1302 = vunpack.c.l.b16 %v1270
      %v1303 = vunpack.c.h.b16 %v1270
      %v1304 = vunpack.c.l.b16 %v1271
      %v1305 = vunpack.c.h.b16 %v1271
      %v1306 = vunpack.c.l.b16 %v1272
      %v1307 = vunpack.c.h.b16 %v1272
      %v1308 = vunpack.c.l.b16 %v1273
      %v1309 = vunpack.c.h.b16 %v1273
      %v1310 = vpack.c.b16 %v1288, %v1286
      %v1311 = vpack.c.b16 %v1289, %v1287
      %v1312 = vpack.c.b16 %v1292, %v1290
      %v1313 = vpack.c.b16 %v1293, %v1291
      %v1314 = vpack.c.b16 %v1296, %v1294
      %v1315 = vpack.c.b16 %v1297, %v1295
      %v1316 = vpack.c.b16 %v1300, %v1298
      %v1317 = vpack.c.b16 %v1301, %v1299
      %v1318 = vpack.c.b16 %v1304, %v1302
      %v1319 = vpack.c.b16 %v1305, %v1303
      %v1320 = vpack.c.b16 %v1308, %v1306
      %v1321 = vpack.c.b16 %v1309, %v1307
      %1334 = vmatpush.bf16.msra.mxu0 0
      %1335 = vmatpush.bf16.msra.mxu0 0
      %1336 = vmatpush.bf16.msra.mxu0 %v1320
      %1337 = vmatpush.bf16.msra.mxu0 %v1318
      %1338 = vmatpush.bf16.msra.mxu0 %v1316
      %1339 = vmatpush.bf16.msra.mxu0 %v1314
      %1340 = vmatpush.bf16.msra.mxu0 %v1312
      %1341 = vmatpush.bf16.msra.mxu0 %v1310
      %1342 = vmatmul.bf16.gmra.mxu0 %v1231
      %v1343 = vpop.f32.mrf.mxu0
      %v1344 = vadd.f32 0.0, %v1343
      %v1345 = vpop.f32.mrf.mxu0
      %1346 = vdwg.mxu0
      %1347 = vmatpush.bf16.msra.mxu0 0
      %1348 = vmatpush.bf16.msra.mxu0 0
      %1349 = vmatpush.bf16.msra.mxu0 %v1321
      %1350 = vmatpush.bf16.msra.mxu0 %v1319
      %1351 = vmatpush.bf16.msra.mxu0 %v1317
      %1352 = vmatpush.bf16.msra.mxu0 %v1315
      %1353 = vmatpush.bf16.msra.mxu0 %v1313
      %1354 = vmatpush.bf16.msra.mxu0 %v1311
      %1355 = vmatmul.bf16.gmra.mxu0 %v1231
      %v1356 = vpop.f32.mrf.mxu0
      %v1357 = vadd.f32 0.0, %v1356
      %v1358 = vpop.f32.mrf.mxu0
      %1359 = vdwg.mxu0
      %v1360 = vadd.f32 %v1153, %v1344
      %v1361 = vadd.f32 %v1154, %v1357
      %v1362 = vmax.f32 %v1259, %v1360
      %v1363 = vmax.f32 %v1260, %v1361
      %1364 = vmatpush.bf16.msra.mxu0 0
      %1365 = vmatpush.bf16.msra.mxu0 0
      %1366 = vmatpush.bf16.msra.mxu0 %v421
      %1367 = vmatpush.bf16.msra.mxu0 %v419
      %1368 = vmatpush.bf16.msra.mxu0 %v417
      %1369 = vmatpush.bf16.msra.mxu0 %v415
      %1370 = vmatpush.bf16.msra.mxu0 %v413
      %1371 = vmatpush.bf16.msra.mxu0 %v411
      %1372 = vmatmul.bf16.gmra.mxu0 %v1024
      %v1373 = vpop.f32.mrf.mxu0
      %v1374 = vadd.f32 0.0, %v1373
      %v1375 = vpop.f32.mrf.mxu0
      %1376 = vdwg.mxu0
      %1377 = vmatpush.bf16.msra.mxu0 0
      %1378 = vmatpush.bf16.msra.mxu0 0
      %1379 = vmatpush.bf16.msra.mxu0 %v422
      %1380 = vmatpush.bf16.msra.mxu0 %v420
      %1381 = vmatpush.bf16.msra.mxu0 %v418
      %1382 = vmatpush.bf16.msra.mxu0 %v416
      %1383 = vmatpush.bf16.msra.mxu0 %v414
      %1384 = vmatpush.bf16.msra.mxu0 %v412
      %1385 = vmatmul.bf16.gmra.mxu0 %v1024
      %v1386 = vpop.f32.mrf.mxu0
      %v1387 = vadd.f32 0.0, %v1386
      %v1388 = vpop.f32.mrf.mxu0
      %1389 = vdwg.mxu0
      %1390 = vmatpush.bf16.msra.mxu0 0
      %1391 = vmatpush.bf16.msra.mxu0 0
      %1392 = vmatpush.bf16.msra.mxu0 %v511
      %1393 = vmatpush.bf16.msra.mxu0 %v509
      %1394 = vmatpush.bf16.msra.mxu0 %v507
      %1395 = vmatpush.bf16.msra.mxu0 %v505
      %1396 = vmatpush.bf16.msra.mxu0 %v503
      %1397 = vmatpush.bf16.msra.mxu0 %v501
      %1398 = vmatmul.bf16.gmra.mxu0 %v816
      %v1399 = vpop.f32.mrf.mxu0
      %v1400 = vadd.f32 %v1374, %v1399
      %v1401 = vpop.f32.mrf.mxu0
      %1402 = vdwg.mxu0
      %1403 = vmatpush.bf16.msra.mxu0 0
      %1404 = vmatpush.bf16.msra.mxu0 0
      %1405 = vmatpush.bf16.msra.mxu0 %v512
      %1406 = vmatpush.bf16.msra.mxu0 %v510
      %1407 = vmatpush.bf16.msra.mxu0 %v508
      %1408 = vmatpush.bf16.msra.mxu0 %v506
      %1409 = vmatpush.bf16.msra.mxu0 %v504
      %1410 = vmatpush.bf16.msra.mxu0 %v502
      %1411 = vmatmul.bf16.gmra.mxu0 %v816
      %v1412 = vpop.f32.mrf.mxu0
      %v1413 = vadd.f32 %v1387, %v1412
      %v1414 = vpop.f32.mrf.mxu0
      %1415 = vdwg.mxu0
      %1416 = vmatpush.bf16.msra.mxu0 0
      %1417 = vmatpush.bf16.msra.mxu0 0
      %1418 = vmatpush.bf16.msra.mxu0 %v613
      %1419 = vmatpush.bf16.msra.mxu0 %v611
      %1420 = vmatpush.bf16.msra.mxu0 %v609
      %1421 = vmatpush.bf16.msra.mxu0 %v607
      %1422 = vmatpush.bf16.msra.mxu0 %v605
      %1423 = vmatpush.bf16.msra.mxu0 %v603
      %1424 = vmatmul.bf16.gmra.mxu0 %v1024
      %v1425 = vpop.f32.mrf.mxu0
      %v1426 = vadd.f32 0.0, %v1425
      %v1427 = vpop.f32.mrf.mxu0
      %1428 = vdwg.mxu0
      %1429 = vmatpush.bf16.msra.mxu0 0
      %1430 = vmatpush.bf16.msra.mxu0 0
      %1431 = vmatpush.bf16.msra.mxu0 %v614
      %1432 = vmatpush.bf16.msra.mxu0 %v612
      %1433 = vmatpush.bf16.msra.mxu0 %v610
      %1434 = vmatpush.bf16.msra.mxu0 %v608
      %1435 = vmatpush.bf16.msra.mxu0 %v606
      %1436 = vmatpush.bf16.msra.mxu0 %v604
      %1437 = vmatmul.bf16.gmra.mxu0 %v1024
      %v1438 = vpop.f32.mrf.mxu0
      %v1439 = vadd.f32 0.0, %v1438
      %v1440 = vpop.f32.mrf.mxu0
      %1441 = vdwg.mxu0
      %1442 = vmatpush.bf16.msra.mxu0 0
      %1443 = vmatpush.bf16.msra.mxu0 0
      %1444 = vmatpush.bf16.msra.mxu0 %v699
      %1445 = vmatpush.bf16.msra.mxu0 %v697
      %1446 = vmatpush.bf16.msra.mxu0 %v695
      %1447 = vmatpush.bf16.msra.mxu0 %v693
      %1448 = vmatpush.bf16.msra.mxu0 %v691
      %1449 = vmatpush.bf16.msra.mxu0 %v689
      %1450 = vmatmul.bf16.gmra.mxu0 %v816
      %v1451 = vpop.f32.mrf.mxu0
      %v1452 = vadd.f32 %v1426, %v1451
      %v1453 = vpop.f32.mrf.mxu0
      %1454 = vdwg.mxu0
      %1455 = vmatpush.bf16.msra.mxu0 0
      %1456 = vmatpush.bf16.msra.mxu0 0
      %1457 = vmatpush.bf16.msra.mxu0 %v700
      %1458 = vmatpush.bf16.msra.mxu0 %v698
      %1459 = vmatpush.bf16.msra.mxu0 %v696
      %1460 = vmatpush.bf16.msra.mxu0 %v694
      %1461 = vmatpush.bf16.msra.mxu0 %v692
      %1462 = vmatpush.bf16.msra.mxu0 %v690
      %1463 = vmatmul.bf16.gmra.mxu0 %v816
      %v1464 = vpop.f32.mrf.mxu0
      %v1465 = vadd.f32 %v1439, %v1464
      %v1466 = vpop.f32.mrf.mxu0
      %1467 = vdwg.mxu0
      %1468 = vmatpush.bf16.msra.mxu0 0
      %1469 = vmatpush.bf16.msra.mxu0 0
      %1470 = vmatpush.bf16.msra.mxu0 %v801
      %1471 = vmatpush.bf16.msra.mxu0 %v799
      %1472 = vmatpush.bf16.msra.mxu0 %v797
      %1473 = vmatpush.bf16.msra.mxu0 %v795
      %1474 = vmatpush.bf16.msra.mxu0 %v793
      %1475 = vmatpush.bf16.msra.mxu0 %v791
      %1476 = vmatmul.bf16.gmra.mxu0 %v1231
      %v1477 = vpop.f32.mrf.mxu0
      %v1478 = vadd.f32 0.0, %v1477
      %v1479 = vpop.f32.mrf.mxu0
      %1480 = vdwg.mxu0
      %1481 = vmatpush.bf16.msra.mxu0 0
      %1482 = vmatpush.bf16.msra.mxu0 0
      %1483 = vmatpush.bf16.msra.mxu0 %v802
      %1484 = vmatpush.bf16.msra.mxu0 %v800
      %1485 = vmatpush.bf16.msra.mxu0 %v798
      %1486 = vmatpush.bf16.msra.mxu0 %v796
      %1487 = vmatpush.bf16.msra.mxu0 %v794
      %1488 = vmatpush.bf16.msra.mxu0 %v792
      %1489 = vmatmul.bf16.gmra.mxu0 %v1231
      %v1490 = vpop.f32.mrf.mxu0
      %v1491 = vadd.f32 0.0, %v1490
      %v1492 = vpop.f32.mrf.mxu0
      %1493 = vdwg.mxu0
      %v1494 = vadd.f32 %v1400, %v1478
      %v1495 = vadd.f32 %v1413, %v1491
      %1496 = vmatpush.bf16.msra.mxu0 0
      %1497 = vmatpush.bf16.msra.mxu0 0
      %1498 = vmatpush.bf16.msra.mxu0 %v905
      %1499 = vmatpush.bf16.msra.mxu0 %v903
      %1500 = vmatpush.bf16.msra.mxu0 %v901
      %1501 = vmatpush.bf16.msra.mxu0 %v899
      %1502 = vmatpush.bf16.msra.mxu0 %v897
      %1503 = vmatpush.bf16.msra.mxu0 %v895
      %1504 = vmatmul.bf16.gmra.mxu0 %v1231
      %v1505 = vpop.f32.mrf.mxu0
      %v1506 = vadd.f32 0.0, %v1505
      %v1507 = vpop.f32.mrf.mxu0
      %1508 = vdwg.mxu0
      %1509 = vmatpush.bf16.msra.mxu0 0
      %1510 = vmatpush.bf16.msra.mxu0 0
      %1511 = vmatpush.bf16.msra.mxu0 %v906
      %1512 = vmatpush.bf16.msra.mxu0 %v904
      %1513 = vmatpush.bf16.msra.mxu0 %v902
      %1514 = vmatpush.bf16.msra.mxu0 %v900
      %1515 = vmatpush.bf16.msra.mxu0 %v898
      %1516 = vmatpush.bf16.msra.mxu0 %v896
      %1517 = vmatmul.bf16.gmra.mxu0 %v1231
      %v1518 = vpop.f32.mrf.mxu0
      %v1519 = vadd.f32 0.0, %v1518
      %v1520 = vpop.f32.mrf.mxu0
      %1521 = vdwg.mxu0
      %v1522 = vadd.f32 %v1452, %v1506
      %v1523 = vadd.f32 %v1465, %v1519
      %v1524 = vld [vmem:[%s359 + $0x1] sm:$0x7f]
      %v1525 = vpack.c.bf16 %v1524, %v1524
      %v1527 = vsel %vm435, %v1525, 0
      %1529 = vmatpush.bf16.msra.mxu0 0
      %1530 = vmatpush.bf16.msra.mxu0 0
      %1531 = vmatpush.bf16.msra.mxu0 %v1009
      %1532 = vmatpush.bf16.msra.mxu0 %v1007
      %1533 = vmatpush.bf16.msra.mxu0 %v1005
      %1534 = vmatpush.bf16.msra.mxu0 %v1003
      %1535 = vmatpush.bf16.msra.mxu0 %v1001
      %1536 = vmatpush.bf16.msra.mxu0 %v999
      %1537 = vmatmul.bf16.gmra.mxu0 %v1527
      %v1538 = vpop.f32.mrf.mxu0
      %v1539 = vadd.f32 0.0, %v1538
      %v1540 = vpop.f32.mrf.mxu0
      %1541 = vdwg.mxu0
      %1542 = vmatpush.bf16.msra.mxu0 0
      %1543 = vmatpush.bf16.msra.mxu0 0
      %1544 = vmatpush.bf16.msra.mxu0 %v1010
      %1545 = vmatpush.bf16.msra.mxu0 %v1008
      %1546 = vmatpush.bf16.msra.mxu0 %v1006
      %1547 = vmatpush.bf16.msra.mxu0 %v1004
      %1548 = vmatpush.bf16.msra.mxu0 %v1002
      %1549 = vmatpush.bf16.msra.mxu0 %v1000
      %1550 = vmatmul.bf16.gmra.mxu0 %v1527
      %v1551 = vpop.f32.mrf.mxu0
      %v1552 = vadd.f32 0.0, %v1551
      %v1553 = vpop.f32.mrf.mxu0
      %1554 = vdwg.mxu0
      %v1555 = vadd.f32 %v1494, %v1539
      %v1556 = vadd.f32 %v1495, %v1552
      %1557 = vmatpush.bf16.msra.mxu0 0
      %1558 = vmatpush.bf16.msra.mxu0 0
      %1559 = vmatpush.bf16.msra.mxu0 %v1113
      %1560 = vmatpush.bf16.msra.mxu0 %v1111
      %1561 = vmatpush.bf16.msra.mxu0 %v1109
      %1562 = vmatpush.bf16.msra.mxu0 %v1107
      %1563 = vmatpush.bf16.msra.mxu0 %v1105
      %1564 = vmatpush.bf16.msra.mxu0 %v1103
      %1565 = vmatmul.bf16.gmra.mxu0 %v1527
      %v1566 = vpop.f32.mrf.mxu0
      %v1567 = vadd.f32 0.0, %v1566
      %v1568 = vpop.f32.mrf.mxu0
      %1569 = vdwg.mxu0
      %1570 = vmatpush.bf16.msra.mxu0 0
      %1571 = vmatpush.bf16.msra.mxu0 0
      %1572 = vmatpush.bf16.msra.mxu0 %v1114
      %1573 = vmatpush.bf16.msra.mxu0 %v1112
      %1574 = vmatpush.bf16.msra.mxu0 %v1110
      %1575 = vmatpush.bf16.msra.mxu0 %v1108
      %1576 = vmatpush.bf16.msra.mxu0 %v1106
      %1577 = vmatpush.bf16.msra.mxu0 %v1104
      %1578 = vmatmul.bf16.gmra.mxu0 %v1527
      %v1579 = vpop.f32.mrf.mxu0
      %v1580 = vadd.f32 0.0, %v1579
      %v1581 = vpop.f32.mrf.mxu0
      %1582 = vdwg.mxu0
      %v1583 = vadd.f32 %v1522, %v1567
      %v1584 = vadd.f32 %v1523, %v1580
      %v1585 = vld [vmem:[%s739 + $0x1] sm:$0x7f]
      %v1586 = vpack.c.bf16 %v1585, %v1585
      %v1588 = vsel %vm435, %v1586, 0
      %1590 = vmatpush.bf16.msra.mxu0 0
      %1591 = vmatpush.bf16.msra.mxu0 0
      %1592 = vmatpush.bf16.msra.mxu0 %v1216
      %1593 = vmatpush.bf16.msra.mxu0 %v1214
      %1594 = vmatpush.bf16.msra.mxu0 %v1212
      %1595 = vmatpush.bf16.msra.mxu0 %v1210
      %1596 = vmatpush.bf16.msra.mxu0 %v1208
      %1597 = vmatpush.bf16.msra.mxu0 %v1206
      %1598 = vmatmul.bf16.gmra.mxu0 %v1588
      %v1599 = vpop.f32.mrf.mxu0
      %v1600 = vadd.f32 0.0, %v1599
      %v1601 = vpop.f32.mrf.mxu0
      %1602 = vdwg.mxu0
      %1603 = vmatpush.bf16.msra.mxu0 0
      %1604 = vmatpush.bf16.msra.mxu0 0
      %1605 = vmatpush.bf16.msra.mxu0 %v1217
      %1606 = vmatpush.bf16.msra.mxu0 %v1215
      %1607 = vmatpush.bf16.msra.mxu0 %v1213
      %1608 = vmatpush.bf16.msra.mxu0 %v1211
      %1609 = vmatpush.bf16.msra.mxu0 %v1209
      %1610 = vmatpush.bf16.msra.mxu0 %v1207
      %1611 = vmatmul.bf16.gmra.mxu0 %v1588
      %v1612 = vpop.f32.mrf.mxu0
      %v1613 = vadd.f32 0.0, %v1612
      %v1614 = vpop.f32.mrf.mxu0
      %1615 = vdwg.mxu0
      %v1616 = vadd.f32 %v1555, %v1600
      %v1617 = vadd.f32 %v1556, %v1613
      %1618 = vmatpush.bf16.msra.mxu0 0
      %1619 = vmatpush.bf16.msra.mxu0 0
      %1620 = vmatpush.bf16.msra.mxu0 %v1320
      %1621 = vmatpush.bf16.msra.mxu0 %v1318
      %1622 = vmatpush.bf16.msra.mxu0 %v1316
      %1623 = vmatpush.bf16.msra.mxu0 %v1314
      %1624 = vmatpush.bf16.msra.mxu0 %v1312
      %1625 = vmatpush.bf16.msra.mxu0 %v1310
      %1626 = vmatmul.bf16.gmra.mxu0 %v1588
      %v1627 = vpop.f32.mrf.mxu0
      %v1628 = vadd.f32 0.0, %v1627
      %v1629 = vpop.f32.mrf.mxu0
      %1630 = vdwg.mxu0
      %1631 = vmatpush.bf16.msra.mxu0 0
      %1632 = vmatpush.bf16.msra.mxu0 0
      %1633 = vmatpush.bf16.msra.mxu0 %v1321
      %1634 = vmatpush.bf16.msra.mxu0 %v1319
      %1635 = vmatpush.bf16.msra.mxu0 %v1317
      %1636 = vmatpush.bf16.msra.mxu0 %v1315
      %1637 = vmatpush.bf16.msra.mxu0 %v1313
      %1638 = vmatpush.bf16.msra.mxu0 %v1311
      %1639 = vmatmul.bf16.gmra.mxu0 %v1588
      %v1640 = vpop.f32.mrf.mxu0
      %v1641 = vadd.f32 0.0, %v1640
      %v1642 = vpop.f32.mrf.mxu0
      %1643 = vdwg.mxu0
      %v1644 = vadd.f32 %v1583, %v1628
      %v1645 = vadd.f32 %v1584, %v1641
      %v1646 = vmax.f32 %v1616, %v1644
      %v1647 = vmax.f32 %v1617, %v1645
      %v1648 = vmax.f32 %v1362, %v1646
      %v1649 = vmax.f32 %v1363, %v1647
      %v1650 = vld [vmem:[%s2] sm:$0x3]
      %v1652 = vperm.slane %v1650, 0
      %v1653 = vperm.slane %v1650, 1
      %v1656 = vadd.f32 %v1648, %v1652
      %v1657 = vadd.f32 %v1649, %v1653
      %vm1658 = vcmp.ge.f32.partialorder %v1656, 0.0
      %vm1659 = vcmp.ge.f32.partialorder %v1657, 0.0
      %v1660 = vmul.f32 %v1656, 0.22916667
      %v1661 = vmul.f32 %v1657, 0.22916667
      %v1662 = vsel %vm1658, %v1656, %v1660
      %v1663 = vsel %vm1659, %v1657, %v1661
      %v1664 = vpack.c.bf16 %v1662, %v1662
      %v1665 = vpack.c.bf16 %v1663, %v1663
      %v1666 = vld [vmem:[%s3] sm:$0xf]
      %v1667 = vld [vmem:[%s3 + $0x4] sm:$0xf]
      %v1668 = vld [vmem:[%s3 + $0x8] sm:$0xf]
      %v1669 = vld [vmem:[%s3 + $0xc] sm:$0xf]
      %v1670 = vld [vmem:[%s3 + $0x10] sm:$0xf]
      %v1671 = vld [vmem:[%s3 + $0x14] sm:$0xf]
      %v1672 = vld [vmem:[%s3 + $0x18] sm:$0xf]
      %v1673 = vld [vmem:[%s3 + $0x1c] sm:$0xf]
      %v1674 = vld [vmem:[%s3 + $0x20] sm:$0xf]
      %v1675 = vld [vmem:[%s3 + $0x24] sm:$0xf]
      %v1676 = vld [vmem:[%s3 + $0x28] sm:$0xf]
      %v1677 = vld [vmem:[%s3 + $0x2c] sm:$0xf]
      %v1678 = vld [vmem:[%s3 + $0x30] sm:$0xf]
      %v1679 = vld [vmem:[%s3 + $0x34] sm:$0xf]
      %v1680 = vld [vmem:[%s3 + $0x38] sm:$0xf]
      %v1681 = vld [vmem:[%s3 + $0x3c] sm:$0xf]
      %v1682 = vld [vmem:[%s3 + $0x40] sm:$0xf]
      %v1683 = vld [vmem:[%s3 + $0x44] sm:$0xf]
      %v1684 = vld [vmem:[%s3 + $0x48] sm:$0xf]
      %v1685 = vld [vmem:[%s3 + $0x4c] sm:$0xf]
      %v1686 = vld [vmem:[%s3 + $0x50] sm:$0xf]
      %v1687 = vld [vmem:[%s3 + $0x54] sm:$0xf]
      %v1688 = vld [vmem:[%s3 + $0x58] sm:$0xf]
      %v1689 = vld [vmem:[%s3 + $0x5c] sm:$0xf]
      %v1690 = vld [vmem:[%s3 + $0x60] sm:$0xf]
      %v1691 = vld [vmem:[%s3 + $0x64] sm:$0xf]
      %v1692 = vld [vmem:[%s3 + $0x68] sm:$0xf]
      %v1693 = vld [vmem:[%s3 + $0x6c] sm:$0xf]
      %s1694 = scalar_lea.vmem %s3, 336
      %v1695 = vld [vmem:[%s1694] sm:$0xf]
      %v1696 = vld [vmem:[%s1694 + $0x4] sm:$0xf]
      %v1697 = vld [vmem:[%s1694 + $0x8] sm:$0xf]
      %v1698 = vld [vmem:[%s1694 + $0xc] sm:$0xf]
      %v1699 = vld [vmem:[%s1694 + $0x10] sm:$0xf]
      %v1700 = vld [vmem:[%s1694 + $0x14] sm:$0xf]
      %v1701 = vld [vmem:[%s1694 + $0x18] sm:$0xf]
      %v1702 = vld [vmem:[%s1694 + $0x1c] sm:$0xf]
      %v1703 = vld [vmem:[%s1694 + $0x20] sm:$0xf]
      %v1704 = vld [vmem:[%s1694 + $0x24] sm:$0xf]
      %v1705 = vld [vmem:[%s1694 + $0x28] sm:$0xf]
      %v1706 = vld [vmem:[%s1694 + $0x2c] sm:$0xf]
      %v1707 = vld [vmem:[%s1694 + $0x30] sm:$0xf]
      %v1708 = vld [vmem:[%s1694 + $0x34] sm:$0xf]
      %v1709 = vld [vmem:[%s1694 + $0x38] sm:$0xf]
      %v1710 = vld [vmem:[%s1694 + $0x3c] sm:$0xf]
      %v1711 = vld [vmem:[%s1694 + $0x40] sm:$0xf]
      %v1712 = vld [vmem:[%s1694 + $0x44] sm:$0xf]
      %v1713 = vld [vmem:[%s1694 + $0x48] sm:$0xf]
      %v1714 = vld [vmem:[%s1694 + $0x4c] sm:$0xf]
      %v1715 = vld [vmem:[%s1694 + $0x50] sm:$0xf]
      %v1716 = vld [vmem:[%s1694 + $0x54] sm:$0xf]
      %v1717 = vld [vmem:[%s1694 + $0x58] sm:$0xf]
      %v1718 = vld [vmem:[%s1694 + $0x5c] sm:$0xf]
      %v1719 = vld [vmem:[%s1694 + $0x60] sm:$0xf]
      %v1720 = vld [vmem:[%s1694 + $0x64] sm:$0xf]
      %v1721 = vld [vmem:[%s1694 + $0x68] sm:$0xf]
      %v1722 = vld [vmem:[%s1694 + $0x6c] sm:$0xf]
      %s1723 = scalar_lea.vmem %s3, 112
      %v1724 = vld [vmem:[%s1723] sm:$0xf]
      %v1725 = vld [vmem:[%s1723 + $0x4] sm:$0xf]
      %v1726 = vld [vmem:[%s1723 + $0x8] sm:$0xf]
      %v1727 = vld [vmem:[%s1723 + $0xc] sm:$0xf]
      %v1728 = vld [vmem:[%s1723 + $0x10] sm:$0xf]
      %v1729 = vld [vmem:[%s1723 + $0x14] sm:$0xf]
      %v1730 = vld [vmem:[%s1723 + $0x18] sm:$0xf]
      %v1731 = vld [vmem:[%s1723 + $0x1c] sm:$0xf]
      %v1732 = vld [vmem:[%s1723 + $0x20] sm:$0xf]
      %v1733 = vld [vmem:[%s1723 + $0x24] sm:$0xf]
      %v1734 = vld [vmem:[%s1723 + $0x28] sm:$0xf]
      %v1735 = vld [vmem:[%s1723 + $0x2c] sm:$0xf]
      %v1736 = vld [vmem:[%s1723 + $0x30] sm:$0xf]
      %v1737 = vld [vmem:[%s1723 + $0x34] sm:$0xf]
      %v1738 = vld [vmem:[%s1723 + $0x38] sm:$0xf]
      %v1739 = vld [vmem:[%s1723 + $0x3c] sm:$0xf]
      %v1740 = vld [vmem:[%s1723 + $0x40] sm:$0xf]
      %v1741 = vld [vmem:[%s1723 + $0x44] sm:$0xf]
      %v1742 = vld [vmem:[%s1723 + $0x48] sm:$0xf]
      %v1743 = vld [vmem:[%s1723 + $0x4c] sm:$0xf]
      %v1744 = vld [vmem:[%s1723 + $0x50] sm:$0xf]
      %v1745 = vld [vmem:[%s1723 + $0x54] sm:$0xf]
      %v1746 = vld [vmem:[%s1723 + $0x58] sm:$0xf]
      %v1747 = vld [vmem:[%s1723 + $0x5c] sm:$0xf]
      %v1748 = vld [vmem:[%s1723 + $0x60] sm:$0xf]
      %v1749 = vld [vmem:[%s1723 + $0x64] sm:$0xf]
      %v1750 = vld [vmem:[%s1723 + $0x68] sm:$0xf]
      %v1751 = vld [vmem:[%s1723 + $0x6c] sm:$0xf]
      %v1753 = vshrl.u32 %v1664, 16
      %v1756 = vshrl.u32 %v1665, 16
      %v1787 = vunpack.c.l.b16 %v1724
      %v1788 = vunpack.c.l.b16 %v1725
      %v1789 = vunpack.c.l.b16 %v1726
      %v1790 = vunpack.c.l.b16 %v1727
      %v1791 = vunpack.c.l.b16 %v1728
      %v1792 = vunpack.c.l.b16 %v1729
      %v1793 = vunpack.c.l.b16 %v1730
      %v1794 = vunpack.c.l.b16 %v1731
      %v1795 = vunpack.c.l.b16 %v1732
      %v1796 = vunpack.c.l.b16 %v1733
      %v1797 = vunpack.c.l.b16 %v1734
      %v1798 = vunpack.c.l.b16 %v1735
      %v1799 = vunpack.c.l.b16 %v1736
      %v1800 = vunpack.c.l.b16 %v1737
      %v1801 = vunpack.c.l.b16 %v1738
      %v1802 = vunpack.c.l.b16 %v1739
      %v1803 = vunpack.c.l.b16 %v1740
      %v1804 = vunpack.c.l.b16 %v1741
      %v1805 = vunpack.c.l.b16 %v1742
      %v1806 = vunpack.c.l.b16 %v1743
      %v1807 = vunpack.c.l.b16 %v1744
      %v1808 = vunpack.c.l.b16 %v1745
      %v1809 = vunpack.c.l.b16 %v1746
      %v1810 = vunpack.c.l.b16 %v1747
      %v1811 = vunpack.c.l.b16 %v1748
      %v1812 = vunpack.c.l.b16 %v1749
      %v1813 = vunpack.c.l.b16 %v1750
      %v1814 = vunpack.c.l.b16 %v1751
      %v1815 = vpack.c.b16 %v1788, %v1787
      %v1816 = vpack.c.b16 %v1790, %v1789
      %v1817 = vpack.c.b16 %v1792, %v1791
      %v1818 = vpack.c.b16 %v1794, %v1793
      %v1819 = vpack.c.b16 %v1796, %v1795
      %v1820 = vpack.c.b16 %v1798, %v1797
      %v1821 = vpack.c.b16 %v1800, %v1799
      %v1822 = vpack.c.b16 %v1802, %v1801
      %v1823 = vpack.c.b16 %v1804, %v1803
      %v1824 = vpack.c.b16 %v1806, %v1805
      %v1825 = vpack.c.b16 %v1808, %v1807
      %v1826 = vpack.c.b16 %v1810, %v1809
      %v1827 = vpack.c.b16 %v1812, %v1811
      %v1828 = vpack.c.b16 %v1814, %v1813
      %v1844 = vsel %vm435, %v1756, 0
      %1846 = vmatpush.bf16.msra.mxu0 %v1822
      %1847 = vmatpush.bf16.msra.mxu0 %v1821
      %1848 = vmatpush.bf16.msra.mxu0 %v1820
      %1849 = vmatpush.bf16.msra.mxu0 %v1819
      %1850 = vmatpush.bf16.msra.mxu0 %v1818
      %1851 = vmatpush.bf16.msra.mxu0 %v1817
      %1852 = vmatpush.bf16.msra.mxu0 %v1816
      %1853 = vmatpush.bf16.msra.mxu0 %v1815
      %1854 = vmatmul.bf16.gmra.mxu0 %v1753
      %v1855 = vpop.f32.mrf.mxu0
      %v1856 = vadd.f32 0.0, %v1855
      %v1857 = vpop.f32.mrf.mxu0
      %1858 = vdwg.mxu0
      %1859 = vmatpush.bf16.msra.mxu0 0
      %1860 = vmatpush.bf16.msra.mxu0 0
      %1861 = vmatpush.bf16.msra.mxu0 %v1828
      %1862 = vmatpush.bf16.msra.mxu0 %v1827
      %1863 = vmatpush.bf16.msra.mxu0 %v1826
      %1864 = vmatpush.bf16.msra.mxu0 %v1825
      %1865 = vmatpush.bf16.msra.mxu0 %v1824
      %1866 = vmatpush.bf16.msra.mxu0 %v1823
      %1867 = vmatmul.bf16.gmra.mxu0 %v1844
      %v1868 = vpop.f32.mrf.mxu0
      %v1869 = vadd.f32 %v1856, %v1868
      %v1870 = vpop.f32.mrf.mxu0
      %1871 = vdwg.mxu0
      %v1900 = vunpack.c.l.b16 %v1666
      %v1901 = vunpack.c.l.b16 %v1667
      %v1902 = vunpack.c.l.b16 %v1668
      %v1903 = vunpack.c.l.b16 %v1669
      %v1904 = vunpack.c.l.b16 %v1670
      %v1905 = vunpack.c.l.b16 %v1671
      %v1906 = vunpack.c.l.b16 %v1672
      %v1907 = vunpack.c.l.b16 %v1673
      %v1908 = vunpack.c.l.b16 %v1674
      %v1909 = vunpack.c.l.b16 %v1675
      %v1910 = vunpack.c.l.b16 %v1676
      %v1911 = vunpack.c.l.b16 %v1677
      %v1912 = vunpack.c.l.b16 %v1678
      %v1913 = vunpack.c.l.b16 %v1679
      %v1914 = vunpack.c.l.b16 %v1680
      %v1915 = vunpack.c.l.b16 %v1681
      %v1916 = vunpack.c.l.b16 %v1682
      %v1917 = vunpack.c.l.b16 %v1683
      %v1918 = vunpack.c.l.b16 %v1684
      %v1919 = vunpack.c.l.b16 %v1685
      %v1920 = vunpack.c.l.b16 %v1686
      %v1921 = vunpack.c.l.b16 %v1687
      %v1922 = vunpack.c.l.b16 %v1688
      %v1923 = vunpack.c.l.b16 %v1689
      %v1924 = vunpack.c.l.b16 %v1690
      %v1925 = vunpack.c.l.b16 %v1691
      %v1926 = vunpack.c.l.b16 %v1692
      %v1927 = vunpack.c.l.b16 %v1693
      %v1928 = vpack.c.b16 %v1901, %v1900
      %v1929 = vpack.c.b16 %v1903, %v1902
      %v1930 = vpack.c.b16 %v1905, %v1904
      %v1931 = vpack.c.b16 %v1907, %v1906
      %v1932 = vpack.c.b16 %v1909, %v1908
      %v1933 = vpack.c.b16 %v1911, %v1910
      %v1934 = vpack.c.b16 %v1913, %v1912
      %v1935 = vpack.c.b16 %v1915, %v1914
      %v1936 = vpack.c.b16 %v1917, %v1916
      %v1937 = vpack.c.b16 %v1919, %v1918
      %v1938 = vpack.c.b16 %v1921, %v1920
      %v1939 = vpack.c.b16 %v1923, %v1922
      %v1940 = vpack.c.b16 %v1925, %v1924
      %v1941 = vpack.c.b16 %v1927, %v1926
      %v1956 = vsel %vm435, %v1665, 0
      %1958 = vmatpush.bf16.msra.mxu0 %v1935
      %1959 = vmatpush.bf16.msra.mxu0 %v1934
      %1960 = vmatpush.bf16.msra.mxu0 %v1933
      %1961 = vmatpush.bf16.msra.mxu0 %v1932
      %1962 = vmatpush.bf16.msra.mxu0 %v1931
      %1963 = vmatpush.bf16.msra.mxu0 %v1930
      %1964 = vmatpush.bf16.msra.mxu0 %v1929
      %1965 = vmatpush.bf16.msra.mxu0 %v1928
      %1966 = vmatmul.bf16.gmra.mxu0 %v1664
      %v1967 = vpop.f32.mrf.mxu0
      %v1968 = vadd.f32 %v1869, %v1967
      %v1969 = vpop.f32.mrf.mxu0
      %1970 = vdwg.mxu0
      %1971 = vmatpush.bf16.msra.mxu0 0
      %1972 = vmatpush.bf16.msra.mxu0 0
      %1973 = vmatpush.bf16.msra.mxu0 %v1941
      %1974 = vmatpush.bf16.msra.mxu0 %v1940
      %1975 = vmatpush.bf16.msra.mxu0 %v1939
      %1976 = vmatpush.bf16.msra.mxu0 %v1938
      %1977 = vmatpush.bf16.msra.mxu0 %v1937
      %1978 = vmatpush.bf16.msra.mxu0 %v1936
      %1979 = vmatmul.bf16.gmra.mxu0 %v1956
      %v1980 = vpop.f32.mrf.mxu0
      %v1981 = vadd.f32 %v1968, %v1980
      %v1982 = vpop.f32.mrf.mxu0
      %1983 = vdwg.mxu0
      %s1984 = scalar_lea.vmem %s3, 448
      %v1985 = vld [vmem:[%s1984] sm:$0xf]
      %v1986 = vld [vmem:[%s1984 + $0x4] sm:$0xf]
      %v1987 = vld [vmem:[%s1984 + $0x8] sm:$0xf]
      %v1988 = vld [vmem:[%s1984 + $0xc] sm:$0xf]
      %v1989 = vld [vmem:[%s1984 + $0x10] sm:$0xf]
      %v1990 = vld [vmem:[%s1984 + $0x14] sm:$0xf]
      %v1991 = vld [vmem:[%s1984 + $0x18] sm:$0xf]
      %v1992 = vld [vmem:[%s1984 + $0x1c] sm:$0xf]
      %v1993 = vld [vmem:[%s1984 + $0x20] sm:$0xf]
      %v1994 = vld [vmem:[%s1984 + $0x24] sm:$0xf]
      %v1995 = vld [vmem:[%s1984 + $0x28] sm:$0xf]
      %v1996 = vld [vmem:[%s1984 + $0x2c] sm:$0xf]
      %v1997 = vld [vmem:[%s1984 + $0x30] sm:$0xf]
      %v1998 = vld [vmem:[%s1984 + $0x34] sm:$0xf]
      %v1999 = vld [vmem:[%s1984 + $0x38] sm:$0xf]
      %v2000 = vld [vmem:[%s1984 + $0x3c] sm:$0xf]
      %v2001 = vld [vmem:[%s1984 + $0x40] sm:$0xf]
      %v2002 = vld [vmem:[%s1984 + $0x44] sm:$0xf]
      %v2003 = vld [vmem:[%s1984 + $0x48] sm:$0xf]
      %v2004 = vld [vmem:[%s1984 + $0x4c] sm:$0xf]
      %v2005 = vld [vmem:[%s1984 + $0x50] sm:$0xf]
      %v2006 = vld [vmem:[%s1984 + $0x54] sm:$0xf]
      %v2007 = vld [vmem:[%s1984 + $0x58] sm:$0xf]
      %v2008 = vld [vmem:[%s1984 + $0x5c] sm:$0xf]
      %v2009 = vld [vmem:[%s1984 + $0x60] sm:$0xf]
      %v2010 = vld [vmem:[%s1984 + $0x64] sm:$0xf]
      %v2011 = vld [vmem:[%s1984 + $0x68] sm:$0xf]
      %v2012 = vld [vmem:[%s1984 + $0x6c] sm:$0xf]
      %v2041 = vunpack.c.l.b16 %v1985
      %v2042 = vunpack.c.l.b16 %v1986
      %v2043 = vunpack.c.l.b16 %v1987
      %v2044 = vunpack.c.l.b16 %v1988
      %v2045 = vunpack.c.l.b16 %v1989
      %v2046 = vunpack.c.l.b16 %v1990
      %v2047 = vunpack.c.l.b16 %v1991
      %v2048 = vunpack.c.l.b16 %v1992
      %v2049 = vunpack.c.l.b16 %v1993
      %v2050 = vunpack.c.l.b16 %v1994
      %v2051 = vunpack.c.l.b16 %v1995
      %v2052 = vunpack.c.l.b16 %v1996
      %v2053 = vunpack.c.l.b16 %v1997
      %v2054 = vunpack.c.l.b16 %v1998
      %v2055 = vunpack.c.l.b16 %v1999
      %v2056 = vunpack.c.l.b16 %v2000
      %v2057 = vunpack.c.l.b16 %v2001
      %v2058 = vunpack.c.l.b16 %v2002
      %v2059 = vunpack.c.l.b16 %v2003
      %v2060 = vunpack.c.l.b16 %v2004
      %v2061 = vunpack.c.l.b16 %v2005
      %v2062 = vunpack.c.l.b16 %v2006
      %v2063 = vunpack.c.l.b16 %v2007
      %v2064 = vunpack.c.l.b16 %v2008
      %v2065 = vunpack.c.l.b16 %v2009
      %v2066 = vunpack.c.l.b16 %v2010
      %v2067 = vunpack.c.l.b16 %v2011
      %v2068 = vunpack.c.l.b16 %v2012
      %v2069 = vpack.c.b16 %v2042, %v2041
      %v2070 = vpack.c.b16 %v2044, %v2043
      %v2071 = vpack.c.b16 %v2046, %v2045
      %v2072 = vpack.c.b16 %v2048, %v2047
      %v2073 = vpack.c.b16 %v2050, %v2049
      %v2074 = vpack.c.b16 %v2052, %v2051
      %v2075 = vpack.c.b16 %v2054, %v2053
      %v2076 = vpack.c.b16 %v2056, %v2055
      %v2077 = vpack.c.b16 %v2058, %v2057
      %v2078 = vpack.c.b16 %v2060, %v2059
      %v2079 = vpack.c.b16 %v2062, %v2061
      %v2080 = vpack.c.b16 %v2064, %v2063
      %v2081 = vpack.c.b16 %v2066, %v2065
      %v2082 = vpack.c.b16 %v2068, %v2067
      %2097 = vmatpush.bf16.msra.mxu0 %v2076
      %2098 = vmatpush.bf16.msra.mxu0 %v2075
      %2099 = vmatpush.bf16.msra.mxu0 %v2074
      %2100 = vmatpush.bf16.msra.mxu0 %v2073
      %2101 = vmatpush.bf16.msra.mxu0 %v2072
      %2102 = vmatpush.bf16.msra.mxu0 %v2071
      %2103 = vmatpush.bf16.msra.mxu0 %v2070
      %2104 = vmatpush.bf16.msra.mxu0 %v2069
      %2105 = vmatmul.bf16.gmra.mxu0 %v1753
      %v2106 = vpop.f32.mrf.mxu0
      %v2107 = vadd.f32 0.0, %v2106
      %v2108 = vpop.f32.mrf.mxu0
      %2109 = vdwg.mxu0
      %2110 = vmatpush.bf16.msra.mxu0 0
      %2111 = vmatpush.bf16.msra.mxu0 0
      %2112 = vmatpush.bf16.msra.mxu0 %v2082
      %2113 = vmatpush.bf16.msra.mxu0 %v2081
      %2114 = vmatpush.bf16.msra.mxu0 %v2080
      %2115 = vmatpush.bf16.msra.mxu0 %v2079
      %2116 = vmatpush.bf16.msra.mxu0 %v2078
      %2117 = vmatpush.bf16.msra.mxu0 %v2077
      %2118 = vmatmul.bf16.gmra.mxu0 %v1844
      %v2119 = vpop.f32.mrf.mxu0
      %v2120 = vadd.f32 %v2107, %v2119
      %v2121 = vpop.f32.mrf.mxu0
      %2122 = vdwg.mxu0
      %v2151 = vunpack.c.l.b16 %v1695
      %v2152 = vunpack.c.l.b16 %v1696
      %v2153 = vunpack.c.l.b16 %v1697
      %v2154 = vunpack.c.l.b16 %v1698
      %v2155 = vunpack.c.l.b16 %v1699
      %v2156 = vunpack.c.l.b16 %v1700
      %v2157 = vunpack.c.l.b16 %v1701
      %v2158 = vunpack.c.l.b16 %v1702
      %v2159 = vunpack.c.l.b16 %v1703
      %v2160 = vunpack.c.l.b16 %v1704
      %v2161 = vunpack.c.l.b16 %v1705
      %v2162 = vunpack.c.l.b16 %v1706
      %v2163 = vunpack.c.l.b16 %v1707
      %v2164 = vunpack.c.l.b16 %v1708
      %v2165 = vunpack.c.l.b16 %v1709
      %v2166 = vunpack.c.l.b16 %v1710
      %v2167 = vunpack.c.l.b16 %v1711
      %v2168 = vunpack.c.l.b16 %v1712
      %v2169 = vunpack.c.l.b16 %v1713
      %v2170 = vunpack.c.l.b16 %v1714
      %v2171 = vunpack.c.l.b16 %v1715
      %v2172 = vunpack.c.l.b16 %v1716
      %v2173 = vunpack.c.l.b16 %v1717
      %v2174 = vunpack.c.l.b16 %v1718
      %v2175 = vunpack.c.l.b16 %v1719
      %v2176 = vunpack.c.l.b16 %v1720
      %v2177 = vunpack.c.l.b16 %v1721
      %v2178 = vunpack.c.l.b16 %v1722
      %v2179 = vpack.c.b16 %v2152, %v2151
      %v2180 = vpack.c.b16 %v2154, %v2153
      %v2181 = vpack.c.b16 %v2156, %v2155
      %v2182 = vpack.c.b16 %v2158, %v2157
      %v2183 = vpack.c.b16 %v2160, %v2159
      %v2184 = vpack.c.b16 %v2162, %v2161
      %v2185 = vpack.c.b16 %v2164, %v2163
      %v2186 = vpack.c.b16 %v2166, %v2165
      %v2187 = vpack.c.b16 %v2168, %v2167
      %v2188 = vpack.c.b16 %v2170, %v2169
      %v2189 = vpack.c.b16 %v2172, %v2171
      %v2190 = vpack.c.b16 %v2174, %v2173
      %v2191 = vpack.c.b16 %v2176, %v2175
      %v2192 = vpack.c.b16 %v2178, %v2177
      %2207 = vmatpush.bf16.msra.mxu0 %v2186
      %2208 = vmatpush.bf16.msra.mxu0 %v2185
      %2209 = vmatpush.bf16.msra.mxu0 %v2184
      %2210 = vmatpush.bf16.msra.mxu0 %v2183
      %2211 = vmatpush.bf16.msra.mxu0 %v2182
      %2212 = vmatpush.bf16.msra.mxu0 %v2181
      %2213 = vmatpush.bf16.msra.mxu0 %v2180
      %2214 = vmatpush.bf16.msra.mxu0 %v2179
      %2215 = vmatmul.bf16.gmra.mxu0 %v1664
      %v2216 = vpop.f32.mrf.mxu0
      %v2217 = vadd.f32 %v2120, %v2216
      %v2218 = vpop.f32.mrf.mxu0
      %2219 = vdwg.mxu0
      %2220 = vmatpush.bf16.msra.mxu0 0
      %2221 = vmatpush.bf16.msra.mxu0 0
      %2222 = vmatpush.bf16.msra.mxu0 %v2192
      %2223 = vmatpush.bf16.msra.mxu0 %v2191
      %2224 = vmatpush.bf16.msra.mxu0 %v2190
      %2225 = vmatpush.bf16.msra.mxu0 %v2189
      %2226 = vmatpush.bf16.msra.mxu0 %v2188
      %2227 = vmatpush.bf16.msra.mxu0 %v2187
      %2228 = vmatmul.bf16.gmra.mxu0 %v1956
      %v2229 = vpop.f32.mrf.mxu0
      %v2230 = vadd.f32 %v2217, %v2229
      %v2231 = vpop.f32.mrf.mxu0
      %2232 = vdwg.mxu0
      %s2233 = scalar_lea.vmem %s3, 224
      %v2234 = vld [vmem:[%s2233] sm:$0xf]
      %v2235 = vld [vmem:[%s2233 + $0x4] sm:$0xf]
      %v2236 = vld [vmem:[%s2233 + $0x8] sm:$0xf]
      %v2237 = vld [vmem:[%s2233 + $0xc] sm:$0xf]
      %v2238 = vld [vmem:[%s2233 + $0x10] sm:$0xf]
      %v2239 = vld [vmem:[%s2233 + $0x14] sm:$0xf]
      %v2240 = vld [vmem:[%s2233 + $0x18] sm:$0xf]
      %v2241 = vld [vmem:[%s2233 + $0x1c] sm:$0xf]
      %v2242 = vld [vmem:[%s2233 + $0x20] sm:$0xf]
      %v2243 = vld [vmem:[%s2233 + $0x24] sm:$0xf]
      %v2244 = vld [vmem:[%s2233 + $0x28] sm:$0xf]
      %v2245 = vld [vmem:[%s2233 + $0x2c] sm:$0xf]
      %v2246 = vld [vmem:[%s2233 + $0x30] sm:$0xf]
      %v2247 = vld [vmem:[%s2233 + $0x34] sm:$0xf]
      %v2248 = vld [vmem:[%s2233 + $0x38] sm:$0xf]
      %v2249 = vld [vmem:[%s2233 + $0x3c] sm:$0xf]
      %v2250 = vld [vmem:[%s2233 + $0x40] sm:$0xf]
      %v2251 = vld [vmem:[%s2233 + $0x44] sm:$0xf]
      %v2252 = vld [vmem:[%s2233 + $0x48] sm:$0xf]
      %v2253 = vld [vmem:[%s2233 + $0x4c] sm:$0xf]
      %v2254 = vld [vmem:[%s2233 + $0x50] sm:$0xf]
      %v2255 = vld [vmem:[%s2233 + $0x54] sm:$0xf]
      %v2256 = vld [vmem:[%s2233 + $0x58] sm:$0xf]
      %v2257 = vld [vmem:[%s2233 + $0x5c] sm:$0xf]
      %v2258 = vld [vmem:[%s2233 + $0x60] sm:$0xf]
      %v2259 = vld [vmem:[%s2233 + $0x64] sm:$0xf]
      %v2260 = vld [vmem:[%s2233 + $0x68] sm:$0xf]
      %v2261 = vld [vmem:[%s2233 + $0x6c] sm:$0xf]
      %v2264 = vrot.slane %v1664, 1
      %v2265 = vrot.slane %v1665, 1
      %v2295 = vunpack.c.l.b16 %v2234
      %v2296 = vunpack.c.l.b16 %v2235
      %v2297 = vunpack.c.l.b16 %v2236
      %v2298 = vunpack.c.l.b16 %v2237
      %v2299 = vunpack.c.l.b16 %v2238
      %v2300 = vunpack.c.l.b16 %v2239
      %v2301 = vunpack.c.l.b16 %v2240
      %v2302 = vunpack.c.l.b16 %v2241
      %v2303 = vunpack.c.l.b16 %v2242
      %v2304 = vunpack.c.l.b16 %v2243
      %v2305 = vunpack.c.l.b16 %v2244
      %v2306 = vunpack.c.l.b16 %v2245
      %v2307 = vunpack.c.l.b16 %v2246
      %v2308 = vunpack.c.l.b16 %v2247
      %v2309 = vunpack.c.l.b16 %v2248
      %v2310 = vunpack.c.l.b16 %v2249
      %v2311 = vunpack.c.l.b16 %v2250
      %v2312 = vunpack.c.l.b16 %v2251
      %v2313 = vunpack.c.l.b16 %v2252
      %v2314 = vunpack.c.l.b16 %v2253
      %v2315 = vunpack.c.l.b16 %v2254
      %v2316 = vunpack.c.l.b16 %v2255
      %v2317 = vunpack.c.l.b16 %v2256
      %v2318 = vunpack.c.l.b16 %v2257
      %v2319 = vunpack.c.l.b16 %v2258
      %v2320 = vunpack.c.l.b16 %v2259
      %v2321 = vunpack.c.l.b16 %v2260
      %v2322 = vunpack.c.l.b16 %v2261
      %v2323 = vpack.c.b16 %v2296, %v2295
      %v2324 = vpack.c.b16 %v2298, %v2297
      %v2325 = vpack.c.b16 %v2300, %v2299
      %v2326 = vpack.c.b16 %v2302, %v2301
      %v2327 = vpack.c.b16 %v2304, %v2303
      %v2328 = vpack.c.b16 %v2306, %v2305
      %v2329 = vpack.c.b16 %v2308, %v2307
      %v2330 = vpack.c.b16 %v2310, %v2309
      %v2331 = vpack.c.b16 %v2312, %v2311
      %v2332 = vpack.c.b16 %v2314, %v2313
      %v2333 = vpack.c.b16 %v2316, %v2315
      %v2334 = vpack.c.b16 %v2318, %v2317
      %v2335 = vpack.c.b16 %v2320, %v2319
      %v2336 = vpack.c.b16 %v2322, %v2321
      %v2352 = vsel %vm435, %v2265, 0
      %2354 = vmatpush.bf16.msra.mxu0 %v2330
      %2355 = vmatpush.bf16.msra.mxu0 %v2329
      %2356 = vmatpush.bf16.msra.mxu0 %v2328
      %2357 = vmatpush.bf16.msra.mxu0 %v2327
      %2358 = vmatpush.bf16.msra.mxu0 %v2326
      %2359 = vmatpush.bf16.msra.mxu0 %v2325
      %2360 = vmatpush.bf16.msra.mxu0 %v2324
      %2361 = vmatpush.bf16.msra.mxu0 %v2323
      %2362 = vmatmul.bf16.gmra.mxu0 %v2264
      %v2363 = vpop.f32.mrf.mxu0
      %v2364 = vadd.f32 0.0, %v2363
      %v2365 = vpop.f32.mrf.mxu0
      %2366 = vdwg.mxu0
      %2367 = vmatpush.bf16.msra.mxu0 0
      %2368 = vmatpush.bf16.msra.mxu0 0
      %2369 = vmatpush.bf16.msra.mxu0 %v2336
      %2370 = vmatpush.bf16.msra.mxu0 %v2335
      %2371 = vmatpush.bf16.msra.mxu0 %v2334
      %2372 = vmatpush.bf16.msra.mxu0 %v2333
      %2373 = vmatpush.bf16.msra.mxu0 %v2332
      %2374 = vmatpush.bf16.msra.mxu0 %v2331
      %2375 = vmatmul.bf16.gmra.mxu0 %v2352
      %v2376 = vpop.f32.mrf.mxu0
      %v2377 = vadd.f32 %v2364, %v2376
      %v2378 = vpop.f32.mrf.mxu0
      %2379 = vdwg.mxu0
      %v2380 = vadd.f32 %v1981, %v2377
      %s2381 = scalar_lea.vmem %s3, 560
      %v2382 = vld [vmem:[%s2381] sm:$0xf]
      %v2383 = vld [vmem:[%s2381 + $0x4] sm:$0xf]
      %v2384 = vld [vmem:[%s2381 + $0x8] sm:$0xf]
      %v2385 = vld [vmem:[%s2381 + $0xc] sm:$0xf]
      %v2386 = vld [vmem:[%s2381 + $0x10] sm:$0xf]
      %v2387 = vld [vmem:[%s2381 + $0x14] sm:$0xf]
      %v2388 = vld [vmem:[%s2381 + $0x18] sm:$0xf]
      %v2389 = vld [vmem:[%s2381 + $0x1c] sm:$0xf]
      %v2390 = vld [vmem:[%s2381 + $0x20] sm:$0xf]
      %v2391 = vld [vmem:[%s2381 + $0x24] sm:$0xf]
      %v2392 = vld [vmem:[%s2381 + $0x28] sm:$0xf]
      %v2393 = vld [vmem:[%s2381 + $0x2c] sm:$0xf]
      %v2394 = vld [vmem:[%s2381 + $0x30] sm:$0xf]
      %v2395 = vld [vmem:[%s2381 + $0x34] sm:$0xf]
      %v2396 = vld [vmem:[%s2381 + $0x38] sm:$0xf]
      %v2397 = vld [vmem:[%s2381 + $0x3c] sm:$0xf]
      %v2398 = vld [vmem:[%s2381 + $0x40] sm:$0xf]
      %v2399 = vld [vmem:[%s2381 + $0x44] sm:$0xf]
      %v2400 = vld [vmem:[%s2381 + $0x48] sm:$0xf]
      %v2401 = vld [vmem:[%s2381 + $0x4c] sm:$0xf]
      %v2402 = vld [vmem:[%s2381 + $0x50] sm:$0xf]
      %v2403 = vld [vmem:[%s2381 + $0x54] sm:$0xf]
      %v2404 = vld [vmem:[%s2381 + $0x58] sm:$0xf]
      %v2405 = vld [vmem:[%s2381 + $0x5c] sm:$0xf]
      %v2406 = vld [vmem:[%s2381 + $0x60] sm:$0xf]
      %v2407 = vld [vmem:[%s2381 + $0x64] sm:$0xf]
      %v2408 = vld [vmem:[%s2381 + $0x68] sm:$0xf]
      %v2409 = vld [vmem:[%s2381 + $0x6c] sm:$0xf]
      %v2438 = vunpack.c.l.b16 %v2382
      %v2439 = vunpack.c.l.b16 %v2383
      %v2440 = vunpack.c.l.b16 %v2384
      %v2441 = vunpack.c.l.b16 %v2385
      %v2442 = vunpack.c.l.b16 %v2386
      %v2443 = vunpack.c.l.b16 %v2387
      %v2444 = vunpack.c.l.b16 %v2388
      %v2445 = vunpack.c.l.b16 %v2389
      %v2446 = vunpack.c.l.b16 %v2390
      %v2447 = vunpack.c.l.b16 %v2391
      %v2448 = vunpack.c.l.b16 %v2392
      %v2449 = vunpack.c.l.b16 %v2393
      %v2450 = vunpack.c.l.b16 %v2394
      %v2451 = vunpack.c.l.b16 %v2395
      %v2452 = vunpack.c.l.b16 %v2396
      %v2453 = vunpack.c.l.b16 %v2397
      %v2454 = vunpack.c.l.b16 %v2398
      %v2455 = vunpack.c.l.b16 %v2399
      %v2456 = vunpack.c.l.b16 %v2400
      %v2457 = vunpack.c.l.b16 %v2401
      %v2458 = vunpack.c.l.b16 %v2402
      %v2459 = vunpack.c.l.b16 %v2403
      %v2460 = vunpack.c.l.b16 %v2404
      %v2461 = vunpack.c.l.b16 %v2405
      %v2462 = vunpack.c.l.b16 %v2406
      %v2463 = vunpack.c.l.b16 %v2407
      %v2464 = vunpack.c.l.b16 %v2408
      %v2465 = vunpack.c.l.b16 %v2409
      %v2466 = vpack.c.b16 %v2439, %v2438
      %v2467 = vpack.c.b16 %v2441, %v2440
      %v2468 = vpack.c.b16 %v2443, %v2442
      %v2469 = vpack.c.b16 %v2445, %v2444
      %v2470 = vpack.c.b16 %v2447, %v2446
      %v2471 = vpack.c.b16 %v2449, %v2448
      %v2472 = vpack.c.b16 %v2451, %v2450
      %v2473 = vpack.c.b16 %v2453, %v2452
      %v2474 = vpack.c.b16 %v2455, %v2454
      %v2475 = vpack.c.b16 %v2457, %v2456
      %v2476 = vpack.c.b16 %v2459, %v2458
      %v2477 = vpack.c.b16 %v2461, %v2460
      %v2478 = vpack.c.b16 %v2463, %v2462
      %v2479 = vpack.c.b16 %v2465, %v2464
      %2494 = vmatpush.bf16.msra.mxu0 %v2473
      %2495 = vmatpush.bf16.msra.mxu0 %v2472
      %2496 = vmatpush.bf16.msra.mxu0 %v2471
      %2497 = vmatpush.bf16.msra.mxu0 %v2470
      %2498 = vmatpush.bf16.msra.mxu0 %v2469
      %2499 = vmatpush.bf16.msra.mxu0 %v2468
      %2500 = vmatpush.bf16.msra.mxu0 %v2467
      %2501 = vmatpush.bf16.msra.mxu0 %v2466
      %2502 = vmatmul.bf16.gmra.mxu0 %v2264
      %v2503 = vpop.f32.mrf.mxu0
      %v2504 = vadd.f32 0.0, %v2503
      %v2505 = vpop.f32.mrf.mxu0
      %2506 = vdwg.mxu0
      %2507 = vmatpush.bf16.msra.mxu0 0
      %2508 = vmatpush.bf16.msra.mxu0 0
      %2509 = vmatpush.bf16.msra.mxu0 %v2479
      %2510 = vmatpush.bf16.msra.mxu0 %v2478
      %2511 = vmatpush.bf16.msra.mxu0 %v2477
      %2512 = vmatpush.bf16.msra.mxu0 %v2476
      %2513 = vmatpush.bf16.msra.mxu0 %v2475
      %2514 = vmatpush.bf16.msra.mxu0 %v2474
      %2515 = vmatmul.bf16.gmra.mxu0 %v2352
      %v2516 = vpop.f32.mrf.mxu0
      %v2517 = vadd.f32 %v2504, %v2516
      %v2518 = vpop.f32.mrf.mxu0
      %2519 = vdwg.mxu0
      %v2520 = vadd.f32 %v2230, %v2517
      %v2521 = vmax.f32 %v2380, %v2520
      %2522 = vmatpush.bf16.msra.mxu0 %v1822
      %2523 = vmatpush.bf16.msra.mxu0 %v1821
      %2524 = vmatpush.bf16.msra.mxu0 %v1820
      %2525 = vmatpush.bf16.msra.mxu0 %v1819
      %2526 = vmatpush.bf16.msra.mxu0 %v1818
      %2527 = vmatpush.bf16.msra.mxu0 %v1817
      %2528 = vmatpush.bf16.msra.mxu0 %v1816
      %2529 = vmatpush.bf16.msra.mxu0 %v1815
      %2530 = vmatmul.bf16.gmra.mxu0 %v2264
      %v2531 = vpop.f32.mrf.mxu0
      %v2532 = vadd.f32 0.0, %v2531
      %v2533 = vpop.f32.mrf.mxu0
      %2534 = vdwg.mxu0
      %2535 = vmatpush.bf16.msra.mxu0 0
      %2536 = vmatpush.bf16.msra.mxu0 0
      %2537 = vmatpush.bf16.msra.mxu0 %v1828
      %2538 = vmatpush.bf16.msra.mxu0 %v1827
      %2539 = vmatpush.bf16.msra.mxu0 %v1826
      %2540 = vmatpush.bf16.msra.mxu0 %v1825
      %2541 = vmatpush.bf16.msra.mxu0 %v1824
      %2542 = vmatpush.bf16.msra.mxu0 %v1823
      %2543 = vmatmul.bf16.gmra.mxu0 %v2352
      %v2544 = vpop.f32.mrf.mxu0
      %v2545 = vadd.f32 %v2532, %v2544
      %v2546 = vpop.f32.mrf.mxu0
      %2547 = vdwg.mxu0
      %2548 = vmatpush.bf16.msra.mxu0 %v1935
      %2549 = vmatpush.bf16.msra.mxu0 %v1934
      %2550 = vmatpush.bf16.msra.mxu0 %v1933
      %2551 = vmatpush.bf16.msra.mxu0 %v1932
      %2552 = vmatpush.bf16.msra.mxu0 %v1931
      %2553 = vmatpush.bf16.msra.mxu0 %v1930
      %2554 = vmatpush.bf16.msra.mxu0 %v1929
      %2555 = vmatpush.bf16.msra.mxu0 %v1928
      %2556 = vmatmul.bf16.gmra.mxu0 %v1753
      %v2557 = vpop.f32.mrf.mxu0
      %v2558 = vadd.f32 %v2545, %v2557
      %v2559 = vpop.f32.mrf.mxu0
      %2560 = vdwg.mxu0
      %2561 = vmatpush.bf16.msra.mxu0 0
      %2562 = vmatpush.bf16.msra.mxu0 0
      %2563 = vmatpush.bf16.msra.mxu0 %v1941
      %2564 = vmatpush.bf16.msra.mxu0 %v1940
      %2565 = vmatpush.bf16.msra.mxu0 %v1939
      %2566 = vmatpush.bf16.msra.mxu0 %v1938
      %2567 = vmatpush.bf16.msra.mxu0 %v1937
      %2568 = vmatpush.bf16.msra.mxu0 %v1936
      %2569 = vmatmul.bf16.gmra.mxu0 %v1844
      %v2570 = vpop.f32.mrf.mxu0
      %v2571 = vadd.f32 %v2558, %v2570
      %v2572 = vpop.f32.mrf.mxu0
      %2573 = vdwg.mxu0
      %2574 = vmatpush.bf16.msra.mxu0 %v2076
      %2575 = vmatpush.bf16.msra.mxu0 %v2075
      %2576 = vmatpush.bf16.msra.mxu0 %v2074
      %2577 = vmatpush.bf16.msra.mxu0 %v2073
      %2578 = vmatpush.bf16.msra.mxu0 %v2072
      %2579 = vmatpush.bf16.msra.mxu0 %v2071
      %2580 = vmatpush.bf16.msra.mxu0 %v2070
      %2581 = vmatpush.bf16.msra.mxu0 %v2069
      %2582 = vmatmul.bf16.gmra.mxu0 %v2264
      %v2583 = vpop.f32.mrf.mxu0
      %v2584 = vadd.f32 0.0, %v2583
      %v2585 = vpop.f32.mrf.mxu0
      %2586 = vdwg.mxu0
      %2587 = vmatpush.bf16.msra.mxu0 0
      %2588 = vmatpush.bf16.msra.mxu0 0
      %2589 = vmatpush.bf16.msra.mxu0 %v2082
      %2590 = vmatpush.bf16.msra.mxu0 %v2081
      %2591 = vmatpush.bf16.msra.mxu0 %v2080
      %2592 = vmatpush.bf16.msra.mxu0 %v2079
      %2593 = vmatpush.bf16.msra.mxu0 %v2078
      %2594 = vmatpush.bf16.msra.mxu0 %v2077
      %2595 = vmatmul.bf16.gmra.mxu0 %v2352
      %v2596 = vpop.f32.mrf.mxu0
      %v2597 = vadd.f32 %v2584, %v2596
      %v2598 = vpop.f32.mrf.mxu0
      %2599 = vdwg.mxu0
      %2600 = vmatpush.bf16.msra.mxu0 %v2186
      %2601 = vmatpush.bf16.msra.mxu0 %v2185
      %2602 = vmatpush.bf16.msra.mxu0 %v2184
      %2603 = vmatpush.bf16.msra.mxu0 %v2183
      %2604 = vmatpush.bf16.msra.mxu0 %v2182
      %2605 = vmatpush.bf16.msra.mxu0 %v2181
      %2606 = vmatpush.bf16.msra.mxu0 %v2180
      %2607 = vmatpush.bf16.msra.mxu0 %v2179
      %2608 = vmatmul.bf16.gmra.mxu0 %v1753
      %v2609 = vpop.f32.mrf.mxu0
      %v2610 = vadd.f32 %v2597, %v2609
      %v2611 = vpop.f32.mrf.mxu0
      %2612 = vdwg.mxu0
      %2613 = vmatpush.bf16.msra.mxu0 0
      %2614 = vmatpush.bf16.msra.mxu0 0
      %2615 = vmatpush.bf16.msra.mxu0 %v2192
      %2616 = vmatpush.bf16.msra.mxu0 %v2191
      %2617 = vmatpush.bf16.msra.mxu0 %v2190
      %2618 = vmatpush.bf16.msra.mxu0 %v2189
      %2619 = vmatpush.bf16.msra.mxu0 %v2188
      %2620 = vmatpush.bf16.msra.mxu0 %v2187
      %2621 = vmatmul.bf16.gmra.mxu0 %v1844
      %v2622 = vpop.f32.mrf.mxu0
      %v2623 = vadd.f32 %v2610, %v2622
      %v2624 = vpop.f32.mrf.mxu0
      %2625 = vdwg.mxu0
      %v2626 = vrot.slane %v1753, 1
      %v2627 = vrot.slane %v1756, 1
      %v2630 = vsel %vm435, %v2627, 0
      %2632 = vmatpush.bf16.msra.mxu0 %v2330
      %2633 = vmatpush.bf16.msra.mxu0 %v2329
      %2634 = vmatpush.bf16.msra.mxu0 %v2328
      %2635 = vmatpush.bf16.msra.mxu0 %v2327
      %2636 = vmatpush.bf16.msra.mxu0 %v2326
      %2637 = vmatpush.bf16.msra.mxu0 %v2325
      %2638 = vmatpush.bf16.msra.mxu0 %v2324
      %2639 = vmatpush.bf16.msra.mxu0 %v2323
      %2640 = vmatmul.bf16.gmra.mxu0 %v2626
      %v2641 = vpop.f32.mrf.mxu0
      %v2642 = vadd.f32 0.0, %v2641
      %v2643 = vpop.f32.mrf.mxu0
      %2644 = vdwg.mxu0
      %2645 = vmatpush.bf16.msra.mxu0 0
      %2646 = vmatpush.bf16.msra.mxu0 0
      %2647 = vmatpush.bf16.msra.mxu0 %v2336
      %2648 = vmatpush.bf16.msra.mxu0 %v2335
      %2649 = vmatpush.bf16.msra.mxu0 %v2334
      %2650 = vmatpush.bf16.msra.mxu0 %v2333
      %2651 = vmatpush.bf16.msra.mxu0 %v2332
      %2652 = vmatpush.bf16.msra.mxu0 %v2331
      %2653 = vmatmul.bf16.gmra.mxu0 %v2630
      %v2654 = vpop.f32.mrf.mxu0
      %v2655 = vadd.f32 %v2642, %v2654
      %v2656 = vpop.f32.mrf.mxu0
      %2657 = vdwg.mxu0
      %v2658 = vadd.f32 %v2571, %v2655
      %2659 = vmatpush.bf16.msra.mxu0 %v2473
      %2660 = vmatpush.bf16.msra.mxu0 %v2472
      %2661 = vmatpush.bf16.msra.mxu0 %v2471
      %2662 = vmatpush.bf16.msra.mxu0 %v2470
      %2663 = vmatpush.bf16.msra.mxu0 %v2469
      %2664 = vmatpush.bf16.msra.mxu0 %v2468
      %2665 = vmatpush.bf16.msra.mxu0 %v2467
      %2666 = vmatpush.bf16.msra.mxu0 %v2466
      %2667 = vmatmul.bf16.gmra.mxu0 %v2626
      %v2668 = vpop.f32.mrf.mxu0
      %v2669 = vadd.f32 0.0, %v2668
      %v2670 = vpop.f32.mrf.mxu0
      %2671 = vdwg.mxu0
      %2672 = vmatpush.bf16.msra.mxu0 0
      %2673 = vmatpush.bf16.msra.mxu0 0
      %2674 = vmatpush.bf16.msra.mxu0 %v2479
      %2675 = vmatpush.bf16.msra.mxu0 %v2478
      %2676 = vmatpush.bf16.msra.mxu0 %v2477
      %2677 = vmatpush.bf16.msra.mxu0 %v2476
      %2678 = vmatpush.bf16.msra.mxu0 %v2475
      %2679 = vmatpush.bf16.msra.mxu0 %v2474
      %2680 = vmatmul.bf16.gmra.mxu0 %v2630
      %v2681 = vpop.f32.mrf.mxu0
      %v2682 = vadd.f32 %v2669, %v2681
      %v2683 = vpop.f32.mrf.mxu0
      %2684 = vdwg.mxu0
      %v2685 = vadd.f32 %v2623, %v2682
      %v2686 = vmax.f32 %v2658, %v2685
      %v2687 = vmax.f32 %v2521, %v2686
      %v2688 = vld [vmem:[%s4] sm:$0x1]
      %v2689 = vadd.f32 %v2687, %v2688
      %vm2690 = vcmp.ge.f32.partialorder %v2689, 0.0
      %v2691 = vmul.f32 %v2689, 0.22916667
      %v2692 = vsel %vm2690, %v2689, %v2691
      %v2693 = vpack.c.bf16 %v2692, %v2692
      %2694 = vmatpush.bf16.msra.mxu0 %v1822
      %2695 = vmatpush.bf16.msra.mxu0 %v1821
      %2696 = vmatpush.bf16.msra.mxu0 %v1820
      %2697 = vmatpush.bf16.msra.mxu0 %v1819
      %2698 = vmatpush.bf16.msra.mxu0 %v1818
      %2699 = vmatpush.bf16.msra.mxu0 %v1817
      %2700 = vmatpush.bf16.msra.mxu0 %v1816
      %2701 = vmatpush.bf16.msra.mxu0 %v1815
      %2702 = vmatmul.bf16.gmra.mxu0 %v2626
      %v2703 = vpop.f32.mrf.mxu0
      %v2704 = vadd.f32 0.0, %v2703
      %v2705 = vpop.f32.mrf.mxu0
      %2706 = vdwg.mxu0
      %2707 = vmatpush.bf16.msra.mxu0 0
      %2708 = vmatpush.bf16.msra.mxu0 0
      %2709 = vmatpush.bf16.msra.mxu0 %v1828
      %2710 = vmatpush.bf16.msra.mxu0 %v1827
      %2711 = vmatpush.bf16.msra.mxu0 %v1826
      %2712 = vmatpush.bf16.msra.mxu0 %v1825
      %2713 = vmatpush.bf16.msra.mxu0 %v1824
      %2714 = vmatpush.bf16.msra.mxu0 %v1823
      %2715 = vmatmul.bf16.gmra.mxu0 %v2630
      %v2716 = vpop.f32.mrf.mxu0
      %v2717 = vadd.f32 %v2704, %v2716
      %v2718 = vpop.f32.mrf.mxu0
      %2719 = vdwg.mxu0
      %2720 = vmatpush.bf16.msra.mxu0 %v1935
      %2721 = vmatpush.bf16.msra.mxu0 %v1934
      %2722 = vmatpush.bf16.msra.mxu0 %v1933
      %2723 = vmatpush.bf16.msra.mxu0 %v1932
      %2724 = vmatpush.bf16.msra.mxu0 %v1931
      %2725 = vmatpush.bf16.msra.mxu0 %v1930
      %2726 = vmatpush.bf16.msra.mxu0 %v1929
      %2727 = vmatpush.bf16.msra.mxu0 %v1928
      %2728 = vmatmul.bf16.gmra.mxu0 %v2264
      %v2729 = vpop.f32.mrf.mxu0
      %v2730 = vadd.f32 %v2717, %v2729
      %v2731 = vpop.f32.mrf.mxu0
      %2732 = vdwg.mxu0
      %2733 = vmatpush.bf16.msra.mxu0 0
      %2734 = vmatpush.bf16.msra.mxu0 0
      %2735 = vmatpush.bf16.msra.mxu0 %v1941
      %2736 = vmatpush.bf16.msra.mxu0 %v1940
      %2737 = vmatpush.bf16.msra.mxu0 %v1939
      %2738 = vmatpush.bf16.msra.mxu0 %v1938
      %2739 = vmatpush.bf16.msra.mxu0 %v1937
      %2740 = vmatpush.bf16.msra.mxu0 %v1936
      %2741 = vmatmul.bf16.gmra.mxu0 %v2352
      %v2742 = vpop.f32.mrf.mxu0
      %v2743 = vadd.f32 %v2730, %v2742
      %v2744 = vpop.f32.mrf.mxu0
      %2745 = vdwg.mxu0
      %2746 = vmatpush.bf16.msra.mxu0 %v2076
      %2747 = vmatpush.bf16.msra.mxu0 %v2075
      %2748 = vmatpush.bf16.msra.mxu0 %v2074
      %2749 = vmatpush.bf16.msra.mxu0 %v2073
      %2750 = vmatpush.bf16.msra.mxu0 %v2072
      %2751 = vmatpush.bf16.msra.mxu0 %v2071
      %2752 = vmatpush.bf16.msra.mxu0 %v2070
      %2753 = vmatpush.bf16.msra.mxu0 %v2069
      %2754 = vmatmul.bf16.gmra.mxu0 %v2626
      %v2755 = vpop.f32.mrf.mxu0
      %v2756 = vadd.f32 0.0, %v2755
      %v2757 = vpop.f32.mrf.mxu0
      %2758 = vdwg.mxu0
      %2759 = vmatpush.bf16.msra.mxu0 0
      %2760 = vmatpush.bf16.msra.mxu0 0
      %2761 = vmatpush.bf16.msra.mxu0 %v2082
      %2762 = vmatpush.bf16.msra.mxu0 %v2081
      %2763 = vmatpush.bf16.msra.mxu0 %v2080
      %2764 = vmatpush.bf16.msra.mxu0 %v2079
      %2765 = vmatpush.bf16.msra.mxu0 %v2078
      %2766 = vmatpush.bf16.msra.mxu0 %v2077
      %2767 = vmatmul.bf16.gmra.mxu0 %v2630
      %v2768 = vpop.f32.mrf.mxu0
      %v2769 = vadd.f32 %v2756, %v2768
      %v2770 = vpop.f32.mrf.mxu0
      %2771 = vdwg.mxu0
      %2772 = vmatpush.bf16.msra.mxu0 %v2186
      %2773 = vmatpush.bf16.msra.mxu0 %v2185
      %2774 = vmatpush.bf16.msra.mxu0 %v2184
      %2775 = vmatpush.bf16.msra.mxu0 %v2183
      %2776 = vmatpush.bf16.msra.mxu0 %v2182
      %2777 = vmatpush.bf16.msra.mxu0 %v2181
      %2778 = vmatpush.bf16.msra.mxu0 %v2180
      %2779 = vmatpush.bf16.msra.mxu0 %v2179
      %2780 = vmatmul.bf16.gmra.mxu0 %v2264
      %v2781 = vpop.f32.mrf.mxu0
      %v2782 = vadd.f32 %v2769, %v2781
      %v2783 = vpop.f32.mrf.mxu0
      %2784 = vdwg.mxu0
      %2785 = vmatpush.bf16.msra.mxu0 0
      %2786 = vmatpush.bf16.msra.mxu0 0
      %2787 = vmatpush.bf16.msra.mxu0 %v2192
      %2788 = vmatpush.bf16.msra.mxu0 %v2191
      %2789 = vmatpush.bf16.msra.mxu0 %v2190
      %2790 = vmatpush.bf16.msra.mxu0 %v2189
      %2791 = vmatpush.bf16.msra.mxu0 %v2188
      %2792 = vmatpush.bf16.msra.mxu0 %v2187
      %2793 = vmatmul.bf16.gmra.mxu0 %v2352
      %v2794 = vpop.f32.mrf.mxu0
      %v2795 = vadd.f32 %v2782, %v2794
      %v2796 = vpop.f32.mrf.mxu0
      %2797 = vdwg.mxu0
      %v2798 = vrot.slane %v1664, 2
      %v2799 = vrot.slane %v1665, 2
      %v2802 = vsel %vm435, %v2799, 0
      %2804 = vmatpush.bf16.msra.mxu0 %v2330
      %2805 = vmatpush.bf16.msra.mxu0 %v2329
      %2806 = vmatpush.bf16.msra.mxu0 %v2328
      %2807 = vmatpush.bf16.msra.mxu0 %v2327
      %2808 = vmatpush.bf16.msra.mxu0 %v2326
      %2809 = vmatpush.bf16.msra.mxu0 %v2325
      %2810 = vmatpush.bf16.msra.mxu0 %v2324
      %2811 = vmatpush.bf16.msra.mxu0 %v2323
      %2812 = vmatmul.bf16.gmra.mxu0 %v2798
      %v2813 = vpop.f32.mrf.mxu0
      %v2814 = vadd.f32 0.0, %v2813
      %v2815 = vpop.f32.mrf.mxu0
      %2816 = vdwg.mxu0
      %2817 = vmatpush.bf16.msra.mxu0 0
      %2818 = vmatpush.bf16.msra.mxu0 0
      %2819 = vmatpush.bf16.msra.mxu0 %v2336
      %2820 = vmatpush.bf16.msra.mxu0 %v2335
      %2821 = vmatpush.bf16.msra.mxu0 %v2334
      %2822 = vmatpush.bf16.msra.mxu0 %v2333
      %2823 = vmatpush.bf16.msra.mxu0 %v2332
      %2824 = vmatpush.bf16.msra.mxu0 %v2331
      %2825 = vmatmul.bf16.gmra.mxu0 %v2802
      %v2826 = vpop.f32.mrf.mxu0
      %v2827 = vadd.f32 %v2814, %v2826
      %v2828 = vpop.f32.mrf.mxu0
      %2829 = vdwg.mxu0
      %v2830 = vadd.f32 %v2743, %v2827
      %2831 = vmatpush.bf16.msra.mxu0 %v2473
      %2832 = vmatpush.bf16.msra.mxu0 %v2472
      %2833 = vmatpush.bf16.msra.mxu0 %v2471
      %2834 = vmatpush.bf16.msra.mxu0 %v2470
      %2835 = vmatpush.bf16.msra.mxu0 %v2469
      %2836 = vmatpush.bf16.msra.mxu0 %v2468
      %2837 = vmatpush.bf16.msra.mxu0 %v2467
      %2838 = vmatpush.bf16.msra.mxu0 %v2466
      %2839 = vmatmul.bf16.gmra.mxu0 %v2798
      %v2840 = vpop.f32.mrf.mxu0
      %v2841 = vadd.f32 0.0, %v2840
      %v2842 = vpop.f32.mrf.mxu0
      %2843 = vdwg.mxu0
      %2844 = vmatpush.bf16.msra.mxu0 0
      %2845 = vmatpush.bf16.msra.mxu0 0
      %2846 = vmatpush.bf16.msra.mxu0 %v2479
      %2847 = vmatpush.bf16.msra.mxu0 %v2478
      %2848 = vmatpush.bf16.msra.mxu0 %v2477
      %2849 = vmatpush.bf16.msra.mxu0 %v2476
      %2850 = vmatpush.bf16.msra.mxu0 %v2475
      %2851 = vmatpush.bf16.msra.mxu0 %v2474
      %2852 = vmatmul.bf16.gmra.mxu0 %v2802
      %v2853 = vpop.f32.mrf.mxu0
      %v2854 = vadd.f32 %v2841, %v2853
      %v2855 = vpop.f32.mrf.mxu0
      %2856 = vdwg.mxu0
      %v2857 = vadd.f32 %v2795, %v2854
      %v2858 = vmax.f32 %v2830, %v2857
      %2859 = vmatpush.bf16.msra.mxu0 %v1822
      %2860 = vmatpush.bf16.msra.mxu0 %v1821
      %2861 = vmatpush.bf16.msra.mxu0 %v1820
      %2862 = vmatpush.bf16.msra.mxu0 %v1819
      %2863 = vmatpush.bf16.msra.mxu0 %v1818
      %2864 = vmatpush.bf16.msra.mxu0 %v1817
      %2865 = vmatpush.bf16.msra.mxu0 %v1816
      %2866 = vmatpush.bf16.msra.mxu0 %v1815
      %2867 = vmatmul.bf16.gmra.mxu0 %v2798
      %v2868 = vpop.f32.mrf.mxu0
      %v2869 = vadd.f32 0.0, %v2868
      %v2870 = vpop.f32.mrf.mxu0
      %2871 = vdwg.mxu0
      %2872 = vmatpush.bf16.msra.mxu0 0
      %2873 = vmatpush.bf16.msra.mxu0 0
      %2874 = vmatpush.bf16.msra.mxu0 %v1828
      %2875 = vmatpush.bf16.msra.mxu0 %v1827
      %2876 = vmatpush.bf16.msra.mxu0 %v1826
      %2877 = vmatpush.bf16.msra.mxu0 %v1825
      %2878 = vmatpush.bf16.msra.mxu0 %v1824
      %2879 = vmatpush.bf16.msra.mxu0 %v1823
      %2880 = vmatmul.bf16.gmra.mxu0 %v2802
      %v2881 = vpop.f32.mrf.mxu0
      %v2882 = vadd.f32 %v2869, %v2881
      %v2883 = vpop.f32.mrf.mxu0
      %2884 = vdwg.mxu0
      %2885 = vmatpush.bf16.msra.mxu0 %v1935
      %2886 = vmatpush.bf16.msra.mxu0 %v1934
      %2887 = vmatpush.bf16.msra.mxu0 %v1933
      %2888 = vmatpush.bf16.msra.mxu0 %v1932
      %2889 = vmatpush.bf16.msra.mxu0 %v1931
      %2890 = vmatpush.bf16.msra.mxu0 %v1930
      %2891 = vmatpush.bf16.msra.mxu0 %v1929
      %2892 = vmatpush.bf16.msra.mxu0 %v1928
      %2893 = vmatmul.bf16.gmra.mxu0 %v2626
      %v2894 = vpop.f32.mrf.mxu0
      %v2895 = vadd.f32 %v2882, %v2894
      %v2896 = vpop.f32.mrf.mxu0
      %2897 = vdwg.mxu0
      %2898 = vmatpush.bf16.msra.mxu0 0
      %2899 = vmatpush.bf16.msra.mxu0 0
      %2900 = vmatpush.bf16.msra.mxu0 %v1941
      %2901 = vmatpush.bf16.msra.mxu0 %v1940
      %2902 = vmatpush.bf16.msra.mxu0 %v1939
      %2903 = vmatpush.bf16.msra.mxu0 %v1938
      %2904 = vmatpush.bf16.msra.mxu0 %v1937
      %2905 = vmatpush.bf16.msra.mxu0 %v1936
      %2906 = vmatmul.bf16.gmra.mxu0 %v2630
      %v2907 = vpop.f32.mrf.mxu0
      %v2908 = vadd.f32 %v2895, %v2907
      %v2909 = vpop.f32.mrf.mxu0
      %2910 = vdwg.mxu0
      %2911 = vmatpush.bf16.msra.mxu0 %v2076
      %2912 = vmatpush.bf16.msra.mxu0 %v2075
      %2913 = vmatpush.bf16.msra.mxu0 %v2074
      %2914 = vmatpush.bf16.msra.mxu0 %v2073
      %2915 = vmatpush.bf16.msra.mxu0 %v2072
      %2916 = vmatpush.bf16.msra.mxu0 %v2071
      %2917 = vmatpush.bf16.msra.mxu0 %v2070
      %2918 = vmatpush.bf16.msra.mxu0 %v2069
      %2919 = vmatmul.bf16.gmra.mxu0 %v2798
      %v2920 = vpop.f32.mrf.mxu0
      %v2921 = vadd.f32 0.0, %v2920
      %v2922 = vpop.f32.mrf.mxu0
      %2923 = vdwg.mxu0
      %2924 = vmatpush.bf16.msra.mxu0 0
      %2925 = vmatpush.bf16.msra.mxu0 0
      %2926 = vmatpush.bf16.msra.mxu0 %v2082
      %2927 = vmatpush.bf16.msra.mxu0 %v2081
      %2928 = vmatpush.bf16.msra.mxu0 %v2080
      %2929 = vmatpush.bf16.msra.mxu0 %v2079
      %2930 = vmatpush.bf16.msra.mxu0 %v2078
      %2931 = vmatpush.bf16.msra.mxu0 %v2077
      %2932 = vmatmul.bf16.gmra.mxu0 %v2802
      %v2933 = vpop.f32.mrf.mxu0
      %v2934 = vadd.f32 %v2921, %v2933
      %v2935 = vpop.f32.mrf.mxu0
      %2936 = vdwg.mxu0
      %2937 = vmatpush.bf16.msra.mxu0 %v2186
      %2938 = vmatpush.bf16.msra.mxu0 %v2185
      %2939 = vmatpush.bf16.msra.mxu0 %v2184
      %2940 = vmatpush.bf16.msra.mxu0 %v2183
      %2941 = vmatpush.bf16.msra.mxu0 %v2182
      %2942 = vmatpush.bf16.msra.mxu0 %v2181
      %2943 = vmatpush.bf16.msra.mxu0 %v2180
      %2944 = vmatpush.bf16.msra.mxu0 %v2179
      %2945 = vmatmul.bf16.gmra.mxu0 %v2626
      %v2946 = vpop.f32.mrf.mxu0
      %v2947 = vadd.f32 %v2934, %v2946
      %v2948 = vpop.f32.mrf.mxu0
      %2949 = vdwg.mxu0
      %2950 = vmatpush.bf16.msra.mxu0 0
      %2951 = vmatpush.bf16.msra.mxu0 0
      %2952 = vmatpush.bf16.msra.mxu0 %v2192
      %2953 = vmatpush.bf16.msra.mxu0 %v2191
      %2954 = vmatpush.bf16.msra.mxu0 %v2190
      %2955 = vmatpush.bf16.msra.mxu0 %v2189
      %2956 = vmatpush.bf16.msra.mxu0 %v2188
      %2957 = vmatpush.bf16.msra.mxu0 %v2187
      %2958 = vmatmul.bf16.gmra.mxu0 %v2630
      %v2959 = vpop.f32.mrf.mxu0
      %v2960 = vadd.f32 %v2947, %v2959
      %v2961 = vpop.f32.mrf.mxu0
      %2962 = vdwg.mxu0
      %v2963 = vrot.slane %v1753, 2
      %v2964 = vrot.slane %v1756, 2
      %v2967 = vsel %vm435, %v2964, 0
      %2969 = vmatpush.bf16.msra.mxu0 %v2330
      %2970 = vmatpush.bf16.msra.mxu0 %v2329
      %2971 = vmatpush.bf16.msra.mxu0 %v2328
      %2972 = vmatpush.bf16.msra.mxu0 %v2327
      %2973 = vmatpush.bf16.msra.mxu0 %v2326
      %2974 = vmatpush.bf16.msra.mxu0 %v2325
      %2975 = vmatpush.bf16.msra.mxu0 %v2324
      %2976 = vmatpush.bf16.msra.mxu0 %v2323
      %2977 = vmatmul.bf16.gmra.mxu0 %v2963
      %v2978 = vpop.f32.mrf.mxu0
      %v2979 = vadd.f32 0.0, %v2978
      %v2980 = vpop.f32.mrf.mxu0
      %2981 = vdwg.mxu0
      %2982 = vmatpush.bf16.msra.mxu0 0
      %2983 = vmatpush.bf16.msra.mxu0 0
      %2984 = vmatpush.bf16.msra.mxu0 %v2336
      %2985 = vmatpush.bf16.msra.mxu0 %v2335
      %2986 = vmatpush.bf16.msra.mxu0 %v2334
      %2987 = vmatpush.bf16.msra.mxu0 %v2333
      %2988 = vmatpush.bf16.msra.mxu0 %v2332
      %2989 = vmatpush.bf16.msra.mxu0 %v2331
      %2990 = vmatmul.bf16.gmra.mxu0 %v2967
      %v2991 = vpop.f32.mrf.mxu0
      %v2992 = vadd.f32 %v2979, %v2991
      %v2993 = vpop.f32.mrf.mxu0
      %2994 = vdwg.mxu0
      %v2995 = vadd.f32 %v2908, %v2992
      %2996 = vmatpush.bf16.msra.mxu0 %v2473
      %2997 = vmatpush.bf16.msra.mxu0 %v2472
      %2998 = vmatpush.bf16.msra.mxu0 %v2471
      %2999 = vmatpush.bf16.msra.mxu0 %v2470
      %3000 = vmatpush.bf16.msra.mxu0 %v2469
      %3001 = vmatpush.bf16.msra.mxu0 %v2468
      %3002 = vmatpush.bf16.msra.mxu0 %v2467
      %3003 = vmatpush.bf16.msra.mxu0 %v2466
      %3004 = vmatmul.bf16.gmra.mxu0 %v2963
      %v3005 = vpop.f32.mrf.mxu0
      %v3006 = vadd.f32 0.0, %v3005
      %v3007 = vpop.f32.mrf.mxu0
      %3008 = vdwg.mxu0
      %3009 = vmatpush.bf16.msra.mxu0 0
      %3010 = vmatpush.bf16.msra.mxu0 0
      %3011 = vmatpush.bf16.msra.mxu0 %v2479
      %3012 = vmatpush.bf16.msra.mxu0 %v2478
      %3013 = vmatpush.bf16.msra.mxu0 %v2477
      %3014 = vmatpush.bf16.msra.mxu0 %v2476
      %3015 = vmatpush.bf16.msra.mxu0 %v2475
      %3016 = vmatpush.bf16.msra.mxu0 %v2474
      %3017 = vmatmul.bf16.gmra.mxu0 %v2967
      %v3018 = vpop.f32.mrf.mxu0
      %v3019 = vadd.f32 %v3006, %v3018
      %v3020 = vpop.f32.mrf.mxu0
      %3021 = vdwg.mxu0
      %v3022 = vadd.f32 %v2960, %v3019
      %v3023 = vmax.f32 %v2995, %v3022
      %v3024 = vmax.f32 %v2858, %v3023
      %v3025 = vadd.f32 %v3024, %v2688
      %vm3026 = vcmp.ge.f32.partialorder %v3025, 0.0
      %v3027 = vmul.f32 %v3025, 0.22916667
      %v3028 = vsel %vm3026, %v3025, %v3027
      %v3029 = vpack.c.bf16 %v3028, %v3028
      %v3030 = vld [vmem:[%s5] sm:$0xff]
      %v3031 = vld [vmem:[%s5 + $0x8] sm:$0xff]
      %v3032 = vld [vmem:[%s5 + $0x10] sm:$0xff]
      %v3033 = vld [vmem:[%s5 + $0x18] sm:$0xff]
      %v3034 = vld [vmem:[%s5 + $0x20] sm:$0xff]
      %v3035 = vld [vmem:[%s5 + $0x28] sm:$0xff]
      %v3036 = vld [vmem:[%s5 + $0x30] sm:$0xff]
      %v3037 = vld [vmem:[%s5 + $0x38] sm:$0xff]
      %v3038 = vld [vmem:[%s5 + $0x40] sm:$0xff]
      %v3039 = vld [vmem:[%s5 + $0x48] sm:$0xff]
      %v3040 = vld [vmem:[%s5 + $0x50] sm:$0xff]
      %v3041 = vld [vmem:[%s5 + $0x58] sm:$0xff]
      %v3042 = vld [vmem:[%s5 + $0x60] sm:$0xff]
      %v3043 = vld [vmem:[%s5 + $0x68] sm:$0xff]
      %v3044 = vld [vmem:[%s5 + $0x70] sm:$0xff]
      %v3045 = vld [vmem:[%s5 + $0x78] sm:$0xff]
      %s3046 = scalar_lea.vmem %s5, 128
      %v3047 = vld [vmem:[%s3046] sm:$0xff]
      %v3048 = vld [vmem:[%s3046 + $0x8] sm:$0xff]
      %v3049 = vld [vmem:[%s3046 + $0x10] sm:$0xff]
      %v3050 = vld [vmem:[%s3046 + $0x18] sm:$0xff]
      %v3051 = vld [vmem:[%s3046 + $0x20] sm:$0xff]
      %v3052 = vld [vmem:[%s3046 + $0x28] sm:$0xff]
      %v3053 = vld [vmem:[%s3046 + $0x30] sm:$0xff]
      %v3054 = vld [vmem:[%s3046 + $0x38] sm:$0xff]
      %v3055 = vld [vmem:[%s3046 + $0x40] sm:$0xff]
      %v3056 = vld [vmem:[%s3046 + $0x48] sm:$0xff]
      %v3057 = vld [vmem:[%s3046 + $0x50] sm:$0xff]
      %v3058 = vld [vmem:[%s3046 + $0x58] sm:$0xff]
      %v3059 = vld [vmem:[%s3046 + $0x60] sm:$0xff]
      %v3060 = vld [vmem:[%s3046 + $0x68] sm:$0xff]
      %v3061 = vld [vmem:[%s3046 + $0x70] sm:$0xff]
      %v3062 = vld [vmem:[%s3046 + $0x78] sm:$0xff]
      %v3079 = vunpack.c.l.b16 %v3047
      %v3080 = vunpack.c.h.b16 %v3047
      %v3081 = vunpack.c.l.b16 %v3048
      %v3082 = vunpack.c.h.b16 %v3048
      %v3083 = vunpack.c.l.b16 %v3049
      %v3084 = vunpack.c.h.b16 %v3049
      %v3085 = vunpack.c.l.b16 %v3050
      %v3086 = vunpack.c.h.b16 %v3050
      %v3087 = vunpack.c.l.b16 %v3051
      %v3088 = vunpack.c.h.b16 %v3051
      %v3089 = vunpack.c.l.b16 %v3052
      %v3090 = vunpack.c.h.b16 %v3052
      %v3091 = vunpack.c.l.b16 %v3053
      %v3092 = vunpack.c.h.b16 %v3053
      %v3093 = vunpack.c.l.b16 %v3054
      %v3094 = vunpack.c.h.b16 %v3054
      %v3095 = vunpack.c.l.b16 %v3055
      %v3096 = vunpack.c.h.b16 %v3055
      %v3097 = vunpack.c.l.b16 %v3056
      %v3098 = vunpack.c.h.b16 %v3056
      %v3099 = vunpack.c.l.b16 %v3057
      %v3100 = vunpack.c.h.b16 %v3057
      %v3101 = vunpack.c.l.b16 %v3058
      %v3102 = vunpack.c.h.b16 %v3058
      %v3103 = vunpack.c.l.b16 %v3059
      %v3104 = vunpack.c.h.b16 %v3059
      %v3105 = vunpack.c.l.b16 %v3060
      %v3106 = vunpack.c.h.b16 %v3060
      %v3107 = vunpack.c.l.b16 %v3061
      %v3108 = vunpack.c.h.b16 %v3061
      %v3109 = vunpack.c.l.b16 %v3062
      %v3110 = vunpack.c.h.b16 %v3062
      %v3111 = vpack.c.b16 %v3081, %v3079
      %v3112 = vpack.c.b16 %v3082, %v3080
      %v3113 = vpack.c.b16 %v3085, %v3083
      %v3114 = vpack.c.b16 %v3086, %v3084
      %v3115 = vpack.c.b16 %v3089, %v3087
      %v3116 = vpack.c.b16 %v3090, %v3088
      %v3117 = vpack.c.b16 %v3093, %v3091
      %v3118 = vpack.c.b16 %v3094, %v3092
      %v3119 = vpack.c.b16 %v3097, %v3095
      %v3120 = vpack.c.b16 %v3098, %v3096
      %v3121 = vpack.c.b16 %v3101, %v3099
      %v3122 = vpack.c.b16 %v3102, %v3100
      %v3123 = vpack.c.b16 %v3105, %v3103
      %v3124 = vpack.c.b16 %v3106, %v3104
      %v3125 = vpack.c.b16 %v3109, %v3107
      %v3126 = vpack.c.b16 %v3110, %v3108
      %3143 = vmatpush.bf16.msra.mxu0 %v3125
      %3144 = vmatpush.bf16.msra.mxu0 %v3123
      %3145 = vmatpush.bf16.msra.mxu0 %v3121
      %3146 = vmatpush.bf16.msra.mxu0 %v3119
      %3147 = vmatpush.bf16.msra.mxu0 %v3117
      %3148 = vmatpush.bf16.msra.mxu0 %v3115
      %3149 = vmatpush.bf16.msra.mxu0 %v3113
      %3150 = vmatpush.bf16.msra.mxu0 %v3111
      %3151 = vmatmul.bf16.gmra.mxu0 %v3029
      %v3152 = vpop.f32.mrf.mxu0
      %v3153 = vadd.f32 0.0, %v3152
      %v3154 = vpop.f32.mrf.mxu0
      %3155 = vdwg.mxu0
      %3156 = vmatpush.bf16.msra.mxu0 %v3126
      %3157 = vmatpush.bf16.msra.mxu0 %v3124
      %3158 = vmatpush.bf16.msra.mxu0 %v3122
      %3159 = vmatpush.bf16.msra.mxu0 %v3120
      %3160 = vmatpush.bf16.msra.mxu0 %v3118
      %3161 = vmatpush.bf16.msra.mxu0 %v3116
      %3162 = vmatpush.bf16.msra.mxu0 %v3114
      %3163 = vmatpush.bf16.msra.mxu0 %v3112
      %3164 = vmatmul.bf16.gmra.mxu0 %v3029
      %v3165 = vpop.f32.mrf.mxu0
      %v3166 = vadd.f32 0.0, %v3165
      %v3167 = vpop.f32.mrf.mxu0
      %3168 = vdwg.mxu0
      %v3185 = vunpack.c.l.b16 %v3030
      %v3186 = vunpack.c.h.b16 %v3030
      %v3187 = vunpack.c.l.b16 %v3031
      %v3188 = vunpack.c.h.b16 %v3031
      %v3189 = vunpack.c.l.b16 %v3032
      %v3190 = vunpack.c.h.b16 %v3032
      %v3191 = vunpack.c.l.b16 %v3033
      %v3192 = vunpack.c.h.b16 %v3033
      %v3193 = vunpack.c.l.b16 %v3034
      %v3194 = vunpack.c.h.b16 %v3034
      %v3195 = vunpack.c.l.b16 %v3035
      %v3196 = vunpack.c.h.b16 %v3035
      %v3197 = vunpack.c.l.b16 %v3036
      %v3198 = vunpack.c.h.b16 %v3036
      %v3199 = vunpack.c.l.b16 %v3037
      %v3200 = vunpack.c.h.b16 %v3037
      %v3201 = vunpack.c.l.b16 %v3038
      %v3202 = vunpack.c.h.b16 %v3038
      %v3203 = vunpack.c.l.b16 %v3039
      %v3204 = vunpack.c.h.b16 %v3039
      %v3205 = vunpack.c.l.b16 %v3040
      %v3206 = vunpack.c.h.b16 %v3040
      %v3207 = vunpack.c.l.b16 %v3041
      %v3208 = vunpack.c.h.b16 %v3041
      %v3209 = vunpack.c.l.b16 %v3042
      %v3210 = vunpack.c.h.b16 %v3042
      %v3211 = vunpack.c.l.b16 %v3043
      %v3212 = vunpack.c.h.b16 %v3043
      %v3213 = vunpack.c.l.b16 %v3044
      %v3214 = vunpack.c.h.b16 %v3044
      %v3215 = vunpack.c.l.b16 %v3045
      %v3216 = vunpack.c.h.b16 %v3045
      %v3217 = vpack.c.b16 %v3187, %v3185
      %v3218 = vpack.c.b16 %v3188, %v3186
      %v3219 = vpack.c.b16 %v3191, %v3189
      %v3220 = vpack.c.b16 %v3192, %v3190
      %v3221 = vpack.c.b16 %v3195, %v3193
      %v3222 = vpack.c.b16 %v3196, %v3194
      %v3223 = vpack.c.b16 %v3199, %v3197
      %v3224 = vpack.c.b16 %v3200, %v3198
      %v3225 = vpack.c.b16 %v3203, %v3201
      %v3226 = vpack.c.b16 %v3204, %v3202
      %v3227 = vpack.c.b16 %v3207, %v3205
      %v3228 = vpack.c.b16 %v3208, %v3206
      %v3229 = vpack.c.b16 %v3211, %v3209
      %v3230 = vpack.c.b16 %v3212, %v3210
      %v3231 = vpack.c.b16 %v3215, %v3213
      %v3232 = vpack.c.b16 %v3216, %v3214
      %3249 = vmatpush.bf16.msra.mxu0 %v3231
      %3250 = vmatpush.bf16.msra.mxu0 %v3229
      %3251 = vmatpush.bf16.msra.mxu0 %v3227
      %3252 = vmatpush.bf16.msra.mxu0 %v3225
      %3253 = vmatpush.bf16.msra.mxu0 %v3223
      %3254 = vmatpush.bf16.msra.mxu0 %v3221
      %3255 = vmatpush.bf16.msra.mxu0 %v3219
      %3256 = vmatpush.bf16.msra.mxu0 %v3217
      %3257 = vmatmul.bf16.gmra.mxu0 %v2693
      %v3258 = vpop.f32.mrf.mxu0
      %v3259 = vadd.f32 %v3153, %v3258
      %v3260 = vpop.f32.mrf.mxu0
      %3261 = vdwg.mxu0
      %3262 = vmatpush.bf16.msra.mxu0 %v3232
      %3263 = vmatpush.bf16.msra.mxu0 %v3230
      %3264 = vmatpush.bf16.msra.mxu0 %v3228
      %3265 = vmatpush.bf16.msra.mxu0 %v3226
      %3266 = vmatpush.bf16.msra.mxu0 %v3224
      %3267 = vmatpush.bf16.msra.mxu0 %v3222
      %3268 = vmatpush.bf16.msra.mxu0 %v3220
      %3269 = vmatpush.bf16.msra.mxu0 %v3218
      %3270 = vmatmul.bf16.gmra.mxu0 %v2693
      %v3271 = vpop.f32.mrf.mxu0
      %v3272 = vadd.f32 %v3166, %v3271
      %v3273 = vpop.f32.mrf.mxu0
      %3274 = vdwg.mxu0
      %v3275 = vld [vmem:[%s6] sm:$0x3]
      %v3277 = vperm.slane %v3275, 0
      %v3278 = vperm.slane %v3275, 1
      %v3281 = vadd.f32 %v3259, %v3277
      %v3282 = vadd.f32 %v3272, %v3278
      %v3283 = vmax.f32 %v3281, 0.0
      %v3284 = vmax.f32 %v3282, 0.0
      %v3285 = vpack.c.bf16 %v3283, %v3283
      %v3286 = vpack.c.bf16 %v3284, %v3284
      %v3287 = vld [vmem:[%s7] sm:$0xf]
      %v3288 = vld [vmem:[%s7 + $0x4] sm:$0xf]
      %v3289 = vld [vmem:[%s7 + $0x8] sm:$0xf]
      %v3290 = vld [vmem:[%s7 + $0xc] sm:$0xf]
      %v3291 = vld [vmem:[%s7 + $0x10] sm:$0xf]
      %v3292 = vld [vmem:[%s7 + $0x14] sm:$0xf]
      %v3293 = vld [vmem:[%s7 + $0x18] sm:$0xf]
      %v3294 = vld [vmem:[%s7 + $0x1c] sm:$0xf]
      %v3295 = vld [vmem:[%s7 + $0x20] sm:$0xf]
      %v3296 = vld [vmem:[%s7 + $0x24] sm:$0xf]
      %v3297 = vld [vmem:[%s7 + $0x28] sm:$0xf]
      %v3298 = vld [vmem:[%s7 + $0x2c] sm:$0xf]
      %v3299 = vld [vmem:[%s7 + $0x30] sm:$0xf]
      %v3300 = vld [vmem:[%s7 + $0x34] sm:$0xf]
      %v3301 = vld [vmem:[%s7 + $0x38] sm:$0xf]
      %v3302 = vld [vmem:[%s7 + $0x3c] sm:$0xf]
      %v3303 = vld [vmem:[%s7 + $0x40] sm:$0xf]
      %v3304 = vld [vmem:[%s7 + $0x44] sm:$0xf]
      %v3305 = vld [vmem:[%s7 + $0x48] sm:$0xf]
      %v3306 = vld [vmem:[%s7 + $0x4c] sm:$0xf]
      %v3307 = vld [vmem:[%s7 + $0x50] sm:$0xf]
      %v3308 = vld [vmem:[%s7 + $0x54] sm:$0xf]
      %v3309 = vld [vmem:[%s7 + $0x58] sm:$0xf]
      %v3310 = vld [vmem:[%s7 + $0x5c] sm:$0xf]
      %v3311 = vld [vmem:[%s7 + $0x60] sm:$0xf]
      %v3312 = vld [vmem:[%s7 + $0x64] sm:$0xf]
      %v3313 = vld [vmem:[%s7 + $0x68] sm:$0xf]
      %v3314 = vld [vmem:[%s7 + $0x6c] sm:$0xf]
      %v3315 = vld [vmem:[%s7 + $0x70] sm:$0xf]
      %v3316 = vld [vmem:[%s7 + $0x74] sm:$0xf]
      %v3317 = vld [vmem:[%s7 + $0x78] sm:$0xf]
      %v3318 = vld [vmem:[%s7 + $0x7c] sm:$0xf]
      %v3319 = vld [vmem:[%s8] sm:$0x1]
      %v3352 = vunpack.c.l.b16 %v3287
      %v3353 = vunpack.c.l.b16 %v3288
      %v3354 = vunpack.c.l.b16 %v3289
      %v3355 = vunpack.c.l.b16 %v3290
      %v3356 = vunpack.c.l.b16 %v3291
      %v3357 = vunpack.c.l.b16 %v3292
      %v3358 = vunpack.c.l.b16 %v3293
      %v3359 = vunpack.c.l.b16 %v3294
      %v3360 = vunpack.c.l.b16 %v3295
      %v3361 = vunpack.c.l.b16 %v3296
      %v3362 = vunpack.c.l.b16 %v3297
      %v3363 = vunpack.c.l.b16 %v3298
      %v3364 = vunpack.c.l.b16 %v3299
      %v3365 = vunpack.c.l.b16 %v3300
      %v3366 = vunpack.c.l.b16 %v3301
      %v3367 = vunpack.c.l.b16 %v3302
      %v3368 = vunpack.c.l.b16 %v3303
      %v3369 = vunpack.c.l.b16 %v3304
      %v3370 = vunpack.c.l.b16 %v3305
      %v3371 = vunpack.c.l.b16 %v3306
      %v3372 = vunpack.c.l.b16 %v3307
      %v3373 = vunpack.c.l.b16 %v3308
      %v3374 = vunpack.c.l.b16 %v3309
      %v3375 = vunpack.c.l.b16 %v3310
      %v3376 = vunpack.c.l.b16 %v3311
      %v3377 = vunpack.c.l.b16 %v3312
      %v3378 = vunpack.c.l.b16 %v3313
      %v3379 = vunpack.c.l.b16 %v3314
      %v3380 = vunpack.c.l.b16 %v3315
      %v3381 = vunpack.c.l.b16 %v3316
      %v3382 = vunpack.c.l.b16 %v3317
      %v3383 = vunpack.c.l.b16 %v3318
      %v3384 = vpack.c.b16 %v3353, %v3352
      %v3385 = vpack.c.b16 %v3355, %v3354
      %v3386 = vpack.c.b16 %v3357, %v3356
      %v3387 = vpack.c.b16 %v3359, %v3358
      %v3388 = vpack.c.b16 %v3361, %v3360
      %v3389 = vpack.c.b16 %v3363, %v3362
      %v3390 = vpack.c.b16 %v3365, %v3364
      %v3391 = vpack.c.b16 %v3367, %v3366
      %v3392 = vpack.c.b16 %v3369, %v3368
      %v3393 = vpack.c.b16 %v3371, %v3370
      %v3394 = vpack.c.b16 %v3373, %v3372
      %v3395 = vpack.c.b16 %v3375, %v3374
      %v3396 = vpack.c.b16 %v3377, %v3376
      %v3397 = vpack.c.b16 %v3379, %v3378
      %v3398 = vpack.c.b16 %v3381, %v3380
      %v3399 = vpack.c.b16 %v3383, %v3382
      %3416 = vmatpush.bf16.msra.mxu0 %v3391
      %3417 = vmatpush.bf16.msra.mxu0 %v3390
      %3418 = vmatpush.bf16.msra.mxu0 %v3389
      %3419 = vmatpush.bf16.msra.mxu0 %v3388
      %3420 = vmatpush.bf16.msra.mxu0 %v3387
      %3421 = vmatpush.bf16.msra.mxu0 %v3386
      %3422 = vmatpush.bf16.msra.mxu0 %v3385
      %3423 = vmatpush.bf16.msra.mxu0 %v3384
      %3424 = vmatmul.bf16.gmra.mxu0 %v3285
      %v3425 = vpop.f32.mrf.mxu0
      %v3426 = vadd.f32 %v3319, %v3425
      %v3427 = vpop.f32.mrf.mxu0
      %3428 = vdwg.mxu0
      %3429 = vmatpush.bf16.msra.mxu0 %v3399
      %3430 = vmatpush.bf16.msra.mxu0 %v3398
      %3431 = vmatpush.bf16.msra.mxu0 %v3397
      %3432 = vmatpush.bf16.msra.mxu0 %v3396
      %3433 = vmatpush.bf16.msra.mxu0 %v3395
      %3434 = vmatpush.bf16.msra.mxu0 %v3394
      %3435 = vmatpush.bf16.msra.mxu0 %v3393
      %3436 = vmatpush.bf16.msra.mxu0 %v3392
      %3437 = vmatmul.bf16.gmra.mxu0 %v3286
      %v3438 = vpop.f32.mrf.mxu0
      %v3439 = vadd.f32 %v3426, %v3438
      %v3440 = vpop.f32.mrf.mxu0
      %3441 = vdwg.mxu0
      %v3442 = vperm.slane %v3439, 0
      %3443 = vst [vmem:[%s330] sm:$0xff] %v3442
      %p3444 = scmp.lt.s32.totalorder %s20, 1
      %s3445 = scalar_select %p3444, %s20, 1
      %s3446 = smul.addr %s3445, 8
      %s3447 = scalar_lea.vmem %s9, %s3446
      // Predicated region
      $region57: #{cnn_forward.1} parent=55 // pred_check
        %p3448 = pneg %p232
      $region58: #{cnn_forward.1} parent=55 // pred_check_branch
        %3450 = sbr.rel (%p3448) target = $region60
      $region59: #{cnn_forward.1} parent=55 // pred_region
        _
      $region60: #{cnn_forward.1} parent=55 // pred_fallthru
        _
    $region56: #{cnn_forward.1} parent=5 // pred_fallthru
      _
    %p3451 = scmp.le.s32.totalorder 2, %s15
    // Predicated region
    $region61: #{cnn_forward.1} parent=5 // pred_check
      %p3452 = pneg %p3451
    $region62: #{cnn_forward.1} parent=5 // pred_check_branch
      %3454 = sbr.rel (%p3452) target = $region64
    $region63: #{cnn_forward.1} parent=5 // pred_region
      %s3455 = ssub.s32 %s15, 2
      // Predicated region
      $region65: #{cnn_forward.1} parent=63 // pred_check
        %p3456 = pneg %p238
      $region66: #{cnn_forward.1} parent=63 // pred_check_branch
        %3458 = sbr.rel (%p3456) target = $region68
      $region67: #{cnn_forward.1} parent=63 // pred_region
        %p3459 = scmp.lt.s32.totalorder %s21, 1
        %s3460 = scalar_select %p3459, %s21, 1
        %s3461 = smul.addr %s3460, 8
        %s3462 = scalar_lea.vmem %s9, %s3461
      $region68: #{cnn_forward.1} parent=63 // pred_fallthru
        _
    $region64: #{cnn_forward.1} parent=5 // pred_fallthru
      _
  $region6: #{cnn_forward.1} parent=0 // loop_footer
    %s19 = sadd.s32 1, %s15
  $region7: #{cnn_forward.1} parent=0 // loop_footer_branch
    %14 = sbr.rel target = $region3
  $region8: #{cnn_forward.1} parent=0 // loop_exit
    _

</llo_original>
